<compile_context>
chip_gen: v7x
topology: tpu7x:2x2x1
jax: 0.10.0
libtpu: 0.0.40
codegen_flags: <defaults>
</compile_context>

<pallas_src>
import functools

import jax
import jax.numpy as jnp
from jax import lax
from jax.experimental import pallas as pl
from jax.experimental.pallas import tpu as pltpu

_LANE = 128
_SUBLANE = 8
_TM_MAX = 1024   # flat-matmul M tile (keeps >=2 M tiles for v7x's 2 TCs)
_TK_MAX = 2048   # flat-matmul K tile; most 1x1 layers fit a single K step


def _round_up(x, m):
    return (x + m - 1) // m * m


def _vmem_limit_bytes():
    """Per-generation scoped-VMEM limit (~half of physical VMEM)."""
    try:
        cap = int(pltpu.get_tpu_info().vmem_capacity_bytes)
        return max(32 * 1024 * 1024, min(cap // 2, 96 * 1024 * 1024))
    except Exception:
        return 32 * 1024 * 1024      # conservative: fits every generation


# ---------------------------------------------------------------------------
# Pass 1a: flat matmul (1x1 convs / im2col fallback) + BN statistics.
# ---------------------------------------------------------------------------
def _matmul_stats_kernel(lhs_ref, w_ref, conv_ref, sum_ref, sumsq_ref, acc_ref):
    """Grid = (num_m, num_k); K innermost ("arbitrary") reduction axis.

    lhs_ref:  (TM, TK)        bf16 activation rows
    w_ref:    (TK, OC_pad)    bf16 weights (resident when num_k == 1)
    conv_ref: (TM, OC_pad)    bf16 conv intermediate (written on last K step)
    sum_ref / sumsq_ref: (8, OC_pad) f32 per-M-tile channel sums
    acc_ref:  (TM, OC_pad)    f32 VMEM scratch accumulator
    """
    k = pl.program_id(1)

    @pl.when(k == 0)
    def _init():
        acc_ref[...] = jnp.zeros_like(acc_ref)

    acc_ref[...] += jnp.dot(lhs_ref[...], w_ref[...],
                            preferred_element_type=jnp.float32)

    @pl.when(k == pl.num_programs(1) - 1)
    def _finalize():
        acc = acc_ref[...]
        conv_ref[...] = acc.astype(conv_ref.dtype)
        sum_ref[...] = jnp.broadcast_to(
            jnp.sum(acc, axis=0, keepdims=True), sum_ref.shape)
        sumsq_ref[...] = jnp.broadcast_to(
            jnp.sum(acc * acc, axis=0, keepdims=True), sumsq_ref.shape)


# ---------------------------------------------------------------------------
# Pass 1b: KxK stride-1 conv via in-kernel tap extraction + BN statistics.
# ---------------------------------------------------------------------------
def _conv_taps_stats_kernel(x_ref, w_ref, mask_ref, conv_ref, sum_ref,
                            sumsq_ref, *, kh, kw, wp, out_rows):
    """Grid = (N,).  One padded image resident in VMEM per step.

    x_ref:    (1, R_in, C)           bf16 flattened padded image
    w_ref:    (KH*KW, C, OC_pad)     bf16 weights, fully resident (constant map)
    mask_ref: (OUT_ROWS, 1)          f32 validity of the wrap-around columns
    conv_ref: (1, OUT_ROWS, OC_pad)  bf16 conv output at padded width
    sum_ref / sumsq_ref: (8, OC_pad) f32 per-image channel sums (valid cols only)
    """
    x = x_ref[0]                                  # (R_in, C)
    acc = None
    for i in range(kh):
        for j in range(kw):
            start = i * wp + j
            lhs = x[start:start + out_rows]       # shifted view of the image
            part = jnp.dot(lhs, w_ref[i * kw + j],
                           preferred_element_type=jnp.float32)
            acc = part if acc is None else acc + part
    conv_ref[0] = acc.astype(conv_ref.dtype)
    masked = acc * mask_ref[...]                  # drop wrap-around junk cols
    sum_ref[...] = jnp.broadcast_to(
        jnp.sum(masked, axis=0, keepdims=True), sum_ref.shape)
    sumsq_ref[...] = jnp.broadcast_to(
        jnp.sum(masked * masked, axis=0, keepdims=True), sumsq_ref.shape)


# ---------------------------------------------------------------------------
# Pass 2: BN affine + ReLU, bf16 in / bf16 out, in place (aliased buffer).
# ---------------------------------------------------------------------------
def _bn_relu_kernel(conv_ref, scale_ref, bias_ref, out_ref):
    y = conv_ref[...].astype(jnp.float32) * scale_ref[...] + bias_ref[...]
    out_ref[...] = jnp.maximum(y, 0.0).astype(out_ref.dtype)


# ---------------------------------------------------------------------------
# Wrapper helpers.
# ---------------------------------------------------------------------------
def _flat_matmul_stats(lhs, w_mat, oc_pad, compute_dtype, vmem_limit):
    """lhs: (M, K) activation rows; w_mat: (K, OC).  Returns bf16 conv
    (m_pad, oc_pad), per-tile channel sums / sum-of-squares and the M tile."""
    m, k = lhs.shape
    oc = w_mat.shape[1]
    itemsize = jnp.dtype(compute_dtype).itemsize

    tm = min(_TM_MAX, _round_up(m, 16))
    tk = min(_TK_MAX, _round_up(k, _LANE))

    def _footprint(tm_, tk_):
        return (2 * tm_ * tk_ * itemsize          # lhs (double-buffered)
                + 2 * tk_ * oc_pad * itemsize     # weights
                + 2 * tm_ * oc_pad * itemsize     # bf16 conv out
                + tm_ * oc_pad * 4                # f32 accumulator scratch
                + 4 * _SUBLANE * oc_pad * 4)      # stats

    budget = int(0.7 * vmem_limit)
    while _footprint(tm, tk) > budget and tk > 512:
        tk = _round_up(tk // 2, _LANE)
    while _footprint(tm, tk) > budget and tm > 256:
        tm = _round_up(tm // 2, 16)

    m_pad = _round_up(m, tm)
    k_pad = _round_up(k, tk)
    num_m, num_k = m_pad // tm, k_pad // tk

    # Pads are exact zeros -> BN statistics unaffected; no-op when divisible.
    lhs_p = jnp.pad(lhs.astype(compute_dtype), ((0, m_pad - m), (0, k_pad - k)))
    w_p = jnp.pad(w_mat.astype(compute_dtype), ((0, k_pad - k), (0, oc_pad - oc)))

    conv, sums, sumsqs = pl.pallas_call(
        _matmul_stats_kernel,
        out_shape=(
            jax.ShapeDtypeStruct((m_pad, oc_pad), compute_dtype),
            jax.ShapeDtypeStruct((num_m * _SUBLANE, oc_pad), jnp.float32),
            jax.ShapeDtypeStruct((num_m * _SUBLANE, oc_pad), jnp.float32),
        ),
        grid=(num_m, num_k),
        in_specs=[
            pl.BlockSpec((tm, tk), lambda i, ki: (i, ki)),
            pl.BlockSpec((tk, oc_pad), lambda i, ki: (ki, 0)),  # resident if num_k==1
        ],
        out_specs=(
            pl.BlockSpec((tm, oc_pad), lambda i, ki: (i, 0)),
            pl.BlockSpec((_SUBLANE, oc_pad), lambda i, ki: (i, 0)),
            pl.BlockSpec((_SUBLANE, oc_pad), lambda i, ki: (i, 0)),
        ),
        scratch_shapes=[pltpu.VMEM((tm, oc_pad), jnp.float32)],
        compiler_params=pltpu.CompilerParams(
            dimension_semantics=("parallel", "arbitrary"),
            vmem_limit_bytes=vmem_limit),
        cost_estimate=pl.CostEstimate(
            flops=2 * m_pad * k_pad * oc_pad, transcendentals=0,
            bytes_accessed=(m_pad * k_pad + num_m * k_pad * oc_pad
                            + 2 * m_pad * oc_pad) * itemsize),
    )(lhs_p, w_p)
    return conv, sums, sumsqs, tm


def _taps_conv_stats(x_nhwc, conv_weight, oc_pad, ph, pw, compute_dtype,
                     vmem_limit):
    """KxK stride-1 conv without im2col: in-kernel shifted matmuls."""
    n, h, w, c = x_nhwc.shape
    oc, _, kh, kw = conv_weight.shape
    hp, wp = h + 2 * ph, w + 2 * pw
    oh, ow = hp - kh + 1, wp - kw + 1
    out_rows = oh * wp
    # Junk-column taps of the last output row read one row past the image;
    # one extra zero row (when kw > 1) keeps every slice in bounds.
    extra = 1 if kw > 1 else 0
    rin = (hp + extra) * wp

    x_flat = jnp.pad(x_nhwc.astype(compute_dtype),
                     ((0, 0), (ph, ph + extra), (pw, pw), (0, 0))
                     ).reshape(n, rin, c)
    # TODO(synk): when the same block is run repeatedly, hoist this weight
    # re-layout (transpose + pad + cast) out of the per-call path.
    w_taps = jnp.pad(conv_weight.transpose(2, 3, 1, 0).reshape(kh * kw, c, oc),
                     ((0, 0), (0, 0), (0, oc_pad - oc))).astype(compute_dtype)
    col_valid = (jnp.arange(wp) < ow).astype(jnp.float32)          # (WP,)
    mask = jnp.tile(col_valid, oh).reshape(out_rows, 1)            # (OH*WP, 1)

    kernel = functools.partial(_conv_taps_stats_kernel, kh=kh, kw=kw, wp=wp,
                               out_rows=out_rows)
    conv, sums, sumsqs = pl.pallas_call(
        kernel,
        out_shape=(
            jax.ShapeDtypeStruct((n, out_rows, oc_pad), compute_dtype),
            jax.ShapeDtypeStruct((n * _SUBLANE, oc_pad), jnp.float32),
            jax.ShapeDtypeStruct((n * _SUBLANE, oc_pad), jnp.float32),
        ),
        grid=(n,),
        in_specs=[
            pl.BlockSpec((1, rin, c), lambda b: (b, 0, 0)),
            pl.BlockSpec((kh * kw, c, oc_pad), lambda b: (0, 0, 0)),  # resident
            pl.BlockSpec((out_rows, 1), lambda b: (0, 0)),            # resident
        ],
        out_specs=(
            pl.BlockSpec((1, out_rows, oc_pad), lambda b: (b, 0, 0)),
            pl.BlockSpec((_SUBLANE, oc_pad), lambda b: (b, 0)),
            pl.BlockSpec((_SUBLANE, oc_pad), lambda b: (b, 0)),
        ),
        compiler_params=pltpu.CompilerParams(
            dimension_semantics=("parallel",),
            vmem_limit_bytes=vmem_limit),
        cost_estimate=pl.CostEstimate(
            flops=2 * n * out_rows * kh * kw * c * oc_pad, transcendentals=0,
            bytes_accessed=(n * rin * c + kh * kw * c * oc_pad
                            + 2 * n * out_rows * oc_pad) * 2),
    )(x_flat, w_taps, mask)
    return conv, sums, sumsqs, wp


def _extract_patches_nhwc(x_nhwc, kh, kw, sh, sw, ph, pw, compute_dtype):
    """Wrapper-side im2col (strided-conv fallback only)."""
    # TODO(synk): move strided patch extraction in-kernel as well.
    n, h, w, c = x_nhwc.shape
    oh = (h + 2 * ph - kh) // sh + 1
    ow = (w + 2 * pw - kw) // sw + 1
    xp = jnp.pad(x_nhwc.astype(compute_dtype),
                 ((0, 0), (ph, ph), (pw, pw), (0, 0)))
    cols = []
    for i in range(kh):
        for j in range(kw):
            cols.append(xp[:, i:i + sh * oh:sh, j:j + sw * ow:sw, :])
    patches = jnp.concatenate(cols, axis=-1)           # (N, OH, OW, KH*KW*C)
    return patches.reshape(n * oh * ow, kh * kw * c), oh, ow


# ---------------------------------------------------------------------------
# Fused BasicBlock forward (NHWC fast path, bf16 activations).
# ---------------------------------------------------------------------------
def basic_block_forward_nhwc(x_nhwc, conv_weight, bn_gamma, bn_beta, *,
                             stride=(1, 1), padding=(0, 0), eps=1e-5,
                             compute_dtype=jnp.bfloat16):
    """conv_weight: (OC, IC, KH, KW) PyTorch layout.  NHWC in, NHWC out (bf16)."""
    oc, ic, kh, kw = conv_weight.shape
    sh, sw = stride
    ph, pw = padding
    n, h, w, c = x_nhwc.shape
    oh = (h + 2 * ph - kh) // sh + 1
    ow = (w + 2 * pw - kw) // sw + 1
    oc_pad = _round_up(oc, _LANE)
    m_valid = n * oh * ow
    vmem_limit = _vmem_limit_bytes()
    itemsize = jnp.dtype(compute_dtype).itemsize

    mode = None
    if (kh, kw, sh, sw, ph, pw) == (1, 1, 1, 1, 0, 0):
        # 1x1 conv: direct (M, C) @ (C, OC) matmul, weight resident (1 K step).
        lhs = x_nhwc.reshape(n * h * w, c)
        w_mat = conv_weight.reshape(oc, ic).T
        conv, sums, sumsqs, tm = _flat_matmul_stats(
            lhs, w_mat, oc_pad, compute_dtype, vmem_limit)
        mode = "flat"
    elif (sh, sw) == (1, 1):
        # KxK stride-1: in-kernel tap extraction if one image fits VMEM.
        hp_, wp_ = h + 2 * ph, w + 2 * pw
        rin_ = (hp_ + (1 if kw > 1 else 0)) * wp_
        rows_ = oh * wp_
        taps_bytes = (2 * rin_ * c * itemsize
                      + 2 * kh * kw * c * oc_pad * itemsize
                      + 2 * rows_ * oc_pad * itemsize
                      + 2 * rows_ * oc_pad * 4
                      + 2 * rows_ * c * itemsize)
        if taps_bytes <= int(0.7 * vmem_limit):
            conv, sums, sumsqs, wp_full = _taps_conv_stats(
                x_nhwc, conv_weight, oc_pad, ph, pw, compute_dtype, vmem_limit)
            mode = "taps"
    if mode is None:
        # Strided convs (stem / reduction blocks) and oversized images.
        patches, _, _ = _extract_patches_nhwc(
            x_nhwc, kh, kw, sh, sw, ph, pw, compute_dtype)
        w_mat = conv_weight.transpose(2, 3, 1, 0).reshape(kh * kw * ic, oc)
        conv, sums, sumsqs, tm = _flat_matmul_stats(
            patches, w_mat, oc_pad, compute_dtype, vmem_limit)
        mode = "flat"

    # --- BN(train) statistics: tiny O(OC) finalisation in plain JAX ----------
    # TODO(synk): single-pass E[x^2]-E[x]^2 can cancel for large-mean channels;
    # switch to per-tile centered sums if tighter accuracy is ever needed.
    inv_cnt = 1.0 / float(m_valid)
    tot = jnp.sum(sums[0::_SUBLANE], axis=0)          # (OC_pad,)
    totsq = jnp.sum(sumsqs[0::_SUBLANE], axis=0)
    mean = tot * inv_cnt
    var = jnp.maximum(totsq * inv_cnt - mean * mean, 0.0)   # biased variance
    inv_std = lax.rsqrt(var + eps)
    gamma_p = jnp.pad(bn_gamma.astype(jnp.float32), (0, oc_pad - oc))
    beta_p = jnp.pad(bn_beta.astype(jnp.float32), (0, oc_pad - oc))
    scale = gamma_p * inv_std
    bias = beta_p - mean * scale

    # --- pass 2: y = conv*scale + bias, ReLU, bf16 in place (aliased) --------
    # TODO(synk): when chaining BasicBlocks, fold this epilogue into the next
    # layer's pass 1 (apply scale/bias+ReLU as the next conv loads its input)
    # and keep the standalone pass 2 only for the final block of a chain.
    if mode == "flat":
        m_pad = conv.shape[0]
        num_m = m_pad // tm
        out_flat = pl.pallas_call(
            _bn_relu_kernel,
            out_shape=jax.ShapeDtypeStruct((m_pad, oc_pad), compute_dtype),
            grid=(num_m,),
            in_specs=[
                pl.BlockSpec((tm, oc_pad), lambda i: (i, 0)),
                pl.BlockSpec((1, oc_pad), lambda i: (0, 0)),   # resident scale
                pl.BlockSpec((1, oc_pad), lambda i: (0, 0)),   # resident bias
            ],
            out_specs=pl.BlockSpec((tm, oc_pad), lambda i: (i, 0)),
            input_output_aliases={0: 0},
            compiler_params=pltpu.CompilerParams(
                dimension_semantics=("parallel",),
                vmem_limit_bytes=vmem_limit),
        )(conv, scale.reshape(1, oc_pad), bias.reshape(1, oc_pad))
        out = out_flat[:m_valid, :oc].reshape(n, oh, ow, oc)
    else:
        out_rows = conv.shape[1]
        out3 = pl.pallas_call(
            _bn_relu_kernel,
            out_shape=jax.ShapeDtypeStruct((n, out_rows, oc_pad), compute_dtype),
            grid=(n,),
            in_specs=[
                pl.BlockSpec((1, out_rows, oc_pad), lambda b: (b, 0, 0)),
                pl.BlockSpec((1, 1, oc_pad), lambda b: (0, 0, 0)),
                pl.BlockSpec((1, 1, oc_pad), lambda b: (0, 0, 0)),
            ],
            out_specs=pl.BlockSpec((1, out_rows, oc_pad), lambda b: (b, 0, 0)),
            input_output_aliases={0: 0},
            compiler_params=pltpu.CompilerParams(
                dimension_semantics=("parallel",),
                vmem_limit_bytes=vmem_limit),
        )(conv, scale.reshape(1, 1, oc_pad), bias.reshape(1, 1, oc_pad))
        out = out3.reshape(n, oh, wp_full, oc_pad)[:, :, :ow, :oc]
    return out


# ---------------------------------------------------------------------------
# PyTorch-facing wrapper (NCHW / f32 boundary).  Chains of BasicBlocks should
# call basic_block_forward_nhwc directly and stay bf16 NHWC end-to-end.
# ---------------------------------------------------------------------------
@functools.partial(jax.jit,
                   static_argnames=("stride", "padding", "eps", "compute_dtype"))
def basic_block_forward(x_nchw, conv_weight, bn_gamma, bn_beta, *,
                        stride=1, padding=0, eps=1e-5,
                        compute_dtype=jnp.bfloat16):
    sh, sw = (stride, stride) if isinstance(stride, int) else stride
    ph, pw = (padding, padding) if isinstance(padding, int) else padding
    x_nhwc = jnp.transpose(x_nchw, (0, 2, 3, 1))
    out_nhwc = basic_block_forward_nhwc(
        x_nhwc, conv_weight, bn_gamma, bn_beta,
        stride=(sh, sw), padding=(ph, pw), eps=eps,
        compute_dtype=compute_dtype)
    return jnp.transpose(out_nhwc.astype(jnp.float32), (0, 3, 1, 2))


# ---------------------------------------------------------------------------
# Pure-JAX reference (PyTorch semantics, f32).
# ---------------------------------------------------------------------------
def _reference(x, w, gamma, beta, stride_hw, padding_hw, eps):
    conv = lax.conv_general_dilated(
        x.astype(jnp.float32), w.astype(jnp.float32),
        window_strides=stride_hw,
        padding=[(padding_hw[0], padding_hw[0]),
                 (padding_hw[1], padding_hw[1])],
        dimension_numbers=("NCHW", "OIHW", "NCHW"))
    mean = conv.mean(axis=(0, 2, 3), keepdims=True)
    var = ((conv - mean) ** 2).mean(axis=(0, 2, 3), keepdims=True)
    y = (conv - mean) * lax.rsqrt(var + eps)
    y = y * gamma.reshape(1, -1, 1, 1) + beta.reshape(1, -1, 1, 1)
    return jnp.maximum(y, 0.0)


if __name__ == "__main__":
    key = jax.random.PRNGKey(0)
    kx, kw1, kw3, kw7, kws, kg, kb = jax.random.split(key, 7)

    in_ch, out_ch = 4, 8
    x = jax.random.normal(kx, (2, in_ch, 16, 16), jnp.float32)          # NCHW
    gamma = 1.0 + 0.1 * jax.random.normal(kg, (out_ch,), jnp.float32)
    beta = 0.1 * jax.random.normal(kb, (out_ch,), jnp.float32)

    def check(name, wgt, stride, padding):
        out = basic_block_forward(x, wgt, gamma, beta,
                                  stride=stride, padding=padding)
        jax.block_until_ready(out)
        s = (stride, stride) if isinstance(stride, int) else stride
        p = (padding, padding) if isinstance(padding, int) else padding
        ref = _reference(x, wgt, gamma, beta, s, p, 1e-5)
        assert out.shape == ref.shape, (name, out.shape, ref.shape)
        err = jnp.max(jnp.abs(out - ref))
        # bf16 activations/intermediates -> slightly looser than f32 tolerance.
        assert jnp.allclose(out, ref, atol=2.5e-2, rtol=2.5e-2), \
            (name, float(err))

    # 3x3 pad 1 (stride 1): in-kernel tap-extraction path (InceptionA 3x3s).
    w3 = 0.1 * jax.random.normal(kw3, (out_ch, in_ch, 3, 3), jnp.float32)
    check("3x3", w3, 1, 1)

    # 1x1: direct (M, C) matmul path (most InceptionV4 layers).
    w1 = 0.1 * jax.random.normal(kw1, (out_ch, in_ch, 1, 1), jnp.float32)
    check("1x1", w1, 1, 0)

    # 1x7 pad (0, 3): asymmetric tap path with masked wrap columns (InceptionB).
    w7 = 0.1 * jax.random.normal(kw7, (out_ch, in_ch, 1, 7), jnp.float32)
    check("1x7", w7, (1, 1), (0, 3))

    # 3x3 stride 2: strided fallback path (stem / reduction blocks).
    ws = 0.1 * jax.random.normal(kws, (out_ch, in_ch, 3, 3), jnp.float32)
    check("3x3s2", ws, 2, 0)

    print("KERNEL_OK")
</pallas_src>

<mosaic_0001>
module attributes {stable_mosaic.version = 11 : i64} {
  func.func @_conv_taps_stats_kernel(%arg0: i32, %arg1: memref<1x342x4xbf16, #tpu.memory_space<vmem>>, %arg2: memref<9x4x128xbf16, #tpu.memory_space<vmem>>, %arg3: memref<288x1xf32, #tpu.memory_space<vmem>>, %arg4: memref<1x288x128xbf16, #tpu.memory_space<vmem>>, %arg5: memref<8x128xf32, #tpu.memory_space<vmem>>, %arg6: memref<8x128xf32, #tpu.memory_space<vmem>>) attributes {dimension_semantics = [#tpu.dimension_semantics<parallel>], iteration_bounds = array<i64: 2>, scalar_prefetch = 0 : i64, scratch_operands = 0 : i64, tpu.core_type = #tpu.core_type<tc>, window_params = [{transform_indices = @transform_0, window_bounds = array<i64: 1, 342, 4>}, {pipeline_mode = #tpu.pipeline_mode<synchronous>, transform_indices = @transform_1, window_bounds = array<i64: 9, 4, 128>}, {pipeline_mode = #tpu.pipeline_mode<synchronous>, transform_indices = @transform_2, window_bounds = array<i64: 288, 1>}, {transform_indices = @transform_3, window_bounds = array<i64: 1, 288, 128>}, {transform_indices = @transform_4, window_bounds = array<i64: 8, 128>}, {transform_indices = @transform_5, window_bounds = array<i64: 8, 128>}]} {
    %c0 = arith.constant 0 : index
    %c0_0 = arith.constant 0 : index
    %c0_1 = arith.constant 0 : index
    %0 = vector.load %arg1[%c0, %c0_0, %c0_1] : memref<1x342x4xbf16, #tpu.memory_space<vmem>>, vector<1x342x4xbf16>
    %1 = vector.shape_cast %0 : vector<1x342x4xbf16> to vector<342x4xbf16>
    %2 = vector.extract_strided_slice %1 {offsets = [0, 0], sizes = [288, 4], strides = [1, 1]} : vector<342x4xbf16> to vector<288x4xbf16>
    %c0_2 = arith.constant 0 : index
    %c0_3 = arith.constant 0 : index
    %c0_4 = arith.constant 0 : index
    %3 = vector.load %arg2[%c0_2, %c0_3, %c0_4] : memref<9x4x128xbf16, #tpu.memory_space<vmem>>, vector<1x4x128xbf16>
    %4 = vector.shape_cast %3 : vector<1x4x128xbf16> to vector<4x128xbf16>
    %cst = arith.constant dense<0.000000e+00> : vector<288x128xf32>
    %5 = tpu.matmul %2, %4, %cst {dimension_numbers = #tpu.dot_dimension_numbers<[1], [0], [0], [1], [0, 0, 1, 1], [], []>} : vector<288x4xbf16>, vector<4x128xbf16>, vector<288x128xf32> -> vector<288x128xf32>
    %6 = vector.extract_strided_slice %1 {offsets = [1, 0], sizes = [288, 4], strides = [1, 1]} : vector<342x4xbf16> to vector<288x4xbf16>
    %c1 = arith.constant 1 : index
    %c0_5 = arith.constant 0 : index
    %c0_6 = arith.constant 0 : index
    %7 = vector.load %arg2[%c1, %c0_5, %c0_6] : memref<9x4x128xbf16, #tpu.memory_space<vmem>>, vector<1x4x128xbf16>
    %8 = vector.shape_cast %7 : vector<1x4x128xbf16> to vector<4x128xbf16>
    %cst_7 = arith.constant dense<0.000000e+00> : vector<288x128xf32>
    %9 = tpu.matmul %6, %8, %cst_7 {dimension_numbers = #tpu.dot_dimension_numbers<[1], [0], [0], [1], [0, 0, 1, 1], [], []>} : vector<288x4xbf16>, vector<4x128xbf16>, vector<288x128xf32> -> vector<288x128xf32>
    %10 = arith.addf %5, %9 : vector<288x128xf32>
    %11 = vector.extract_strided_slice %1 {offsets = [2, 0], sizes = [288, 4], strides = [1, 1]} : vector<342x4xbf16> to vector<288x4xbf16>
    %c2 = arith.constant 2 : index
    %c0_8 = arith.constant 0 : index
    %c0_9 = arith.constant 0 : index
    %12 = vector.load %arg2[%c2, %c0_8, %c0_9] : memref<9x4x128xbf16, #tpu.memory_space<vmem>>, vector<1x4x128xbf16>
    %13 = vector.shape_cast %12 : vector<1x4x128xbf16> to vector<4x128xbf16>
    %cst_10 = arith.constant dense<0.000000e+00> : vector<288x128xf32>
    %14 = tpu.matmul %11, %13, %cst_10 {dimension_numbers = #tpu.dot_dimension_numbers<[1], [0], [0], [1], [0, 0, 1, 1], [], []>} : vector<288x4xbf16>, vector<4x128xbf16>, vector<288x128xf32> -> vector<288x128xf32>
    %15 = arith.addf %10, %14 : vector<288x128xf32>
    %16 = vector.extract_strided_slice %1 {offsets = [18, 0], sizes = [288, 4], strides = [1, 1]} : vector<342x4xbf16> to vector<288x4xbf16>
    %c3 = arith.constant 3 : index
    %c0_11 = arith.constant 0 : index
    %c0_12 = arith.constant 0 : index
    %17 = vector.load %arg2[%c3, %c0_11, %c0_12] : memref<9x4x128xbf16, #tpu.memory_space<vmem>>, vector<1x4x128xbf16>
    %18 = vector.shape_cast %17 : vector<1x4x128xbf16> to vector<4x128xbf16>
    %cst_13 = arith.constant dense<0.000000e+00> : vector<288x128xf32>
    %19 = tpu.matmul %16, %18, %cst_13 {dimension_numbers = #tpu.dot_dimension_numbers<[1], [0], [0], [1], [0, 0, 1, 1], [], []>} : vector<288x4xbf16>, vector<4x128xbf16>, vector<288x128xf32> -> vector<288x128xf32>
    %20 = arith.addf %15, %19 : vector<288x128xf32>
    %21 = vector.extract_strided_slice %1 {offsets = [19, 0], sizes = [288, 4], strides = [1, 1]} : vector<342x4xbf16> to vector<288x4xbf16>
    %c4 = arith.constant 4 : index
    %c0_14 = arith.constant 0 : index
    %c0_15 = arith.constant 0 : index
    %22 = vector.load %arg2[%c4, %c0_14, %c0_15] : memref<9x4x128xbf16, #tpu.memory_space<vmem>>, vector<1x4x128xbf16>
    %23 = vector.shape_cast %22 : vector<1x4x128xbf16> to vector<4x128xbf16>
    %cst_16 = arith.constant dense<0.000000e+00> : vector<288x128xf32>
    %24 = tpu.matmul %21, %23, %cst_16 {dimension_numbers = #tpu.dot_dimension_numbers<[1], [0], [0], [1], [0, 0, 1, 1], [], []>} : vector<288x4xbf16>, vector<4x128xbf16>, vector<288x128xf32> -> vector<288x128xf32>
    %25 = arith.addf %20, %24 : vector<288x128xf32>
    %26 = vector.extract_strided_slice %1 {offsets = [20, 0], sizes = [288, 4], strides = [1, 1]} : vector<342x4xbf16> to vector<288x4xbf16>
    %c5 = arith.constant 5 : index
    %c0_17 = arith.constant 0 : index
    %c0_18 = arith.constant 0 : index
    %27 = vector.load %arg2[%c5, %c0_17, %c0_18] : memref<9x4x128xbf16, #tpu.memory_space<vmem>>, vector<1x4x128xbf16>
    %28 = vector.shape_cast %27 : vector<1x4x128xbf16> to vector<4x128xbf16>
    %cst_19 = arith.constant dense<0.000000e+00> : vector<288x128xf32>
    %29 = tpu.matmul %26, %28, %cst_19 {dimension_numbers = #tpu.dot_dimension_numbers<[1], [0], [0], [1], [0, 0, 1, 1], [], []>} : vector<288x4xbf16>, vector<4x128xbf16>, vector<288x128xf32> -> vector<288x128xf32>
    %30 = arith.addf %25, %29 : vector<288x128xf32>
    %31 = vector.extract_strided_slice %1 {offsets = [36, 0], sizes = [288, 4], strides = [1, 1]} : vector<342x4xbf16> to vector<288x4xbf16>
    %c6 = arith.constant 6 : index
    %c0_20 = arith.constant 0 : index
    %c0_21 = arith.constant 0 : index
    %32 = vector.load %arg2[%c6, %c0_20, %c0_21] : memref<9x4x128xbf16, #tpu.memory_space<vmem>>, vector<1x4x128xbf16>
    %33 = vector.shape_cast %32 : vector<1x4x128xbf16> to vector<4x128xbf16>
    %cst_22 = arith.constant dense<0.000000e+00> : vector<288x128xf32>
    %34 = tpu.matmul %31, %33, %cst_22 {dimension_numbers = #tpu.dot_dimension_numbers<[1], [0], [0], [1], [0, 0, 1, 1], [], []>} : vector<288x4xbf16>, vector<4x128xbf16>, vector<288x128xf32> -> vector<288x128xf32>
    %35 = arith.addf %30, %34 : vector<288x128xf32>
    %36 = vector.extract_strided_slice %1 {offsets = [37, 0], sizes = [288, 4], strides = [1, 1]} : vector<342x4xbf16> to vector<288x4xbf16>
    %c7 = arith.constant 7 : index
    %c0_23 = arith.constant 0 : index
    %c0_24 = arith.constant 0 : index
    %37 = vector.load %arg2[%c7, %c0_23, %c0_24] : memref<9x4x128xbf16, #tpu.memory_space<vmem>>, vector<1x4x128xbf16>
    %38 = vector.shape_cast %37 : vector<1x4x128xbf16> to vector<4x128xbf16>
    %cst_25 = arith.constant dense<0.000000e+00> : vector<288x128xf32>
    %39 = tpu.matmul %36, %38, %cst_25 {dimension_numbers = #tpu.dot_dimension_numbers<[1], [0], [0], [1], [0, 0, 1, 1], [], []>} : vector<288x4xbf16>, vector<4x128xbf16>, vector<288x128xf32> -> vector<288x128xf32>
    %40 = arith.addf %35, %39 : vector<288x128xf32>
    %41 = vector.extract_strided_slice %1 {offsets = [38, 0], sizes = [288, 4], strides = [1, 1]} : vector<342x4xbf16> to vector<288x4xbf16>
    %c8 = arith.constant 8 : index
    %c0_26 = arith.constant 0 : index
    %c0_27 = arith.constant 0 : index
    %42 = vector.load %arg2[%c8, %c0_26, %c0_27] : memref<9x4x128xbf16, #tpu.memory_space<vmem>>, vector<1x4x128xbf16>
    %43 = vector.shape_cast %42 : vector<1x4x128xbf16> to vector<4x128xbf16>
    %cst_28 = arith.constant dense<0.000000e+00> : vector<288x128xf32>
    %44 = tpu.matmul %41, %43, %cst_28 {dimension_numbers = #tpu.dot_dimension_numbers<[1], [0], [0], [1], [0, 0, 1, 1], [], []>} : vector<288x4xbf16>, vector<4x128xbf16>, vector<288x128xf32> -> vector<288x128xf32>
    %45 = arith.addf %40, %44 : vector<288x128xf32>
    %46 = arith.truncf %45 : vector<288x128xf32> to vector<288x128xbf16>
    %c0_29 = arith.constant 0 : index
    %c0_30 = arith.constant 0 : index
    %c0_31 = arith.constant 0 : index
    %47 = vector.load %arg4[%c0_29, %c0_30, %c0_31] : memref<1x288x128xbf16, #tpu.memory_space<vmem>>, vector<1x288x128xbf16>
    %48 = vector.shape_cast %47 : vector<1x288x128xbf16> to vector<288x128xbf16>
    %49 = vector.shape_cast %46 : vector<288x128xbf16> to vector<1x288x128xbf16>
    tpu.vector_store %arg4[%c0_29, %c0_30, %c0_31], %49 {strides = array<i32>} : memref<1x288x128xbf16, #tpu.memory_space<vmem>>, vector<1x288x128xbf16>,
    %c0_32 = arith.constant 0 : index
    %c0_33 = arith.constant 0 : index
    %50 = vector.load %arg3[%c0_32, %c0_33] : memref<288x1xf32, #tpu.memory_space<vmem>>, vector<288x1xf32>
    %51 = vector.broadcast %50 : vector<288x1xf32> to vector<288x128xf32>
    %52 = arith.mulf %45, %51 : vector<288x128xf32>
    %cst_34 = arith.constant dense<0.000000e+00> : vector<128xf32>
    %53 = vector.multi_reduction <add>, %52, %cst_34 [0] : vector<288x128xf32> to vector<128xf32>
    %54 = vector.shape_cast %53 : vector<128xf32> to vector<1x128xf32>
    %55 = vector.shape_cast %54 : vector<1x128xf32> to vector<1x128xf32>
    %56 = vector.broadcast %55 : vector<1x128xf32> to vector<8x128xf32>
    %c0_35 = arith.constant 0 : index
    %c0_36 = arith.constant 0 : index
    %57 = vector.load %arg5[%c0_35, %c0_36] : memref<8x128xf32, #tpu.memory_space<vmem>>, vector<8x128xf32>
    tpu.vector_store %arg5[%c0_35, %c0_36], %56 {strides = array<i32>} : memref<8x128xf32, #tpu.memory_space<vmem>>, vector<8x128xf32>,
    %58 = arith.mulf %52, %52 : vector<288x128xf32>
    %cst_37 = arith.constant dense<0.000000e+00> : vector<128xf32>
    %59 = vector.multi_reduction <add>, %58, %cst_37 [0] : vector<288x128xf32> to vector<128xf32>
    %60 = vector.shape_cast %59 : vector<128xf32> to vector<1x128xf32>
    %61 = vector.shape_cast %60 : vector<1x128xf32> to vector<1x128xf32>
    %62 = vector.broadcast %61 : vector<1x128xf32> to vector<8x128xf32>
    %c0_38 = arith.constant 0 : index
    %c0_39 = arith.constant 0 : index
    %63 = vector.load %arg6[%c0_38, %c0_39] : memref<8x128xf32, #tpu.memory_space<vmem>>, vector<8x128xf32>
    tpu.vector_store %arg6[%c0_38, %c0_39], %62 {strides = array<i32>} : memref<8x128xf32, #tpu.memory_space<vmem>>, vector<8x128xf32>,
    return
  }
  func.func @transform_0(%arg0: i32) -> (i32, i32, i32) {
    %c0_i32 = arith.constant 0 : i32
    %c0_i32_0 = arith.constant 0 : i32
    %c0_i32_1 = arith.constant 0 : i32
    return %arg0, %c0_i32, %c0_i32_0 : i32, i32, i32
  }
  func.func @transform_1(%arg0: i32) -> (i32, i32, i32) {
    %c0_i32 = arith.constant 0 : i32
    %c0_i32_0 = arith.constant 0 : i32
    %c0_i32_1 = arith.constant 0 : i32
    %c0_i32_2 = arith.constant 0 : i32
    return %c0_i32, %c0_i32_0, %c0_i32_1 : i32, i32, i32
  }
  func.func @transform_2(%arg0: i32) -> (i32, i32) {
    %c0_i32 = arith.constant 0 : i32
    %c0_i32_0 = arith.constant 0 : i32
    %c0_i32_1 = arith.constant 0 : i32
    return %c0_i32, %c0_i32_0 : i32, i32
  }
  func.func @transform_3(%arg0: i32) -> (i32, i32, i32) {
    %c0_i32 = arith.constant 0 : i32
    %c0_i32_0 = arith.constant 0 : i32
    %c0_i32_1 = arith.constant 0 : i32
    return %arg0, %c0_i32, %c0_i32_0 : i32, i32, i32
  }
  func.func @transform_4(%arg0: i32) -> (i32, i32) {
    %c0_i32 = arith.constant 0 : i32
    %c0_i32_0 = arith.constant 0 : i32
    return %arg0, %c0_i32 : i32, i32
  }
  func.func @transform_5(%arg0: i32) -> (i32, i32) {
    %c0_i32 = arith.constant 0 : i32
    %c0_i32_0 = arith.constant 0 : i32
    return %arg0, %c0_i32 : i32, i32
  }
}

module attributes {stable_mosaic.version = 11 : i64} {
  func.func @_bn_relu_kernel(%arg0: i32, %arg1: memref<1x288x128xbf16, #tpu.memory_space<vmem>>, %arg2: memref<1x1x128xf32, #tpu.memory_space<vmem>>, %arg3: memref<1x1x128xf32, #tpu.memory_space<vmem>>, %arg4: memref<1x288x128xbf16, #tpu.memory_space<vmem>>) attributes {dimension_semantics = [#tpu.dimension_semantics<parallel>], iteration_bounds = array<i64: 2>, scalar_prefetch = 0 : i64, scratch_operands = 0 : i64, tpu.core_type = #tpu.core_type<tc>, window_params = [{transform_indices = @transform_0, window_bounds = array<i64: 1, 288, 128>}, {pipeline_mode = #tpu.pipeline_mode<synchronous>, transform_indices = @transform_1, window_bounds = array<i64: 1, 1, 128>}, {pipeline_mode = #tpu.pipeline_mode<synchronous>, transform_indices = @transform_2, window_bounds = array<i64: 1, 1, 128>}, {transform_indices = @transform_3, window_bounds = array<i64: 1, 288, 128>}]} {
    %c0 = arith.constant 0 : index
    %c0_0 = arith.constant 0 : index
    %c0_1 = arith.constant 0 : index
    %0 = vector.load %arg1[%c0, %c0_0, %c0_1] : memref<1x288x128xbf16, #tpu.memory_space<vmem>>, vector<1x288x128xbf16>
    %1 = arith.extf %0 : vector<1x288x128xbf16> to vector<1x288x128xf32>
    %c0_2 = arith.constant 0 : index
    %c0_3 = arith.constant 0 : index
    %c0_4 = arith.constant 0 : index
    %2 = vector.load %arg2[%c0_2, %c0_3, %c0_4] : memref<1x1x128xf32, #tpu.memory_space<vmem>>, vector<1x1x128xf32>
    %3 = vector.broadcast %2 : vector<1x1x128xf32> to vector<1x288x128xf32>
    %4 = arith.mulf %1, %3 : vector<1x288x128xf32>
    %c0_5 = arith.constant 0 : index
    %c0_6 = arith.constant 0 : index
    %c0_7 = arith.constant 0 : index
    %5 = vector.load %arg3[%c0_5, %c0_6, %c0_7] : memref<1x1x128xf32, #tpu.memory_space<vmem>>, vector<1x1x128xf32>
    %6 = vector.broadcast %5 : vector<1x1x128xf32> to vector<1x288x128xf32>
    %7 = arith.addf %4, %6 : vector<1x288x128xf32>
    %cst = arith.constant 0.000000e+00 : f32
    %8 = vector.broadcast %cst : f32 to vector<1x288x128xf32>
    %9 = arith.maximumf %7, %8 : vector<1x288x128xf32>
    %10 = arith.truncf %9 : vector<1x288x128xf32> to vector<1x288x128xbf16>
    %c0_8 = arith.constant 0 : index
    %c0_9 = arith.constant 0 : index
    %c0_10 = arith.constant 0 : index
    %11 = vector.load %arg4[%c0_8, %c0_9, %c0_10] : memref<1x288x128xbf16, #tpu.memory_space<vmem>>, vector<1x288x128xbf16>
    tpu.vector_store %arg4[%c0_8, %c0_9, %c0_10], %10 {strides = array<i32>} : memref<1x288x128xbf16, #tpu.memory_space<vmem>>, vector<1x288x128xbf16>,
    return
  }
  func.func @transform_0(%arg0: i32) -> (i32, i32, i32) {
    %c0_i32 = arith.constant 0 : i32
    %c0_i32_0 = arith.constant 0 : i32
    %c0_i32_1 = arith.constant 0 : i32
    return %arg0, %c0_i32, %c0_i32_0 : i32, i32, i32
  }
  func.func @transform_1(%arg0: i32) -> (i32, i32, i32) {
    %c0_i32 = arith.constant 0 : i32
    %c0_i32_0 = arith.constant 0 : i32
    %c0_i32_1 = arith.constant 0 : i32
    %c0_i32_2 = arith.constant 0 : i32
    return %c0_i32, %c0_i32_0, %c0_i32_1 : i32, i32, i32
  }
  func.func @transform_2(%arg0: i32) -> (i32, i32, i32) {
    %c0_i32 = arith.constant 0 : i32
    %c0_i32_0 = arith.constant 0 : i32
    %c0_i32_1 = arith.constant 0 : i32
    %c0_i32_2 = arith.constant 0 : i32
    return %c0_i32, %c0_i32_0, %c0_i32_1 : i32, i32, i32
  }
  func.func @transform_3(%arg0: i32) -> (i32, i32, i32) {
    %c0_i32 = arith.constant 0 : i32
    %c0_i32_0 = arith.constant 0 : i32
    %c0_i32_1 = arith.constant 0 : i32
    return %arg0, %c0_i32, %c0_i32_0 : i32, i32, i32
  }
}

</mosaic_0001>

<llo_original>
// kernel: tile.8
$region0: #{tile.8}
  #allocation0 [shape = 's32[1]{0}', space=sflag, size = 0x4, scoped, tag = 'scoped memory for tile.8']
  %s0 = inlined_call_operand.vmem [shape: f32[18], index: 0, kind: input, shape index: {}]
  %s1 = inlined_call_operand.vmem [shape: f32[16,18], index: 1, kind: output, shape index: {}]
  // Predicated region
  $region2: #{tile.8} parent=0 // pred_check
    _
  $region3: #{tile.8} parent=0 // pred_check_branch
    %3 = sbr.rel (0) target = $region5
  $region4: #{tile.8} parent=0 // pred_region
    _
  $region5: #{tile.8} parent=0 // pred_fallthru
    _
  %v4 = vld [vmem:[%s0] ss:$0 sm:$0xff]
  %5 = vst [vmem:[%s1] sm:$0xff] %v4
  %s6 = scalar_lea.vmem %s1, 8
  %7 = vst [vmem:[%s6] sm:$0xff] %v4

// kernel: tile.0
$region0: #{tile.0}
  %s0 = inlined_call_operand.vmem [shape: f32[16,18], index: 0, kind: input, shape index: {}]
  %s1 = inlined_call_operand.vmem [shape: f32[288,1], index: 1, kind: output, shape index: {}]
  %v2 = vld [vmem:[%s0] sm:$0xff]
  %vm3 = vcmask 7168
  %4 = vst.msk [vmem:[%s1] ss:$18 sm:$0xff] %vm3, %v2
  %s5 = scalar_lea.vmem %s0, 8
  %v6 = vld [vmem:[%s5] sm:$0xff]
  %vm7 = vcmask 7168
  %s8 = scalar_lea.vmem %s1, 144
  %9 = vst.msk [vmem:[%s8] ss:$18 sm:$0xff] %vm7, %v6
  %v10 = vld.sshfl [vmem:[%s0] sm:$0xff pattern:$0xf6d4b290]
  %11 = vrot.lane.b32.xlu0 %v10, 127
  %v12 = vpop.permute.xlu0 %11
  %vm13 = vcmask 7168
  %s14 = scalar_lea.vmem %s1, 1
  %15 = vst.msk [vmem:[%s14] ss:$162 sm:$0x3] %vm13, %v12
  %s16 = scalar_lea.vmem %s1, 4294967009
  %17 = vst.msk [vmem:[%s16] ss:$162 sm:$0xc] %vm13, %v12
  %s18 = scalar_lea.vmem %s1, 4294966721
  %19 = vst.msk [vmem:[%s18] ss:$162 sm:$0x30] %vm13, %v12
  %s20 = scalar_lea.vmem %s1, 4294966433
  %21 = vst.msk [vmem:[%s20] ss:$162 sm:$0xc0] %vm13, %v12
  %s22 = scalar_lea.vmem %s0, 1
  %v23 = vld.sshfl [vmem:[%s22] sm:$0xff pattern:$0x6d4b2907]
  %24 = vrot.lane.b32.xlu0 %v23, 127
  %v25 = vpop.permute.xlu0 %24
  %vm26 = vcmask 7168
  %s27 = scalar_lea.vmem %s1, 145
  %28 = vst.msk [vmem:[%s27] ss:$-126 sm:$0x3] %vm26, %v25
  %s29 = scalar_lea.vmem %s1, 433
  %30 = vst.msk [vmem:[%s29] ss:$-126 sm:$0xc] %vm26, %v25
  %s31 = scalar_lea.vmem %s1, 721
  %32 = vst.msk [vmem:[%s31] ss:$-126 sm:$0x30] %vm26, %v25
  %s33 = scalar_lea.vmem %s1, 1009
  %34 = vst.msk [vmem:[%s33] ss:$-126 sm:$0xc0] %vm26, %v25
  %v35 = vld.sshfl [vmem:[%s0] sm:$0xff pattern:$0x6d4b2907]
  %36 = vrot.lane.b32.xlu0 %v35, 126
  %v37 = vpop.permute.xlu0 %36
  %vm38 = vcmask 7168
  %s39 = scalar_lea.vmem %s1, 128
  %40 = vst.msk [vmem:[%s39] ss:$-126 sm:$0x3] %vm38, %v37
  %s41 = scalar_lea.vmem %s1, 416
  %42 = vst.msk [vmem:[%s41] ss:$-126 sm:$0xc] %vm38, %v37
  %s43 = scalar_lea.vmem %s1, 704
  %44 = vst.msk [vmem:[%s43] ss:$-126 sm:$0x30] %vm38, %v37
  %s45 = scalar_lea.vmem %s1, 992
  %46 = vst.msk [vmem:[%s45] ss:$-126 sm:$0xc0] %vm38, %v37
  %s47 = scalar_lea.vmem %s0, 1
  %v48 = vld.sshfl [vmem:[%s47] sm:$0xff pattern:$0xd4b2907e]
  %49 = vrot.lane.b32.xlu0 %v48, 126
  %v50 = vpop.permute.xlu0 %49
  %vm51 = vcmask 7168
  %s52 = scalar_lea.vmem %s1, 272
  %53 = vst.msk [vmem:[%s52] ss:$-126 sm:$0x7] %vm51, %v50
  %s54 = scalar_lea.vmem %s1, 560
  %55 = vst.msk [vmem:[%s54] ss:$-126 sm:$0x18] %vm51, %v50
  %s56 = scalar_lea.vmem %s1, 848
  %57 = vst.msk [vmem:[%s56] ss:$-126 sm:$0x60] %vm51, %v50
  %s58 = scalar_lea.vmem %s1, 247
  %59 = vst.msk [vmem:[%s58] sm:$0x80] %vm51, %v50
  %v60 = vld.sshfl [vmem:[%s0] sm:$0xff pattern:$0x6d4b2907]
  %61 = vrot.lane.b32.xlu0 %v60, 125
  %v62 = vpop.permute.xlu0 %61
  %vm63 = vcmask 7168
  %s64 = scalar_lea.vmem %s1, 129
  %65 = vst.msk [vmem:[%s64] ss:$-126 sm:$0x3] %vm63, %v62
  %s66 = scalar_lea.vmem %s1, 417
  %67 = vst.msk [vmem:[%s66] ss:$-126 sm:$0xc] %vm63, %v62
  %s68 = scalar_lea.vmem %s1, 705
  %69 = vst.msk [vmem:[%s68] ss:$-126 sm:$0x30] %vm63, %v62
  %s70 = scalar_lea.vmem %s1, 993
  %71 = vst.msk [vmem:[%s70] ss:$-126 sm:$0xc0] %vm63, %v62
  %s72 = scalar_lea.vmem %s0, 1
  %v73 = vld.sshfl [vmem:[%s72] sm:$0xff pattern:$0xd4b2907e]
  %74 = vrot.lane.b32.xlu0 %v73, 125
  %v75 = vpop.permute.xlu0 %74
  %vm76 = vcmask 7168
  %s77 = scalar_lea.vmem %s1, 273
  %78 = vst.msk [vmem:[%s77] ss:$-126 sm:$0x7] %vm76, %v75
  %s79 = scalar_lea.vmem %s1, 561
  %80 = vst.msk [vmem:[%s79] ss:$-126 sm:$0x18] %vm76, %v75
  %s81 = scalar_lea.vmem %s1, 849
  %82 = vst.msk [vmem:[%s81] ss:$-126 sm:$0x60] %vm76, %v75
  %s83 = scalar_lea.vmem %s1, 248
  %84 = vst.msk [vmem:[%s83] sm:$0x80] %vm76, %v75
  %v85 = vld.sshfl [vmem:[%s0] sm:$0xff pattern:$0xd4b2907e]
  %86 = vrot.lane.b32.xlu0 %v85, 124
  %v87 = vpop.permute.xlu0 %86
  %vm88 = vcmask 7168
  %s89 = scalar_lea.vmem %s1, 256
  %90 = vst.msk [vmem:[%s89] ss:$-126 sm:$0x7] %vm88, %v87
  %s91 = scalar_lea.vmem %s1, 544
  %92 = vst.msk [vmem:[%s91] ss:$-126 sm:$0x18] %vm88, %v87
  %s93 = scalar_lea.vmem %s1, 832
  %94 = vst.msk [vmem:[%s93] ss:$-126 sm:$0x60] %vm88, %v87
  %s95 = scalar_lea.vmem %s1, 231
  %96 = vst.msk [vmem:[%s95] sm:$0x80] %vm88, %v87
  %s97 = scalar_lea.vmem %s0, 1
  %v98 = vld.sshfl [vmem:[%s97] sm:$0xff pattern:$0x4b2907e5]
  %99 = vrot.lane.b32.xlu0 %v98, 124
  %v100 = vpop.permute.xlu0 %99
  %vm101 = vcmask 7168
  %s102 = scalar_lea.vmem %s1, 112
  %103 = vst.msk [vmem:[%s102] ss:$162 sm:$0x3] %vm101, %v100
  %s104 = scalar_lea.vmem %s1, 400
  %105 = vst.msk [vmem:[%s104] ss:$-126 sm:$0xc] %vm101, %v100
  %s106 = scalar_lea.vmem %s1, 688
  %107 = vst.msk [vmem:[%s106] ss:$-126 sm:$0x30] %vm101, %v100
  %s108 = scalar_lea.vmem %s1, 976
  %109 = vst.msk [vmem:[%s108] ss:$-126 sm:$0xc0] %vm101, %v100
  %v110 = vld.sshfl [vmem:[%s0] sm:$0xff pattern:$0xd4b2907e]
  %111 = vrot.lane.b32.xlu0 %v110, 123
  %v112 = vpop.permute.xlu0 %111
  %vm113 = vcmask 7168
  %s114 = scalar_lea.vmem %s1, 257
  %115 = vst.msk [vmem:[%s114] ss:$-126 sm:$0x7] %vm113, %v112
  %s116 = scalar_lea.vmem %s1, 545
  %117 = vst.msk [vmem:[%s116] ss:$-126 sm:$0x18] %vm113, %v112
  %s118 = scalar_lea.vmem %s1, 833
  %119 = vst.msk [vmem:[%s118] ss:$-126 sm:$0x60] %vm113, %v112
  %s120 = scalar_lea.vmem %s1, 232
  %121 = vst.msk [vmem:[%s120] sm:$0x80] %vm113, %v112
  %s122 = scalar_lea.vmem %s0, 1
  %v123 = vld.sshfl [vmem:[%s122] sm:$0xff pattern:$0x4b2907e5]
  %124 = vrot.lane.b32.xlu0 %v123, 123
  %v125 = vpop.permute.xlu0 %124
  %vm126 = vcmask 7168
  %s127 = scalar_lea.vmem %s1, 113
  %128 = vst.msk [vmem:[%s127] ss:$162 sm:$0x3] %vm126, %v125
  %s129 = scalar_lea.vmem %s1, 401
  %130 = vst.msk [vmem:[%s129] ss:$-126 sm:$0xc] %vm126, %v125
  %s131 = scalar_lea.vmem %s1, 689
  %132 = vst.msk [vmem:[%s131] ss:$-126 sm:$0x30] %vm126, %v125
  %s133 = scalar_lea.vmem %s1, 977
  %134 = vst.msk [vmem:[%s133] ss:$-126 sm:$0xc0] %vm126, %v125
  %v135 = vld.sshfl [vmem:[%s0] sm:$0xff pattern:$0x4b2907e5]
  %136 = vrot.lane.b32.xlu0 %v135, 122
  %v137 = vpop.permute.xlu0 %136
  %vm138 = vcmask 7168
  %s139 = scalar_lea.vmem %s1, 96
  %140 = vst.msk [vmem:[%s139] ss:$162 sm:$0x3] %vm138, %v137
  %s141 = scalar_lea.vmem %s1, 384
  %142 = vst.msk [vmem:[%s141] ss:$-126 sm:$0xc] %vm138, %v137
  %s143 = scalar_lea.vmem %s1, 672
  %144 = vst.msk [vmem:[%s143] ss:$-126 sm:$0x30] %vm138, %v137
  %s145 = scalar_lea.vmem %s1, 960
  %146 = vst.msk [vmem:[%s145] ss:$-126 sm:$0xc0] %vm138, %v137
  %s147 = scalar_lea.vmem %s0, 1
  %v148 = vld.sshfl [vmem:[%s147] sm:$0xff pattern:$0xb2907e5c]
  %149 = vrot.lane.b32.xlu0 %v148, 122
  %v150 = vpop.permute.xlu0 %149
  %vm151 = vcmask 7168
  %s152 = scalar_lea.vmem %s1, 240
  %153 = vst.msk [vmem:[%s152] ss:$-126 sm:$0x3] %vm151, %v150
  %s154 = scalar_lea.vmem %s1, 528
  %155 = vst.msk [vmem:[%s154] ss:$-126 sm:$0x1c] %vm151, %v150
  %s156 = scalar_lea.vmem %s1, 816
  %157 = vst.msk [vmem:[%s156] ss:$-126 sm:$0x60] %vm151, %v150
  %s158 = scalar_lea.vmem %s1, 215
  %159 = vst.msk [vmem:[%s158] sm:$0x80] %vm151, %v150
  %v160 = vld.sshfl [vmem:[%s0] sm:$0xff pattern:$0x4b2907e5]
  %161 = vrot.lane.b32.xlu0 %v160, 121
  %v162 = vpop.permute.xlu0 %161
  %vm163 = vcmask 7168
  %s164 = scalar_lea.vmem %s1, 97
  %165 = vst.msk [vmem:[%s164] ss:$162 sm:$0x3] %vm163, %v162
  %s166 = scalar_lea.vmem %s1, 385
  %167 = vst.msk [vmem:[%s166] ss:$-126 sm:$0xc] %vm163, %v162
  %s168 = scalar_lea.vmem %s1, 673
  %169 = vst.msk [vmem:[%s168] ss:$-126 sm:$0x30] %vm163, %v162
  %s170 = scalar_lea.vmem %s1, 961
  %171 = vst.msk [vmem:[%s170] ss:$-126 sm:$0xc0] %vm163, %v162
  %s172 = scalar_lea.vmem %s0, 1
  %v173 = vld.sshfl [vmem:[%s172] sm:$0xff pattern:$0xb2907e5c]
  %174 = vrot.lane.b32.xlu0 %v173, 121
  %v175 = vpop.permute.xlu0 %174
  %vm176 = vcmask 7168
  %s177 = scalar_lea.vmem %s1, 241
  %178 = vst.msk [vmem:[%s177] ss:$-126 sm:$0x3] %vm176, %v175
  %s179 = scalar_lea.vmem %s1, 529
  %180 = vst.msk [vmem:[%s179] ss:$-126 sm:$0x1c] %vm176, %v175
  %s181 = scalar_lea.vmem %s1, 817
  %182 = vst.msk [vmem:[%s181] ss:$-126 sm:$0x60] %vm176, %v175
  %s183 = scalar_lea.vmem %s1, 216
  %184 = vst.msk [vmem:[%s183] sm:$0x80] %vm176, %v175
  %v185 = vld.sshfl [vmem:[%s0] sm:$0xff pattern:$0xb2907e5c]
  %186 = vrot.lane.b32.xlu0 %v185, 120
  %v187 = vpop.permute.xlu0 %186
  %vm188 = vcmask 7168
  %s189 = scalar_lea.vmem %s1, 224
  %190 = vst.msk [vmem:[%s189] ss:$-126 sm:$0x3] %vm188, %v187
  %s191 = scalar_lea.vmem %s1, 512
  %192 = vst.msk [vmem:[%s191] ss:$-126 sm:$0x1c] %vm188, %v187
  %s193 = scalar_lea.vmem %s1, 800
  %194 = vst.msk [vmem:[%s193] ss:$-126 sm:$0x60] %vm188, %v187
  %s195 = scalar_lea.vmem %s1, 199
  %196 = vst.msk [vmem:[%s195] sm:$0x80] %vm188, %v187
  %s197 = scalar_lea.vmem %s0, 1
  %v198 = vld.sshfl [vmem:[%s197] sm:$0xff pattern:$0x2907e5c3]
  %199 = vrot.lane.b32.xlu0 %v198, 120
  %v200 = vpop.permute.xlu0 %199
  %vm201 = vcmask 7168
  %s202 = scalar_lea.vmem %s1, 80
  %203 = vst.msk [vmem:[%s202] ss:$162 sm:$0x3] %vm201, %v200
  %s204 = scalar_lea.vmem %s1, 4294967088
  %205 = vst.msk [vmem:[%s204] ss:$162 sm:$0xc] %vm201, %v200
  %s206 = scalar_lea.vmem %s1, 656
  %207 = vst.msk [vmem:[%s206] ss:$-126 sm:$0x30] %vm201, %v200
  %s208 = scalar_lea.vmem %s1, 944
  %209 = vst.msk [vmem:[%s208] ss:$-126 sm:$0xc0] %vm201, %v200
  %v210 = vld.sshfl [vmem:[%s0] sm:$0xff pattern:$0xb2907e5c]
  %211 = vrot.lane.b32.xlu0 %v210, 119
  %v212 = vpop.permute.xlu0 %211
  %vm213 = vcmask 7168
  %s214 = scalar_lea.vmem %s1, 225
  %215 = vst.msk [vmem:[%s214] ss:$-126 sm:$0x3] %vm213, %v212
  %s216 = scalar_lea.vmem %s1, 513
  %217 = vst.msk [vmem:[%s216] ss:$-126 sm:$0x1c] %vm213, %v212
  %s218 = scalar_lea.vmem %s1, 801
  %219 = vst.msk [vmem:[%s218] ss:$-126 sm:$0x60] %vm213, %v212
  %s220 = scalar_lea.vmem %s1, 200
  %221 = vst.msk [vmem:[%s220] sm:$0x80] %vm213, %v212
  %s222 = scalar_lea.vmem %s0, 1
  %v223 = vld.sshfl [vmem:[%s222] sm:$0xff pattern:$0x2907e5c3]
  %224 = vrot.lane.b32.xlu0 %v223, 119
  %v225 = vpop.permute.xlu0 %224
  %vm226 = vcmask 7168
  %s227 = scalar_lea.vmem %s1, 81
  %228 = vst.msk [vmem:[%s227] ss:$162 sm:$0x3] %vm226, %v225
  %s229 = scalar_lea.vmem %s1, 4294967089
  %230 = vst.msk [vmem:[%s229] ss:$162 sm:$0xc] %vm226, %v225
  %s231 = scalar_lea.vmem %s1, 657
  %232 = vst.msk [vmem:[%s231] ss:$-126 sm:$0x30] %vm226, %v225
  %s233 = scalar_lea.vmem %s1, 945
  %234 = vst.msk [vmem:[%s233] ss:$-126 sm:$0xc0] %vm226, %v225
  %v235 = vld.sshfl [vmem:[%s0] sm:$0xff pattern:$0x2907e5c3]
  %236 = vrot.lane.b32.xlu0 %v235, 118
  %v237 = vpop.permute.xlu0 %236
  %vm238 = vcmask 7168
  %s239 = scalar_lea.vmem %s1, 64
  %240 = vst.msk [vmem:[%s239] ss:$162 sm:$0x3] %vm238, %v237
  %s241 = scalar_lea.vmem %s1, 4294967072
  %242 = vst.msk [vmem:[%s241] ss:$162 sm:$0xc] %vm238, %v237
  %s243 = scalar_lea.vmem %s1, 640
  %244 = vst.msk [vmem:[%s243] ss:$-126 sm:$0x30] %vm238, %v237
  %s245 = scalar_lea.vmem %s1, 928
  %246 = vst.msk [vmem:[%s245] ss:$-126 sm:$0xc0] %vm238, %v237
  %s247 = scalar_lea.vmem %s0, 1
  %v248 = vld.sshfl [vmem:[%s247] sm:$0xff pattern:$0x907e5c3a]
  %249 = vrot.lane.b32.xlu0 %v248, 118
  %v250 = vpop.permute.xlu0 %249
  %vm251 = vcmask 7168
  %s252 = scalar_lea.vmem %s1, 208
  %253 = vst.msk [vmem:[%s252] ss:$-126 sm:$0x3] %vm251, %v250
  %s254 = scalar_lea.vmem %s1, 496
  %255 = vst.msk [vmem:[%s254] ss:$-126 sm:$0xc] %vm251, %v250
  %s256 = scalar_lea.vmem %s1, 784
  %257 = vst.msk [vmem:[%s256] ss:$-126 sm:$0x70] %vm251, %v250
  %s258 = scalar_lea.vmem %s1, 183
  %259 = vst.msk [vmem:[%s258] sm:$0x80] %vm251, %v250
  %v260 = vld.sshfl [vmem:[%s0] sm:$0xff pattern:$0x2907e5c3]
  %261 = vrot.lane.b32.xlu0 %v260, 117
  %v262 = vpop.permute.xlu0 %261
  %vm263 = vcmask 7168
  %s264 = scalar_lea.vmem %s1, 65
  %265 = vst.msk [vmem:[%s264] ss:$162 sm:$0x3] %vm263, %v262
  %s266 = scalar_lea.vmem %s1, 4294967073
  %267 = vst.msk [vmem:[%s266] ss:$162 sm:$0xc] %vm263, %v262
  %s268 = scalar_lea.vmem %s1, 641
  %269 = vst.msk [vmem:[%s268] ss:$-126 sm:$0x30] %vm263, %v262
  %s270 = scalar_lea.vmem %s1, 929
  %271 = vst.msk [vmem:[%s270] ss:$-126 sm:$0xc0] %vm263, %v262
  %s272 = scalar_lea.vmem %s0, 1
  %v273 = vld.sshfl [vmem:[%s272] sm:$0xff pattern:$0x907e5c3a]
  %274 = vrot.lane.b32.xlu0 %v273, 117
  %v275 = vpop.permute.xlu0 %274
  %vm276 = vcmask 7168
  %s277 = scalar_lea.vmem %s1, 209
  %278 = vst.msk [vmem:[%s277] ss:$-126 sm:$0x3] %vm276, %v275
  %s279 = scalar_lea.vmem %s1, 497
  %280 = vst.msk [vmem:[%s279] ss:$-126 sm:$0xc] %vm276, %v275
  %s281 = scalar_lea.vmem %s1, 785
  %282 = vst.msk [vmem:[%s281] ss:$-126 sm:$0x70] %vm276, %v275
  %s283 = scalar_lea.vmem %s1, 184
  %284 = vst.msk [vmem:[%s283] sm:$0x80] %vm276, %v275
  %v285 = vld.sshfl [vmem:[%s0] sm:$0xff pattern:$0x907e5c3a]
  %286 = vrot.lane.b32.xlu0 %v285, 116
  %v287 = vpop.permute.xlu0 %286
  %vm288 = vcmask 7168
  %s289 = scalar_lea.vmem %s1, 192
  %290 = vst.msk [vmem:[%s289] ss:$-126 sm:$0x3] %vm288, %v287
  %s291 = scalar_lea.vmem %s1, 480
  %292 = vst.msk [vmem:[%s291] ss:$-126 sm:$0xc] %vm288, %v287
  %s293 = scalar_lea.vmem %s1, 768
  %294 = vst.msk [vmem:[%s293] ss:$-126 sm:$0x70] %vm288, %v287
  %s295 = scalar_lea.vmem %s1, 167
  %296 = vst.msk [vmem:[%s295] sm:$0x80] %vm288, %v287
  %s297 = scalar_lea.vmem %s0, 1
  %v298 = vld.sshfl [vmem:[%s297] sm:$0xff pattern:$0x7e5c3a1]
  %299 = vrot.lane.b32.xlu0 %v298, 116
  %v300 = vpop.permute.xlu0 %299
  %vm301 = vcmask 7168
  %s302 = scalar_lea.vmem %s1, 48
  %303 = vst.msk [vmem:[%s302] ss:$162 sm:$0x3] %vm301, %v300
  %s304 = scalar_lea.vmem %s1, 4294967056
  %305 = vst.msk [vmem:[%s304] ss:$162 sm:$0xc] %vm301, %v300
  %s306 = scalar_lea.vmem %s1, 4294966768
  %307 = vst.msk [vmem:[%s306] ss:$162 sm:$0x30] %vm301, %v300
  %s308 = scalar_lea.vmem %s1, 912
  %309 = vst.msk [vmem:[%s308] ss:$-126 sm:$0xc0] %vm301, %v300
  %v310 = vld.sshfl [vmem:[%s0] sm:$0xff pattern:$0x907e5c3a]
  %311 = vrot.lane.b32.xlu0 %v310, 115
  %v312 = vpop.permute.xlu0 %311
  %vm313 = vcmask 7168
  %s314 = scalar_lea.vmem %s1, 193
  %315 = vst.msk [vmem:[%s314] ss:$-126 sm:$0x3] %vm313, %v312
  %s316 = scalar_lea.vmem %s1, 481
  %317 = vst.msk [vmem:[%s316] ss:$-126 sm:$0xc] %vm313, %v312
  %s318 = scalar_lea.vmem %s1, 769
  %319 = vst.msk [vmem:[%s318] ss:$-126 sm:$0x70] %vm313, %v312
  %s320 = scalar_lea.vmem %s1, 168
  %321 = vst.msk [vmem:[%s320] sm:$0x80] %vm313, %v312
  %s322 = scalar_lea.vmem %s0, 1
  %v323 = vld.sshfl [vmem:[%s322] sm:$0xff pattern:$0x7e5c3a1]
  %324 = vrot.lane.b32.xlu0 %v323, 115
  %v325 = vpop.permute.xlu0 %324
  %vm326 = vcmask 7168
  %s327 = scalar_lea.vmem %s1, 49
  %328 = vst.msk [vmem:[%s327] ss:$162 sm:$0x3] %vm326, %v325
  %s329 = scalar_lea.vmem %s1, 4294967057
  %330 = vst.msk [vmem:[%s329] ss:$162 sm:$0xc] %vm326, %v325
  %s331 = scalar_lea.vmem %s1, 4294966769
  %332 = vst.msk [vmem:[%s331] ss:$162 sm:$0x30] %vm326, %v325
  %s333 = scalar_lea.vmem %s1, 913
  %334 = vst.msk [vmem:[%s333] ss:$-126 sm:$0xc0] %vm326, %v325
  %v335 = vld.sshfl [vmem:[%s0] sm:$0xff pattern:$0x7e5c3a1]
  %336 = vrot.lane.b32.xlu0 %v335, 114
  %v337 = vpop.permute.xlu0 %336
  %vm338 = vcmask 7168
  %s339 = scalar_lea.vmem %s1, 32
  %340 = vst.msk [vmem:[%s339] ss:$162 sm:$0x3] %vm338, %v337
  %s341 = scalar_lea.vmem %s1, 4294967040
  %342 = vst.msk [vmem:[%s341] ss:$162 sm:$0xc] %vm338, %v337
  %s343 = scalar_lea.vmem %s1, 4294966752
  %344 = vst.msk [vmem:[%s343] ss:$162 sm:$0x30] %vm338, %v337
  %s345 = scalar_lea.vmem %s1, 896
  %346 = vst.msk [vmem:[%s345] ss:$-126 sm:$0xc0] %vm338, %v337
  %s347 = scalar_lea.vmem %s0, 2
  %v348 = vld.sshfl [vmem:[%s347] sm:$0xff pattern:$0x6d4b2907]
  %349 = vrot.lane.b32.xlu0 %v348, 114
  %v350 = vpop.permute.xlu0 %349
  %vm351 = vcmask 7168
  %s352 = scalar_lea.vmem %s1, 176
  %353 = vst.msk [vmem:[%s352] ss:$-126 sm:$0x3] %vm351, %v350
  %s354 = scalar_lea.vmem %s1, 464
  %355 = vst.msk [vmem:[%s354] ss:$-126 sm:$0xc] %vm351, %v350
  %s356 = scalar_lea.vmem %s1, 752
  %357 = vst.msk [vmem:[%s356] ss:$-126 sm:$0x30] %vm351, %v350
  %s358 = scalar_lea.vmem %s1, 1040
  %359 = vst.msk [vmem:[%s358] ss:$-126 sm:$0xc0] %vm351, %v350
  %v360 = vld.sshfl [vmem:[%s0] sm:$0xff pattern:$0x7e5c3a1]
  %361 = vrot.lane.b32.xlu0 %v360, 113
  %v362 = vpop.permute.xlu0 %361
  %vm363 = vcmask 7168
  %s364 = scalar_lea.vmem %s1, 33
  %365 = vst.msk [vmem:[%s364] ss:$162 sm:$0x3] %vm363, %v362
  %s366 = scalar_lea.vmem %s1, 4294967041
  %367 = vst.msk [vmem:[%s366] ss:$162 sm:$0xc] %vm363, %v362
  %s368 = scalar_lea.vmem %s1, 4294966753
  %369 = vst.msk [vmem:[%s368] ss:$162 sm:$0x30] %vm363, %v362
  %s370 = scalar_lea.vmem %s1, 897
  %371 = vst.msk [vmem:[%s370] ss:$-126 sm:$0xc0] %vm363, %v362
  %s372 = scalar_lea.vmem %s0, 2
  %v373 = vld.sshfl [vmem:[%s372] sm:$0xff pattern:$0x6d4b2907]
  %374 = vrot.lane.b32.xlu0 %v373, 113
  %v375 = vpop.permute.xlu0 %374
  %vm376 = vcmask 7168
  %s377 = scalar_lea.vmem %s1, 177
  %378 = vst.msk [vmem:[%s377] ss:$-126 sm:$0x3] %vm376, %v375
  %s379 = scalar_lea.vmem %s1, 465
  %380 = vst.msk [vmem:[%s379] ss:$-126 sm:$0xc] %vm376, %v375
  %s381 = scalar_lea.vmem %s1, 753
  %382 = vst.msk [vmem:[%s381] ss:$-126 sm:$0x30] %vm376, %v375
  %s383 = scalar_lea.vmem %s1, 1041
  %384 = vst.msk [vmem:[%s383] ss:$-126 sm:$0xc0] %vm376, %v375
  %s385 = scalar_lea.vmem %s0, 1
  %v386 = vld.sshfl [vmem:[%s385] sm:$0xff pattern:$0x6d4b2907]
  %387 = vrot.lane.b32.xlu0 %v386, 112
  %v388 = vpop.permute.xlu0 %387
  %vm389 = vcmask 7168
  %s390 = scalar_lea.vmem %s1, 160
  %391 = vst.msk [vmem:[%s390] ss:$-126 sm:$0x3] %vm389, %v388
  %s392 = scalar_lea.vmem %s1, 448
  %393 = vst.msk [vmem:[%s392] ss:$-126 sm:$0xc] %vm389, %v388
  %s394 = scalar_lea.vmem %s1, 736
  %395 = vst.msk [vmem:[%s394] ss:$-126 sm:$0x30] %vm389, %v388
  %s396 = scalar_lea.vmem %s1, 1024
  %397 = vst.msk [vmem:[%s396] ss:$-126 sm:$0xc0] %vm389, %v388
  %v398 = vld.sshfl [vmem:[%s0] sm:$0xff pattern:$0xf6d4b290]
  %399 = vrot.lane.b32.xlu0 %v398, 112
  %v400 = vpop.permute.xlu0 %399
  %vm401 = vcmask 7168
  %s402 = scalar_lea.vmem %s1, 16
  %403 = vst.msk [vmem:[%s402] ss:$162 sm:$0x3] %vm401, %v400
  %s404 = scalar_lea.vmem %s1, 4294967024
  %405 = vst.msk [vmem:[%s404] ss:$162 sm:$0xc] %vm401, %v400
  %s406 = scalar_lea.vmem %s1, 4294966736
  %407 = vst.msk [vmem:[%s406] ss:$162 sm:$0x30] %vm401, %v400
  %s408 = scalar_lea.vmem %s1, 4294966448
  %409 = vst.msk [vmem:[%s408] ss:$162 sm:$0xc0] %vm401, %v400
  %s410 = scalar_lea.vmem %s0, 1
  %v411 = vld.sshfl [vmem:[%s410] sm:$0xff pattern:$0x6d4b2907]
  %412 = vrot.lane.b32.xlu0 %v411, 111
  %v413 = vpop.permute.xlu0 %412
  %vm414 = vcmask 7168
  %s415 = scalar_lea.vmem %s1, 161
  %416 = vst.msk [vmem:[%s415] ss:$-126 sm:$0x3] %vm414, %v413
  %s417 = scalar_lea.vmem %s1, 449
  %418 = vst.msk [vmem:[%s417] ss:$-126 sm:$0xc] %vm414, %v413
  %s419 = scalar_lea.vmem %s1, 737
  %420 = vst.msk [vmem:[%s419] ss:$-126 sm:$0x30] %vm414, %v413
  %s421 = scalar_lea.vmem %s1, 1025
  %422 = vst.msk [vmem:[%s421] ss:$-126 sm:$0xc0] %vm414, %v413
  %v423 = vld.sshfl [vmem:[%s0] sm:$0xff pattern:$0xf6d4b290]
  %424 = vrot.lane.b32.xlu0 %v423, 111
  %v425 = vpop.permute.xlu0 %424
  %vm426 = vcmask 7168
  %s427 = scalar_lea.vmem %s1, 17
  %428 = vst.msk [vmem:[%s427] ss:$162 sm:$0x3] %vm426, %v425
  %s429 = scalar_lea.vmem %s1, 4294967025
  %430 = vst.msk [vmem:[%s429] ss:$162 sm:$0xc] %vm426, %v425
  %s431 = scalar_lea.vmem %s1, 4294966737
  %432 = vst.msk [vmem:[%s431] ss:$162 sm:$0x30] %vm426, %v425
  %s433 = scalar_lea.vmem %s1, 4294966449
  %434 = vst.msk [vmem:[%s433] ss:$162 sm:$0xc0] %vm426, %v425

// kernel: basic_block_forward.3
$region0: #{basic_block_forward.3}
  #allocation0 [shape = 'u32[]', space=smem, size = 0x4, offset = 0x4, fixed_abs, tag = 'smem constant byte address 0x4 - core index']
  #allocation1 [shape = 'u32[144,128]{1,0:T(1,128)}', space=vmem, size = 0x12000, scoped, tag = 'internal scratch']
  %s0 = inlined_call_operand.vmem [shape: bf16[2,288,128], index: 0, kind: input, shape index: {}, may-alias: {0,3}]
  %s1 = inlined_call_operand.vmem [shape: f32[1,1,128], index: 1, kind: input, shape index: {}]
  %s2 = inlined_call_operand.vmem [shape: f32[1,1,128], index: 2, kind: input, shape index: {}]
  %s3 = inlined_call_operand.vmem [shape: bf16[2,288,128], index: 3, kind: output, shape index: {}, may-alias: {0,3}]
  %s4 = sld [smem:[#allocation0]]
  $region45: #{basic_block_forward.3} parent=0
    _
  %s6 = ssub.s32 1, %s4
  %s7 = scalar_select 0, %s6, %s4
  loop: start=0, step=1, limit=4
  $region2: #{basic_block_forward.3} parent=0 // loop_pre_header
    _
  $region3: #{basic_block_forward.3} parent=0 // loop_header
    %s9 = sphi 0, %s13
    %p10 = scmp.ge.s32.totalorder %s9, 4
    %s19 = sphi 0, %s21
    %s22 = sphi 0, %s19
    %s23 = sphi 0, %s22
    %s39 = sphi 0, %s23
    %s43 = sphi 0, %s43
    %s45 = sphi 0, %s43
    %s46 = sphi 0, %s45
    %s60 = sphi 0, %s46
    %s64 = sphi 0, %s64
    %s66 = sphi 0, %s64
    %s67 = sphi 0, %s66
    %s81 = sphi 0, %s67
    %s87 = sphi 0, %s89
    %s90 = sphi 0, %s87
    %s91 = sphi 0, %s90
    %s107 = sphi 0, %s91
  $region4: #{basic_block_forward.3} parent=0 // loop_header_branch
    %12 = sbr.rel (%p10) target = $region8
  $region5: #{basic_block_forward.3} parent=0 // loop_body
    %s14 = ssub.s32 %s9, 1
    %s15 = ssub.s32 %s9, 2
    %s16 = sadd.s32 %s9, 1
    %s17 = ssub.s32 %s9, %s16
    %p18 = scmp.eq.s32.totalorder %s17, 0
    %s20 = sadd.s32 %s19, 1
    %s21 = scalar_select %p18, %s19, %s20
    %p24 = pneg %p18
    %p25 = scmp.eq.s32.totalorder %s9, 1
    %p26 = por %p24, %p25
    %p27 = scmp.ne.s32.totalorder %s19, %s22
    %p28 = scmp.eq.s32.totalorder %s9, 0
    %p29 = por %p27, %p28
    %p30 = scmp.ne.s32.totalorder %s19, %s22
    %p31 = scmp.eq.s32.totalorder %s14, 1
    %p32 = por %p30, %p31
    %p33 = scmp.ne.s32.totalorder %s22, %s23
    %p34 = scmp.eq.s32.totalorder %s14, 0
    %p35 = por %p33, %p34
    %p36 = scmp.ne.s32.totalorder %s22, %s23
    %p37 = scmp.eq.s32.totalorder %s15, 1
    %p38 = por %p36, %p37
    %p40 = scmp.ne.s32.totalorder %s23, %s39
    %p41 = scmp.eq.s32.totalorder %s15, 0
    %p42 = por %p40, %p41
    %s44 = sadd.s32 %s43, 1
    %p47 = scmp.eq.s32.totalorder %s9, 1
    %p48 = scmp.ne.s32.totalorder %s43, %s45
    %p49 = scmp.eq.s32.totalorder %s9, 0
    %p50 = por %p48, %p49
    %p51 = scmp.ne.s32.totalorder %s43, %s45
    %p52 = scmp.eq.s32.totalorder %s14, 1
    %p53 = por %p51, %p52
    %p54 = scmp.ne.s32.totalorder %s45, %s46
    %p55 = scmp.eq.s32.totalorder %s14, 0
    %p56 = por %p54, %p55
    %p57 = scmp.ne.s32.totalorder %s45, %s46
    %p58 = scmp.eq.s32.totalorder %s15, 1
    %p59 = por %p57, %p58
    %p61 = scmp.ne.s32.totalorder %s46, %s60
    %p62 = scmp.eq.s32.totalorder %s15, 0
    %p63 = por %p61, %p62
    %s65 = sadd.s32 %s64, 1
    %p68 = scmp.eq.s32.totalorder %s9, 1
    %p69 = scmp.ne.s32.totalorder %s64, %s66
    %p70 = scmp.eq.s32.totalorder %s9, 0
    %p71 = por %p69, %p70
    %p72 = scmp.ne.s32.totalorder %s64, %s66
    %p73 = scmp.eq.s32.totalorder %s14, 1
    %p74 = por %p72, %p73
    %p75 = scmp.ne.s32.totalorder %s66, %s67
    %p76 = scmp.eq.s32.totalorder %s14, 0
    %p77 = por %p75, %p76
    %p78 = scmp.ne.s32.totalorder %s66, %s67
    %p79 = scmp.eq.s32.totalorder %s15, 1
    %p80 = por %p78, %p79
    %p82 = scmp.ne.s32.totalorder %s67, %s81
    %p83 = scmp.eq.s32.totalorder %s15, 0
    %p84 = por %p82, %p83
    %s85 = ssub.s32 %s9, %s16
    %p86 = scmp.eq.s32.totalorder %s85, 0
    %s88 = sadd.s32 %s87, 1
    %s89 = scalar_select %p86, %s87, %s88
    %p92 = pneg %p86
    %p93 = scmp.eq.s32.totalorder %s9, 1
    %p94 = por %p92, %p93
    %p95 = scmp.ne.s32.totalorder %s87, %s90
    %p96 = scmp.eq.s32.totalorder %s9, 0
    %p97 = por %p95, %p96
    %p98 = scmp.ne.s32.totalorder %s87, %s90
    %p99 = scmp.eq.s32.totalorder %s14, 1
    %p100 = por %p98, %p99
    %p101 = scmp.ne.s32.totalorder %s90, %s91
    %p102 = scmp.eq.s32.totalorder %s14, 0
    %p103 = por %p101, %p102
    %p104 = scmp.ne.s32.totalorder %s90, %s91
    %p105 = scmp.eq.s32.totalorder %s15, 1
    %p106 = por %p104, %p105
    %p108 = scmp.ne.s32.totalorder %s91, %s107
    %p109 = scmp.eq.s32.totalorder %s15, 0
    %p110 = por %p108, %p109
    %p111 = scmp.le.s32.totalorder 1, %s9
    %p112 = scmp.lt.s32.totalorder %s9, 3
    %p113 = pnand %p111, %p112
    %p114 = pneg %p113
    // Predicated region
    $region9: #{basic_block_forward.3} parent=5 // pred_check
      _
    $region10: #{basic_block_forward.3} parent=5 // pred_check_branch
      %116 = sbr.rel (%p113) target = $region12
    $region11: #{basic_block_forward.3} parent=5 // pred_region
      %s117 = ssub.s32 %s9, 1
      // Predicated region
      $region13: #{basic_block_forward.3} parent=11 // pred_check
        %p118 = pneg %p56
      $region14: #{basic_block_forward.3} parent=11 // pred_check_branch
        %120 = sbr.rel (%p118) target = $region16
      $region15: #{basic_block_forward.3} parent=11 // pred_region
        _
      $region16: #{basic_block_forward.3} parent=11 // pred_fallthru
        _
      // Predicated region
      $region17: #{basic_block_forward.3} parent=11 // pred_check
        %p121 = pneg %p77
      $region18: #{basic_block_forward.3} parent=11 // pred_check_branch
        %123 = sbr.rel (%p121) target = $region20
      $region19: #{basic_block_forward.3} parent=11 // pred_region
        _
      $region20: #{basic_block_forward.3} parent=11 // pred_fallthru
        _
    $region12: #{basic_block_forward.3} parent=5 // pred_fallthru
      _
    %p124 = scmp.lt.s32.totalorder %s9, 2
    // Predicated region
    $region21: #{basic_block_forward.3} parent=5 // pred_check
      %p125 = pneg %p124
    $region22: #{basic_block_forward.3} parent=5 // pred_check_branch
      %127 = sbr.rel (%p125) target = $region24
    $region23: #{basic_block_forward.3} parent=5 // pred_region
      // Predicated region
      $region25: #{basic_block_forward.3} parent=23 // pred_check
        %p128 = pneg %p29
      $region26: #{basic_block_forward.3} parent=23 // pred_check_branch
        %130 = sbr.rel (%p128) target = $region28
      $region27: #{basic_block_forward.3} parent=23 // pred_region
        %p131 = scmp.lt.s32.totalorder %s9, 1
        %s132 = scalar_select %p131, %s9, 1
        %s133 = smul.addr %s132, 36
        %s134 = smul.addr %s133, 4
        %s135 = scalar_lea.vmem %s0, %s134
      $region28: #{basic_block_forward.3} parent=23 // pred_fallthru
        _
    $region24: #{basic_block_forward.3} parent=5 // pred_fallthru
      _
    %p136 = scmp.le.s32.totalorder 1, %s9
    %p137 = scmp.lt.s32.totalorder %s9, 3
    %p138 = pnand %p136, %p137
    %p139 = pneg %p138
    // Predicated region
    $region29: #{basic_block_forward.3} parent=5 // pred_check
      _
    $region30: #{basic_block_forward.3} parent=5 // pred_check_branch
      %141 = sbr.rel (%p138) target = $region32
    $region31: #{basic_block_forward.3} parent=5 // pred_region
      %s142 = ssub.s32 %s9, 1
      %p143 = scmp.lt.s32.totalorder %s14, 1
      %s144 = scalar_select %p143, %s14, 1
      %s145 = smul.addr %s144, 36
      %s146 = smul.addr %s145, 4
      %s147 = scalar_lea.vmem %s0, %s146
      %p148 = pneg %p35
      %p149 = pneg %p32
      %p150 = pneg %p56
      %p151 = pneg %p53
      %p152 = pneg %p77
      %p153 = pneg %p74
      %p154 = pneg %p103
      %p155 = pneg %p100
      %p156 = scmp.lt.s32.totalorder %s14, 1
      %s157 = scalar_select %p156, %s14, 1
      %s158 = smul.addr %s157, 36
      %s159 = smul.addr %s158, 4
      %s160 = scalar_lea.vmem %s3, %s159
      %p161 = scmp.lt.s32.totalorder %s14, 1
      %s162 = scalar_select %p161, %s14, 1
      %s163 = smul.addr %s162, 36
      %s164 = smul.addr %s163, 4
      %s165 = scalar_lea.vmem %s0, %s164
      %p166 = scmp.lt.s32.totalorder %s14, 1
      %s167 = scalar_select %p166, %s14, 1
      %s168 = smul.addr %s167, 36
      %s169 = smul.addr %s168, 4
      %s170 = scalar_lea.vmem %s3, %s169
      %v171 = vld [vmem:[%s165] sm:$0xf]
      %v172 = vld [vmem:[%s165 + $0x4] sm:$0xf]
      %v173 = vld [vmem:[%s165 + $0x8] sm:$0xf]
      %v174 = vld [vmem:[%s165 + $0xc] sm:$0xf]
      %v175 = vld [vmem:[%s165 + $0x10] sm:$0xf]
      %v176 = vld [vmem:[%s165 + $0x14] sm:$0xf]
      %v177 = vld [vmem:[%s165 + $0x18] sm:$0xf]
      %v178 = vld [vmem:[%s165 + $0x1c] sm:$0xf]
      %v179 = vld [vmem:[%s165 + $0x20] sm:$0xf]
      %v180 = vld [vmem:[%s165 + $0x24] sm:$0xf]
      %v181 = vld [vmem:[%s165 + $0x28] sm:$0xf]
      %v182 = vld [vmem:[%s165 + $0x2c] sm:$0xf]
      %v183 = vld [vmem:[%s165 + $0x30] sm:$0xf]
      %v184 = vld [vmem:[%s165 + $0x34] sm:$0xf]
      %v185 = vld [vmem:[%s165 + $0x38] sm:$0xf]
      %v186 = vld [vmem:[%s165 + $0x3c] sm:$0xf]
      %v187 = vld [vmem:[%s165 + $0x40] sm:$0xf]
      %v188 = vld [vmem:[%s165 + $0x44] sm:$0xf]
      %v189 = vld [vmem:[%s165 + $0x48] sm:$0xf]
      %v190 = vld [vmem:[%s165 + $0x4c] sm:$0xf]
      %v191 = vld [vmem:[%s165 + $0x50] sm:$0xf]
      %v192 = vld [vmem:[%s165 + $0x54] sm:$0xf]
      %v193 = vld [vmem:[%s165 + $0x58] sm:$0xf]
      %v194 = vld [vmem:[%s165 + $0x5c] sm:$0xf]
      %v195 = vld [vmem:[%s165 + $0x60] sm:$0xf]
      %v196 = vld [vmem:[%s165 + $0x64] sm:$0xf]
      %v197 = vld [vmem:[%s165 + $0x68] sm:$0xf]
      %v198 = vld [vmem:[%s165 + $0x6c] sm:$0xf]
      %v199 = vld [vmem:[%s165 + $0x70] sm:$0xf]
      %v200 = vld [vmem:[%s165 + $0x74] sm:$0xf]
      %v201 = vld [vmem:[%s165 + $0x78] sm:$0xf]
      %v202 = vld [vmem:[%s165 + $0x7c] sm:$0xf]
      %v203 = vld [vmem:[%s165 + $0x80] sm:$0xf]
      %v204 = vld [vmem:[%s165 + $0x84] sm:$0xf]
      %v205 = vld [vmem:[%s165 + $0x88] sm:$0xf]
      %v206 = vld [vmem:[%s165 + $0x8c] sm:$0xf]
      %v207 = vunpack.c.l.bf16 %v171
      %v208 = vunpack.c.l.bf16 %v172
      %v209 = vunpack.c.l.bf16 %v173
      %v210 = vunpack.c.l.bf16 %v174
      %v211 = vunpack.c.l.bf16 %v175
      %v212 = vunpack.c.l.bf16 %v176
      %v213 = vunpack.c.l.bf16 %v177
      %v214 = vunpack.c.l.bf16 %v178
      %v215 = vunpack.c.l.bf16 %v179
      %v216 = vunpack.c.l.bf16 %v180
      %v217 = vunpack.c.l.bf16 %v181
      %v218 = vunpack.c.l.bf16 %v182
      %v219 = vunpack.c.l.bf16 %v183
      %v220 = vunpack.c.l.bf16 %v184
      %v221 = vunpack.c.l.bf16 %v185
      %v222 = vunpack.c.l.bf16 %v186
      %v223 = vunpack.c.l.bf16 %v187
      %v224 = vunpack.c.l.bf16 %v188
      %v225 = vunpack.c.l.bf16 %v189
      %v226 = vunpack.c.l.bf16 %v190
      %v227 = vunpack.c.l.bf16 %v191
      %v228 = vunpack.c.l.bf16 %v192
      %v229 = vunpack.c.l.bf16 %v193
      %v230 = vunpack.c.l.bf16 %v194
      %v231 = vunpack.c.l.bf16 %v195
      %v232 = vunpack.c.l.bf16 %v196
      %v233 = vunpack.c.l.bf16 %v197
      %v234 = vunpack.c.l.bf16 %v198
      %v235 = vunpack.c.l.bf16 %v199
      %v236 = vunpack.c.l.bf16 %v200
      %v237 = vunpack.c.l.bf16 %v201
      %v238 = vunpack.c.l.bf16 %v202
      %v239 = vunpack.c.l.bf16 %v203
      %v240 = vunpack.c.l.bf16 %v204
      %v241 = vunpack.c.l.bf16 %v205
      %v242 = vunpack.c.l.bf16 %v206
      %v243 = vld [vmem:[%s1] sm:$0x1]
      %v245 = vlaneseq
      %v246 = vshrl.u32 %v245, 7
      %v247 = vsub.s32 0, %v246
      %v248 = vrot.slane %v243, %v247
      %v250 = vmul.f32 %v207, %v248
      %v251 = vmul.f32 %v208, %v248
      %v252 = vmul.f32 %v209, %v248
      %v253 = vmul.f32 %v210, %v248
      %v254 = vmul.f32 %v211, %v248
      %v255 = vmul.f32 %v212, %v248
      %v256 = vmul.f32 %v213, %v248
      %v257 = vmul.f32 %v214, %v248
      %v258 = vmul.f32 %v215, %v248
      %v259 = vmul.f32 %v216, %v248
      %v260 = vmul.f32 %v217, %v248
      %v261 = vmul.f32 %v218, %v248
      %v262 = vmul.f32 %v219, %v248
      %v263 = vmul.f32 %v220, %v248
      %v264 = vmul.f32 %v221, %v248
      %v265 = vmul.f32 %v222, %v248
      %v266 = vmul.f32 %v223, %v248
      %v267 = vmul.f32 %v224, %v248
      %v268 = vmul.f32 %v225, %v248
      %v269 = vmul.f32 %v226, %v248
      %v270 = vmul.f32 %v227, %v248
      %v271 = vmul.f32 %v228, %v248
      %v272 = vmul.f32 %v229, %v248
      %v273 = vmul.f32 %v230, %v248
      %v274 = vmul.f32 %v231, %v248
      %v275 = vmul.f32 %v232, %v248
      %v276 = vmul.f32 %v233, %v248
      %v277 = vmul.f32 %v234, %v248
      %v278 = vmul.f32 %v235, %v248
      %v279 = vmul.f32 %v236, %v248
      %v280 = vmul.f32 %v237, %v248
      %v281 = vmul.f32 %v238, %v248
      %v282 = vmul.f32 %v239, %v248
      %v283 = vmul.f32 %v240, %v248
      %v284 = vmul.f32 %v241, %v248
      %v285 = vmul.f32 %v242, %v248
      %v286 = vld [vmem:[%s2] sm:$0x1]
      %v288 = vlaneseq
      %v289 = vshrl.u32 %v288, 7
      %v290 = vsub.s32 0, %v289
      %v291 = vrot.slane %v286, %v290
      %v293 = vadd.f32 %v250, %v291
      %v294 = vadd.f32 %v251, %v291
      %v295 = vadd.f32 %v252, %v291
      %v296 = vadd.f32 %v253, %v291
      %v297 = vadd.f32 %v254, %v291
      %v298 = vadd.f32 %v255, %v291
      %v299 = vadd.f32 %v256, %v291
      %v300 = vadd.f32 %v257, %v291
      %v301 = vadd.f32 %v258, %v291
      %v302 = vadd.f32 %v259, %v291
      %v303 = vadd.f32 %v260, %v291
      %v304 = vadd.f32 %v261, %v291
      %v305 = vadd.f32 %v262, %v291
      %v306 = vadd.f32 %v263, %v291
      %v307 = vadd.f32 %v264, %v291
      %v308 = vadd.f32 %v265, %v291
      %v309 = vadd.f32 %v266, %v291
      %v310 = vadd.f32 %v267, %v291
      %v311 = vadd.f32 %v268, %v291
      %v312 = vadd.f32 %v269, %v291
      %v313 = vadd.f32 %v270, %v291
      %v314 = vadd.f32 %v271, %v291
      %v315 = vadd.f32 %v272, %v291
      %v316 = vadd.f32 %v273, %v291
      %v317 = vadd.f32 %v274, %v291
      %v318 = vadd.f32 %v275, %v291
      %v319 = vadd.f32 %v276, %v291
      %v320 = vadd.f32 %v277, %v291
      %v321 = vadd.f32 %v278, %v291
      %v322 = vadd.f32 %v279, %v291
      %v323 = vadd.f32 %v280, %v291
      %v324 = vadd.f32 %v281, %v291
      %v325 = vadd.f32 %v282, %v291
      %v326 = vadd.f32 %v283, %v291
      %v327 = vadd.f32 %v284, %v291
      %v328 = vadd.f32 %v285, %v291
      %v329 = vmax.f32 %v293, 0.0
      %v330 = vmax.f32 %v294, 0.0
      %v331 = vmax.f32 %v295, 0.0
      %v332 = vmax.f32 %v296, 0.0
      %v333 = vmax.f32 %v297, 0.0
      %v334 = vmax.f32 %v298, 0.0
      %v335 = vmax.f32 %v299, 0.0
      %v336 = vmax.f32 %v300, 0.0
      %v337 = vmax.f32 %v301, 0.0
      %v338 = vmax.f32 %v302, 0.0
      %v339 = vmax.f32 %v303, 0.0
      %v340 = vmax.f32 %v304, 0.0
      %v341 = vmax.f32 %v305, 0.0
      %v342 = vmax.f32 %v306, 0.0
      %v343 = vmax.f32 %v307, 0.0
      %v344 = vmax.f32 %v308, 0.0
      %v345 = vmax.f32 %v309, 0.0
      %v346 = vmax.f32 %v310, 0.0
      %v347 = vmax.f32 %v311, 0.0
      %v348 = vmax.f32 %v312, 0.0
      %v349 = vmax.f32 %v313, 0.0
      %v350 = vmax.f32 %v314, 0.0
      %v351 = vmax.f32 %v315, 0.0
      %v352 = vmax.f32 %v316, 0.0
      %v353 = vmax.f32 %v317, 0.0
      %v354 = vmax.f32 %v318, 0.0
      %v355 = vmax.f32 %v319, 0.0
      %v356 = vmax.f32 %v320, 0.0
      %v357 = vmax.f32 %v321, 0.0
      %v358 = vmax.f32 %v322, 0.0
      %v359 = vmax.f32 %v323, 0.0
      %v360 = vmax.f32 %v324, 0.0
      %v361 = vmax.f32 %v325, 0.0
      %v362 = vmax.f32 %v326, 0.0
      %v363 = vmax.f32 %v327, 0.0
      %v364 = vmax.f32 %v328, 0.0
      %v365 = vpack.c.bf16 %v330, %v329
      %v366 = vpack.c.bf16 %v332, %v331
      %v367 = vpack.c.bf16 %v334, %v333
      %v368 = vpack.c.bf16 %v336, %v335
      %v369 = vpack.c.bf16 %v338, %v337
      %v370 = vpack.c.bf16 %v340, %v339
      %v371 = vpack.c.bf16 %v342, %v341
      %v372 = vpack.c.bf16 %v344, %v343
      %v373 = vpack.c.bf16 %v346, %v345
      %v374 = vpack.c.bf16 %v348, %v347
      %v375 = vpack.c.bf16 %v350, %v349
      %v376 = vpack.c.bf16 %v352, %v351
      %v377 = vpack.c.bf16 %v354, %v353
      %v378 = vpack.c.bf16 %v356, %v355
      %v379 = vpack.c.bf16 %v358, %v357
      %v380 = vpack.c.bf16 %v360, %v359
      %v381 = vpack.c.bf16 %v362, %v361
      %v382 = vpack.c.bf16 %v364, %v363
      %v401 = vunpack.c.l.b16 %v365
      %v402 = vunpack.c.h.b16 %v365
      %v403 = vunpack.c.l.b16 %v366
      %v404 = vunpack.c.h.b16 %v366
      %v405 = vunpack.c.l.b16 %v367
      %v406 = vunpack.c.h.b16 %v367
      %v407 = vunpack.c.l.b16 %v368
      %v408 = vunpack.c.h.b16 %v368
      %v409 = vunpack.c.l.b16 %v369
      %v410 = vunpack.c.h.b16 %v369
      %v411 = vunpack.c.l.b16 %v370
      %v412 = vunpack.c.h.b16 %v370
      %v413 = vunpack.c.l.b16 %v371
      %v414 = vunpack.c.h.b16 %v371
      %v415 = vunpack.c.l.b16 %v372
      %v416 = vunpack.c.h.b16 %v372
      %v417 = vunpack.c.l.b16 %v373
      %v418 = vunpack.c.h.b16 %v373
      %v419 = vunpack.c.l.b16 %v374
      %v420 = vunpack.c.h.b16 %v374
      %v421 = vunpack.c.l.b16 %v375
      %v422 = vunpack.c.h.b16 %v375
      %v423 = vunpack.c.l.b16 %v376
      %v424 = vunpack.c.h.b16 %v376
      %v425 = vunpack.c.l.b16 %v377
      %v426 = vunpack.c.h.b16 %v377
      %v427 = vunpack.c.l.b16 %v378
      %v428 = vunpack.c.h.b16 %v378
      %v429 = vunpack.c.l.b16 %v379
      %v430 = vunpack.c.h.b16 %v379
      %v431 = vunpack.c.l.b16 %v380
      %v432 = vunpack.c.h.b16 %v380
      %v433 = vunpack.c.l.b16 %v381
      %v434 = vunpack.c.h.b16 %v381
      %v435 = vunpack.c.l.b16 %v382
      %v436 = vunpack.c.h.b16 %v382
      %v437 = vpack.c.b16 %v401, %v401
      %v438 = vpack.c.b16 %v402, %v402
      %v439 = vpack.c.b16 %v403, %v403
      %v440 = vpack.c.b16 %v404, %v404
      %v441 = vpack.c.b16 %v405, %v405
      %v442 = vpack.c.b16 %v406, %v406
      %v443 = vpack.c.b16 %v407, %v407
      %v444 = vpack.c.b16 %v408, %v408
      %v445 = vpack.c.b16 %v409, %v409
      %v446 = vpack.c.b16 %v410, %v410
      %v447 = vpack.c.b16 %v411, %v411
      %v448 = vpack.c.b16 %v412, %v412
      %v449 = vpack.c.b16 %v413, %v413
      %v450 = vpack.c.b16 %v414, %v414
      %v451 = vpack.c.b16 %v415, %v415
      %v452 = vpack.c.b16 %v416, %v416
      %v453 = vpack.c.b16 %v417, %v417
      %v454 = vpack.c.b16 %v418, %v418
      %v455 = vpack.c.b16 %v419, %v419
      %v456 = vpack.c.b16 %v420, %v420
      %v457 = vpack.c.b16 %v421, %v421
      %v458 = vpack.c.b16 %v422, %v422
      %v459 = vpack.c.b16 %v423, %v423
      %v460 = vpack.c.b16 %v424, %v424
      %v461 = vpack.c.b16 %v425, %v425
      %v462 = vpack.c.b16 %v426, %v426
      %v463 = vpack.c.b16 %v427, %v427
      %v464 = vpack.c.b16 %v428, %v428
      %v465 = vpack.c.b16 %v429, %v429
      %v466 = vpack.c.b16 %v430, %v430
      %v467 = vpack.c.b16 %v431, %v431
      %v468 = vpack.c.b16 %v432, %v432
      %v469 = vpack.c.b16 %v433, %v433
      %v470 = vpack.c.b16 %v434, %v434
      %v471 = vpack.c.b16 %v435, %v435
      %v472 = vpack.c.b16 %v436, %v436
      %509 = vst [vmem:[%s170] sm:$0xf] %v437
      %510 = vst [vmem:[%s170 + $0x4] sm:$0xf] %v438
      %511 = vst [vmem:[%s170 + $0x8] sm:$0xf] %v439
      %512 = vst [vmem:[%s170 + $0xc] sm:$0xf] %v440
      %513 = vst [vmem:[%s170 + $0x10] sm:$0xf] %v441
      %514 = vst [vmem:[%s170 + $0x14] sm:$0xf] %v442
      %515 = vst [vmem:[%s170 + $0x18] sm:$0xf] %v443
      %516 = vst [vmem:[%s170 + $0x1c] sm:$0xf] %v444
      %517 = vst [vmem:[%s170 + $0x20] sm:$0xf] %v445
      %518 = vst [vmem:[%s170 + $0x24] sm:$0xf] %v446
      %519 = vst [vmem:[%s170 + $0x28] sm:$0xf] %v447
      %520 = vst [vmem:[%s170 + $0x2c] sm:$0xf] %v448
      %521 = vst [vmem:[%s170 + $0x30] sm:$0xf] %v449
      %522 = vst [vmem:[%s170 + $0x34] sm:$0xf] %v450
      %523 = vst [vmem:[%s170 + $0x38] sm:$0xf] %v451
      %524 = vst [vmem:[%s170 + $0x3c] sm:$0xf] %v452
      %525 = vst [vmem:[%s170 + $0x40] sm:$0xf] %v453
      %526 = vst [vmem:[%s170 + $0x44] sm:$0xf] %v454
      %527 = vst [vmem:[%s170 + $0x48] sm:$0xf] %v455
      %528 = vst [vmem:[%s170 + $0x4c] sm:$0xf] %v456
      %529 = vst [vmem:[%s170 + $0x50] sm:$0xf] %v457
      %530 = vst [vmem:[%s170 + $0x54] sm:$0xf] %v458
      %531 = vst [vmem:[%s170 + $0x58] sm:$0xf] %v459
      %532 = vst [vmem:[%s170 + $0x5c] sm:$0xf] %v460
      %533 = vst [vmem:[%s170 + $0x60] sm:$0xf] %v461
      %534 = vst [vmem:[%s170 + $0x64] sm:$0xf] %v462
      %535 = vst [vmem:[%s170 + $0x68] sm:$0xf] %v463
      %536 = vst [vmem:[%s170 + $0x6c] sm:$0xf] %v464
      %537 = vst [vmem:[%s170 + $0x70] sm:$0xf] %v465
      %538 = vst [vmem:[%s170 + $0x74] sm:$0xf] %v466
      %539 = vst [vmem:[%s170 + $0x78] sm:$0xf] %v467
      %540 = vst [vmem:[%s170 + $0x7c] sm:$0xf] %v468
      %541 = vst [vmem:[%s170 + $0x80] sm:$0xf] %v469
      %542 = vst [vmem:[%s170 + $0x84] sm:$0xf] %v470
      %543 = vst [vmem:[%s170 + $0x88] sm:$0xf] %v471
      %544 = vst [vmem:[%s170 + $0x8c] sm:$0xf] %v472
      %p545 = scmp.lt.s32.totalorder %s14, 1
      %s546 = scalar_select %p545, %s14, 1
      %s547 = smul.addr %s546, 36
      %s548 = smul.addr %s547, 4
      %s549 = scalar_lea.vmem %s3, %s548
      // Predicated region
      $region33: #{basic_block_forward.3} parent=31 // pred_check
        %p550 = pneg %p100
      $region34: #{basic_block_forward.3} parent=31 // pred_check_branch
        %552 = sbr.rel (%p550) target = $region36
      $region35: #{basic_block_forward.3} parent=31 // pred_region
        _
      $region36: #{basic_block_forward.3} parent=31 // pred_fallthru
        _
    $region32: #{basic_block_forward.3} parent=5 // pred_fallthru
      _
    %p553 = scmp.le.s32.totalorder 2, %s9
    // Predicated region
    $region37: #{basic_block_forward.3} parent=5 // pred_check
      %p554 = pneg %p553
    $region38: #{basic_block_forward.3} parent=5 // pred_check_branch
      %556 = sbr.rel (%p554) target = $region40
    $region39: #{basic_block_forward.3} parent=5 // pred_region
      %s557 = ssub.s32 %s9, 2
      // Predicated region
      $region41: #{basic_block_forward.3} parent=39 // pred_check
        %p558 = pneg %p106
      $region42: #{basic_block_forward.3} parent=39 // pred_check_branch
        %560 = sbr.rel (%p558) target = $region44
      $region43: #{basic_block_forward.3} parent=39 // pred_region
        %p561 = scmp.lt.s32.totalorder %s15, 1
        %s562 = scalar_select %p561, %s15, 1
        %s563 = smul.addr %s562, 36
        %s564 = smul.addr %s563, 4
        %s565 = scalar_lea.vmem %s3, %s564
      $region44: #{basic_block_forward.3} parent=39 // pred_fallthru
        _
    $region40: #{basic_block_forward.3} parent=5 // pred_fallthru
      _
  $region6: #{basic_block_forward.3} parent=0 // loop_footer
    %s13 = sadd.s32 1, %s9
  $region7: #{basic_block_forward.3} parent=0 // loop_footer_branch
    %8 = sbr.rel target = $region3
  $region8: #{basic_block_forward.3} parent=0 // loop_exit
    _

// kernel: basic_block_forward.2
$region0: #{basic_block_forward.2}
  #allocation0 [shape = 'u32[]', space=smem, size = 0x4, offset = 0x4, fixed_abs, tag = 'smem constant byte address 0x4 - core index']
  #allocation1 [shape = 'u32[144,128]{1,0:T(1,128)}', space=vmem, size = 0x12000, scoped, tag = 'internal scratch']
  %s0 = inlined_call_operand.vmem [shape: bf16[2,342,4], index: 0, kind: input, shape index: {}]
  %s1 = inlined_call_operand.vmem [shape: bf16[9,4,128], index: 1, kind: input, shape index: {}]
  %s2 = inlined_call_operand.vmem [shape: f32[288,1], index: 2, kind: input, shape index: {}]
  %s3 = inlined_call_operand.vmem [shape: bf16[2,288,128], index: 3, kind: output, shape index: {0}]
  %s4 = inlined_call_operand.vmem [shape: f32[16,128], index: 4, kind: output, shape index: {1}]
  %s5 = inlined_call_operand.vmem [shape: f32[16,128], index: 5, kind: output, shape index: {2}]
  %6 = xla_tuple %s3, %s4, %s5
  %s7 = sld [smem:[#allocation0]]
  $region61: #{basic_block_forward.2} parent=0
    _
  %s9 = ssub.s32 1, %s7
  %s10 = scalar_select 0, %s9, %s7
  loop: start=0, step=1, limit=4
  $region2: #{basic_block_forward.2} parent=0 // loop_pre_header
    _
  $region3: #{basic_block_forward.2} parent=0 // loop_header
    %s12 = sphi 0, %s16
    %p13 = scmp.ge.s32.totalorder %s12, 4
    %s22 = sphi 0, %s24
    %s25 = sphi 0, %s22
    %s26 = sphi 0, %s25
    %s42 = sphi 0, %s26
    %s46 = sphi 0, %s46
    %s48 = sphi 0, %s46
    %s49 = sphi 0, %s48
    %s63 = sphi 0, %s49
    %s67 = sphi 0, %s67
    %s69 = sphi 0, %s67
    %s70 = sphi 0, %s69
    %s84 = sphi 0, %s70
    %s90 = sphi 0, %s92
    %s93 = sphi 0, %s90
    %s94 = sphi 0, %s93
    %s110 = sphi 0, %s94
    %s116 = sphi 0, %s118
    %s119 = sphi 0, %s116
    %s120 = sphi 0, %s119
    %s136 = sphi 0, %s120
    %s142 = sphi 0, %s144
    %s145 = sphi 0, %s142
    %s146 = sphi 0, %s145
    %s162 = sphi 0, %s146
  $region4: #{basic_block_forward.2} parent=0 // loop_header_branch
    %15 = sbr.rel (%p13) target = $region8
  $region5: #{basic_block_forward.2} parent=0 // loop_body
    %s17 = ssub.s32 %s12, 1
    %s18 = ssub.s32 %s12, 2
    %s19 = sadd.s32 %s12, 1
    %s20 = ssub.s32 %s12, %s19
    %p21 = scmp.eq.s32.totalorder %s20, 0
    %s23 = sadd.s32 %s22, 1
    %s24 = scalar_select %p21, %s22, %s23
    %p27 = pneg %p21
    %p28 = scmp.eq.s32.totalorder %s12, 1
    %p29 = por %p27, %p28
    %p30 = scmp.ne.s32.totalorder %s22, %s25
    %p31 = scmp.eq.s32.totalorder %s12, 0
    %p32 = por %p30, %p31
    %p33 = scmp.ne.s32.totalorder %s22, %s25
    %p34 = scmp.eq.s32.totalorder %s17, 1
    %p35 = por %p33, %p34
    %p36 = scmp.ne.s32.totalorder %s25, %s26
    %p37 = scmp.eq.s32.totalorder %s17, 0
    %p38 = por %p36, %p37
    %p39 = scmp.ne.s32.totalorder %s25, %s26
    %p40 = scmp.eq.s32.totalorder %s18, 1
    %p41 = por %p39, %p40
    %p43 = scmp.ne.s32.totalorder %s26, %s42
    %p44 = scmp.eq.s32.totalorder %s18, 0
    %p45 = por %p43, %p44
    %s47 = sadd.s32 %s46, 1
    %p50 = scmp.eq.s32.totalorder %s12, 1
    %p51 = scmp.ne.s32.totalorder %s46, %s48
    %p52 = scmp.eq.s32.totalorder %s12, 0
    %p53 = por %p51, %p52
    %p54 = scmp.ne.s32.totalorder %s46, %s48
    %p55 = scmp.eq.s32.totalorder %s17, 1
    %p56 = por %p54, %p55
    %p57 = scmp.ne.s32.totalorder %s48, %s49
    %p58 = scmp.eq.s32.totalorder %s17, 0
    %p59 = por %p57, %p58
    %p60 = scmp.ne.s32.totalorder %s48, %s49
    %p61 = scmp.eq.s32.totalorder %s18, 1
    %p62 = por %p60, %p61
    %p64 = scmp.ne.s32.totalorder %s49, %s63
    %p65 = scmp.eq.s32.totalorder %s18, 0
    %p66 = por %p64, %p65
    %s68 = sadd.s32 %s67, 1
    %p71 = scmp.eq.s32.totalorder %s12, 1
    %p72 = scmp.ne.s32.totalorder %s67, %s69
    %p73 = scmp.eq.s32.totalorder %s12, 0
    %p74 = por %p72, %p73
    %p75 = scmp.ne.s32.totalorder %s67, %s69
    %p76 = scmp.eq.s32.totalorder %s17, 1
    %p77 = por %p75, %p76
    %p78 = scmp.ne.s32.totalorder %s69, %s70
    %p79 = scmp.eq.s32.totalorder %s17, 0
    %p80 = por %p78, %p79
    %p81 = scmp.ne.s32.totalorder %s69, %s70
    %p82 = scmp.eq.s32.totalorder %s18, 1
    %p83 = por %p81, %p82
    %p85 = scmp.ne.s32.totalorder %s70, %s84
    %p86 = scmp.eq.s32.totalorder %s18, 0
    %p87 = por %p85, %p86
    %s88 = ssub.s32 %s12, %s19
    %p89 = scmp.eq.s32.totalorder %s88, 0
    %s91 = sadd.s32 %s90, 1
    %s92 = scalar_select %p89, %s90, %s91
    %p95 = pneg %p89
    %p96 = scmp.eq.s32.totalorder %s12, 1
    %p97 = por %p95, %p96
    %p98 = scmp.ne.s32.totalorder %s90, %s93
    %p99 = scmp.eq.s32.totalorder %s12, 0
    %p100 = por %p98, %p99
    %p101 = scmp.ne.s32.totalorder %s90, %s93
    %p102 = scmp.eq.s32.totalorder %s17, 1
    %p103 = por %p101, %p102
    %p104 = scmp.ne.s32.totalorder %s93, %s94
    %p105 = scmp.eq.s32.totalorder %s17, 0
    %p106 = por %p104, %p105
    %p107 = scmp.ne.s32.totalorder %s93, %s94
    %p108 = scmp.eq.s32.totalorder %s18, 1
    %p109 = por %p107, %p108
    %p111 = scmp.ne.s32.totalorder %s94, %s110
    %p112 = scmp.eq.s32.totalorder %s18, 0
    %p113 = por %p111, %p112
    %s114 = ssub.s32 %s12, %s19
    %p115 = scmp.eq.s32.totalorder %s114, 0
    %s117 = sadd.s32 %s116, 1
    %s118 = scalar_select %p115, %s116, %s117
    %p121 = pneg %p115
    %p122 = scmp.eq.s32.totalorder %s12, 1
    %p123 = por %p121, %p122
    %p124 = scmp.ne.s32.totalorder %s116, %s119
    %p125 = scmp.eq.s32.totalorder %s12, 0
    %p126 = por %p124, %p125
    %p127 = scmp.ne.s32.totalorder %s116, %s119
    %p128 = scmp.eq.s32.totalorder %s17, 1
    %p129 = por %p127, %p128
    %p130 = scmp.ne.s32.totalorder %s119, %s120
    %p131 = scmp.eq.s32.totalorder %s17, 0
    %p132 = por %p130, %p131
    %p133 = scmp.ne.s32.totalorder %s119, %s120
    %p134 = scmp.eq.s32.totalorder %s18, 1
    %p135 = por %p133, %p134
    %p137 = scmp.ne.s32.totalorder %s120, %s136
    %p138 = scmp.eq.s32.totalorder %s18, 0
    %p139 = por %p137, %p138
    %s140 = ssub.s32 %s12, %s19
    %p141 = scmp.eq.s32.totalorder %s140, 0
    %s143 = sadd.s32 %s142, 1
    %s144 = scalar_select %p141, %s142, %s143
    %p147 = pneg %p141
    %p148 = scmp.eq.s32.totalorder %s12, 1
    %p149 = por %p147, %p148
    %p150 = scmp.ne.s32.totalorder %s142, %s145
    %p151 = scmp.eq.s32.totalorder %s12, 0
    %p152 = por %p150, %p151
    %p153 = scmp.ne.s32.totalorder %s142, %s145
    %p154 = scmp.eq.s32.totalorder %s17, 1
    %p155 = por %p153, %p154
    %p156 = scmp.ne.s32.totalorder %s145, %s146
    %p157 = scmp.eq.s32.totalorder %s17, 0
    %p158 = por %p156, %p157
    %p159 = scmp.ne.s32.totalorder %s145, %s146
    %p160 = scmp.eq.s32.totalorder %s18, 1
    %p161 = por %p159, %p160
    %p163 = scmp.ne.s32.totalorder %s146, %s162
    %p164 = scmp.eq.s32.totalorder %s18, 0
    %p165 = por %p163, %p164
    %p166 = scmp.le.s32.totalorder 1, %s12
    %p167 = scmp.lt.s32.totalorder %s12, 3
    %p168 = pnand %p166, %p167
    %p169 = pneg %p168
    // Predicated region
    $region9: #{basic_block_forward.2} parent=5 // pred_check
      _
    $region10: #{basic_block_forward.2} parent=5 // pred_check_branch
      %171 = sbr.rel (%p168) target = $region12
    $region11: #{basic_block_forward.2} parent=5 // pred_region
      %s172 = ssub.s32 %s12, 1
      // Predicated region
      $region13: #{basic_block_forward.2} parent=11 // pred_check
        %p173 = pneg %p59
      $region14: #{basic_block_forward.2} parent=11 // pred_check_branch
        %175 = sbr.rel (%p173) target = $region16
      $region15: #{basic_block_forward.2} parent=11 // pred_region
        _
      $region16: #{basic_block_forward.2} parent=11 // pred_fallthru
        _
      // Predicated region
      $region17: #{basic_block_forward.2} parent=11 // pred_check
        %p176 = pneg %p80
      $region18: #{basic_block_forward.2} parent=11 // pred_check_branch
        %178 = sbr.rel (%p176) target = $region20
      $region19: #{basic_block_forward.2} parent=11 // pred_region
        _
      $region20: #{basic_block_forward.2} parent=11 // pred_fallthru
        _
    $region12: #{basic_block_forward.2} parent=5 // pred_fallthru
      _
    %p179 = scmp.lt.s32.totalorder %s12, 2
    // Predicated region
    $region21: #{basic_block_forward.2} parent=5 // pred_check
      %p180 = pneg %p179
    $region22: #{basic_block_forward.2} parent=5 // pred_check_branch
      %182 = sbr.rel (%p180) target = $region24
    $region23: #{basic_block_forward.2} parent=5 // pred_region
      // Predicated region
      $region25: #{basic_block_forward.2} parent=23 // pred_check
        %p183 = pneg %p32
      $region26: #{basic_block_forward.2} parent=23 // pred_check_branch
        %185 = sbr.rel (%p183) target = $region28
      $region27: #{basic_block_forward.2} parent=23 // pred_region
        %p186 = scmp.lt.s32.totalorder %s12, 1
        %s187 = scalar_select %p186, %s12, 1
        %s188 = smul.addr %s187, 43
        %s189 = smul.addr %s188, 4
        %s190 = scalar_lea.vmem %s0, %s189
      $region28: #{basic_block_forward.2} parent=23 // pred_fallthru
        _
    $region24: #{basic_block_forward.2} parent=5 // pred_fallthru
      _
    %p191 = scmp.le.s32.totalorder 1, %s12
    %p192 = scmp.lt.s32.totalorder %s12, 3
    %p193 = pnand %p191, %p192
    %p194 = pneg %p193
    // Predicated region
    $region29: #{basic_block_forward.2} parent=5 // pred_check
      _
    $region30: #{basic_block_forward.2} parent=5 // pred_check_branch
      %196 = sbr.rel (%p193) target = $region32
    $region31: #{basic_block_forward.2} parent=5 // pred_region
      %s197 = ssub.s32 %s12, 1
      %p198 = scmp.lt.s32.totalorder %s17, 1
      %s199 = scalar_select %p198, %s17, 1
      %s200 = smul.addr %s199, 43
      %s201 = smul.addr %s200, 4
      %s202 = scalar_lea.vmem %s0, %s201
      %p203 = pneg %p38
      %p204 = pneg %p35
      %p205 = pneg %p59
      %p206 = pneg %p56
      %p207 = pneg %p80
      %p208 = pneg %p77
      %p209 = pneg %p106
      %p210 = pneg %p103
      %p211 = scmp.lt.s32.totalorder %s17, 1
      %s212 = scalar_select %p211, %s17, 1
      %s213 = smul.addr %s212, 36
      %s214 = smul.addr %s213, 4
      %s215 = scalar_lea.vmem %s3, %s214
      %p216 = pneg %p132
      %p217 = pneg %p129
      %p218 = scmp.lt.s32.totalorder %s17, 1
      %s219 = scalar_select %p218, %s17, 1
      %s220 = smul.addr %s219, 8
      %s221 = scalar_lea.vmem %s4, %s220
      %p222 = pneg %p158
      %p223 = pneg %p155
      %p224 = scmp.lt.s32.totalorder %s17, 1
      %s225 = scalar_select %p224, %s17, 1
      %s226 = smul.addr %s225, 8
      %s227 = scalar_lea.vmem %s5, %s226
      %p228 = scmp.lt.s32.totalorder %s17, 1
      %s229 = scalar_select %p228, %s17, 1
      %s230 = smul.addr %s229, 43
      %s231 = smul.addr %s230, 4
      %s232 = scalar_lea.vmem %s0, %s231
      %p233 = scmp.lt.s32.totalorder %s17, 1
      %s234 = scalar_select %p233, %s17, 1
      %s235 = smul.addr %s234, 36
      %s236 = smul.addr %s235, 4
      %s237 = scalar_lea.vmem %s3, %s236
      %p238 = scmp.lt.s32.totalorder %s17, 1
      %s239 = scalar_select %p238, %s17, 1
      %s240 = smul.addr %s239, 8
      %s241 = scalar_lea.vmem %s4, %s240
      %p242 = scmp.lt.s32.totalorder %s17, 1
      %s243 = scalar_select %p242, %s17, 1
      %s244 = smul.addr %s243, 8
      %s245 = scalar_lea.vmem %s5, %s244
      %v247 = vld [vmem:[%s232] sm:$0xf]
      %v248 = vld [vmem:[%s232 + $0x4] sm:$0xf]
      %v249 = vld [vmem:[%s232 + $0x8] sm:$0xf]
      %v250 = vld [vmem:[%s232 + $0xc] sm:$0xf]
      %v251 = vld [vmem:[%s232 + $0x10] sm:$0xf]
      %v252 = vld [vmem:[%s232 + $0x14] sm:$0xf]
      %v253 = vld [vmem:[%s232 + $0x18] sm:$0xf]
      %v254 = vld [vmem:[%s232 + $0x1c] sm:$0xf]
      %v255 = vld [vmem:[%s232 + $0x20] sm:$0xf]
      %v256 = vld [vmem:[%s232 + $0x24] sm:$0xf]
      %v257 = vld [vmem:[%s232 + $0x28] sm:$0xf]
      %v258 = vld [vmem:[%s232 + $0x2c] sm:$0xf]
      %v259 = vld [vmem:[%s232 + $0x30] sm:$0xf]
      %v260 = vld [vmem:[%s232 + $0x34] sm:$0xf]
      %v261 = vld [vmem:[%s232 + $0x38] sm:$0xf]
      %v262 = vld [vmem:[%s232 + $0x3c] sm:$0xf]
      %v263 = vld [vmem:[%s232 + $0x40] sm:$0xf]
      %v264 = vld [vmem:[%s232 + $0x44] sm:$0xf]
      %v265 = vld [vmem:[%s232 + $0x48] sm:$0xf]
      %v266 = vld [vmem:[%s232 + $0x4c] sm:$0xf]
      %v267 = vld [vmem:[%s232 + $0x50] sm:$0xf]
      %v268 = vld [vmem:[%s232 + $0x54] sm:$0xf]
      %v269 = vld [vmem:[%s232 + $0x58] sm:$0xf]
      %v270 = vld [vmem:[%s232 + $0x5c] sm:$0xf]
      %v271 = vld [vmem:[%s232 + $0x60] sm:$0xf]
      %v272 = vld [vmem:[%s232 + $0x64] sm:$0xf]
      %v273 = vld [vmem:[%s232 + $0x68] sm:$0xf]
      %v274 = vld [vmem:[%s232 + $0x6c] sm:$0xf]
      %v275 = vld [vmem:[%s232 + $0x70] sm:$0xf]
      %v276 = vld [vmem:[%s232 + $0x74] sm:$0xf]
      %v277 = vld [vmem:[%s232 + $0x78] sm:$0xf]
      %v278 = vld [vmem:[%s232 + $0x7c] sm:$0xf]
      %v279 = vld [vmem:[%s232 + $0x80] sm:$0xf]
      %v280 = vld [vmem:[%s232 + $0x84] sm:$0xf]
      %v281 = vld [vmem:[%s232 + $0x88] sm:$0xf]
      %v282 = vld [vmem:[%s232 + $0x8c] sm:$0xf]
      %v283 = vld [vmem:[%s232 + $0x90] sm:$0xf]
      %v284 = vld [vmem:[%s232 + $0x94] sm:$0xf]
      %v285 = vld [vmem:[%s232 + $0x98] sm:$0xf]
      %v286 = vld [vmem:[%s232 + $0x9c] sm:$0xf]
      %v287 = vld [vmem:[%s232 + $0xa0] sm:$0xf]
      %v288 = vld [vmem:[%s1] sm:$0x3]
      %s289 = scalar_lea.vmem %s1, 2
      %v290 = vld [vmem:[%s289] sm:$0x3]
      %v328 = vunpack.c.l.b16 %v247
      %v329 = vunpack.c.l.b16 %v248
      %v330 = vunpack.c.l.b16 %v249
      %v331 = vunpack.c.l.b16 %v250
      %v332 = vunpack.c.l.b16 %v251
      %v333 = vunpack.c.l.b16 %v252
      %v334 = vunpack.c.l.b16 %v253
      %v335 = vunpack.c.l.b16 %v254
      %v336 = vunpack.c.l.b16 %v255
      %v337 = vunpack.c.l.b16 %v256
      %v338 = vunpack.c.l.b16 %v257
      %v339 = vunpack.c.l.b16 %v258
      %v340 = vunpack.c.l.b16 %v259
      %v341 = vunpack.c.l.b16 %v260
      %v342 = vunpack.c.l.b16 %v261
      %v343 = vunpack.c.l.b16 %v262
      %v344 = vunpack.c.l.b16 %v263
      %v345 = vunpack.c.l.b16 %v264
      %v346 = vunpack.c.l.b16 %v265
      %v347 = vunpack.c.l.b16 %v266
      %v348 = vunpack.c.l.b16 %v267
      %v349 = vunpack.c.l.b16 %v268
      %v350 = vunpack.c.l.b16 %v269
      %v351 = vunpack.c.l.b16 %v270
      %v352 = vunpack.c.l.b16 %v271
      %v353 = vunpack.c.l.b16 %v272
      %v354 = vunpack.c.l.b16 %v273
      %v355 = vunpack.c.l.b16 %v274
      %v356 = vunpack.c.l.b16 %v275
      %v357 = vunpack.c.l.b16 %v276
      %v358 = vunpack.c.l.b16 %v277
      %v359 = vunpack.c.l.b16 %v278
      %v360 = vunpack.c.l.b16 %v279
      %v361 = vunpack.c.l.b16 %v280
      %v362 = vunpack.c.l.b16 %v281
      %v363 = vunpack.c.l.b16 %v282
      %v364 = vunpack.c.l.b16 %v283
      %v365 = vpack.c.b16 %v329, %v328
      %v366 = vpack.c.b16 %v331, %v330
      %v367 = vpack.c.b16 %v333, %v332
      %v368 = vpack.c.b16 %v335, %v334
      %v369 = vpack.c.b16 %v337, %v336
      %v370 = vpack.c.b16 %v339, %v338
      %v371 = vpack.c.b16 %v341, %v340
      %v372 = vpack.c.b16 %v343, %v342
      %v373 = vpack.c.b16 %v345, %v344
      %v374 = vpack.c.b16 %v347, %v346
      %v375 = vpack.c.b16 %v349, %v348
      %v376 = vpack.c.b16 %v351, %v350
      %v377 = vpack.c.b16 %v353, %v352
      %v378 = vpack.c.b16 %v355, %v354
      %v379 = vpack.c.b16 %v357, %v356
      %v380 = vpack.c.b16 %v359, %v358
      %v381 = vpack.c.b16 %v361, %v360
      %v382 = vpack.c.b16 %v363, %v362
      %v383 = vpack.c.b16 %v364, %v364
      %vm384 = vsmask.f32 7424
      %v386 = vshrl.u32 %v365, 16
      %v388 = vshll.u32 %v365, 16
      %v390 = vrot.slane %v388, 1
      %v391 = vor.u32 %v386, %v390
      %v393 = vshll.u32 %v366, 16
      %v395 = vrot.slane %v393, 1
      %v396 = vsel %vm384, %v391, %v395
      %v397 = vshrl.u32 %v366, 16
      %v399 = vor.u32 %v397, %v395
      %v401 = vshll.u32 %v367, 16
      %v403 = vrot.slane %v401, 1
      %v404 = vsel %vm384, %v399, %v403
      %v405 = vshrl.u32 %v367, 16
      %v407 = vor.u32 %v405, %v403
      %v409 = vshll.u32 %v368, 16
      %v411 = vrot.slane %v409, 1
      %v412 = vsel %vm384, %v407, %v411
      %v413 = vshrl.u32 %v368, 16
      %v415 = vor.u32 %v413, %v411
      %v417 = vshll.u32 %v369, 16
      %v419 = vrot.slane %v417, 1
      %v420 = vsel %vm384, %v415, %v419
      %v421 = vshrl.u32 %v369, 16
      %v423 = vor.u32 %v421, %v419
      %v425 = vshll.u32 %v370, 16
      %v427 = vrot.slane %v425, 1
      %v428 = vsel %vm384, %v423, %v427
      %v429 = vshrl.u32 %v370, 16
      %v431 = vor.u32 %v429, %v427
      %v433 = vshll.u32 %v371, 16
      %v435 = vrot.slane %v433, 1
      %v436 = vsel %vm384, %v431, %v435
      %v437 = vshrl.u32 %v371, 16
      %v439 = vor.u32 %v437, %v435
      %v441 = vshll.u32 %v372, 16
      %v443 = vrot.slane %v441, 1
      %v444 = vsel %vm384, %v439, %v443
      %v445 = vshrl.u32 %v372, 16
      %v447 = vor.u32 %v445, %v443
      %v449 = vshll.u32 %v373, 16
      %v451 = vrot.slane %v449, 1
      %v452 = vsel %vm384, %v447, %v451
      %v453 = vshrl.u32 %v373, 16
      %v455 = vor.u32 %v453, %v451
      %v457 = vshll.u32 %v374, 16
      %v459 = vrot.slane %v457, 1
      %v460 = vsel %vm384, %v455, %v459
      %v461 = vshrl.u32 %v374, 16
      %v463 = vor.u32 %v461, %v459
      %v465 = vshll.u32 %v375, 16
      %v467 = vrot.slane %v465, 1
      %v468 = vsel %vm384, %v463, %v467
      %v469 = vshrl.u32 %v375, 16
      %v471 = vor.u32 %v469, %v467
      %v473 = vshll.u32 %v376, 16
      %v475 = vrot.slane %v473, 1
      %v476 = vsel %vm384, %v471, %v475
      %v477 = vshrl.u32 %v376, 16
      %v479 = vor.u32 %v477, %v475
      %v481 = vshll.u32 %v377, 16
      %v483 = vrot.slane %v481, 1
      %v484 = vsel %vm384, %v479, %v483
      %v485 = vshrl.u32 %v377, 16
      %v487 = vor.u32 %v485, %v483
      %v489 = vshll.u32 %v378, 16
      %v491 = vrot.slane %v489, 1
      %v492 = vsel %vm384, %v487, %v491
      %v493 = vshrl.u32 %v378, 16
      %v495 = vor.u32 %v493, %v491
      %v497 = vshll.u32 %v379, 16
      %v499 = vrot.slane %v497, 1
      %v500 = vsel %vm384, %v495, %v499
      %v501 = vshrl.u32 %v379, 16
      %v503 = vor.u32 %v501, %v499
      %v505 = vshll.u32 %v380, 16
      %v507 = vrot.slane %v505, 1
      %v508 = vsel %vm384, %v503, %v507
      %v509 = vshrl.u32 %v380, 16
      %v511 = vor.u32 %v509, %v507
      %v513 = vshll.u32 %v381, 16
      %v515 = vrot.slane %v513, 1
      %v516 = vsel %vm384, %v511, %v515
      %v517 = vshrl.u32 %v381, 16
      %v519 = vor.u32 %v517, %v515
      %v521 = vshll.u32 %v382, 16
      %v523 = vrot.slane %v521, 1
      %v524 = vsel %vm384, %v519, %v523
      %v525 = vshrl.u32 %v382, 16
      %v527 = vor.u32 %v525, %v523
      %v529 = vshll.u32 %v383, 16
      %v531 = vrot.slane %v529, 1
      %v532 = vsel %vm384, %v527, %v531
      %vm533 = vcmask 31744
      %v535 = vsel %vm533, %v396, 0
      %v538 = vsel %vm533, %v404, 0
      %v541 = vsel %vm533, %v412, 0
      %v544 = vsel %vm533, %v420, 0
      %v547 = vsel %vm533, %v428, 0
      %v550 = vsel %vm533, %v436, 0
      %v553 = vsel %vm533, %v444, 0
      %v556 = vsel %vm533, %v452, 0
      %v559 = vsel %vm533, %v460, 0
      %v562 = vsel %vm533, %v468, 0
      %v565 = vsel %vm533, %v476, 0
      %v568 = vsel %vm533, %v484, 0
      %v571 = vsel %vm533, %v492, 0
      %v574 = vsel %vm533, %v500, 0
      %v577 = vsel %vm533, %v508, 0
      %v580 = vsel %vm533, %v516, 0
      %v583 = vsel %vm533, %v524, 0
      %v586 = vsel %vm533, %v532, 0
      %vm588 = vcmask 1041408
      %v590 = vsel %vm588, %v290, 0
      %592 = vmatprep.subr.bf16.mxu0 0
      %593 = vmatpush1.bf16.msra.mxu0 %v590
      %594 = vmatprep.subr.bf16.mxu0 0
      %595 = vmatpush1.bf16.msra.mxu0 0
      %596 = vmatprep.subr.bf16.mxu0 0
      %597 = vmatpush1.bf16.msra.mxu0 0
      %598 = vmatprep.subr.bf16.mxu0 0
      %599 = vmatpush1.bf16.msra.mxu0 0
      %600 = vmatprep.subr.bf16.mxu0 0
      %601 = vmatpush1.bf16.msra.mxu0 0
      %602 = vmatprep.subr.bf16.mxu0 0
      %603 = vmatpush1.bf16.msra.mxu0 0
      %604 = vmatprep.subr.bf16.mxu0 0
      %605 = vmatpush1.bf16.msra.mxu0 0
      %606 = vmatprep.subr.bf16.mxu0 0
      %607 = vmatpush1.bf16.msra.mxu0 0
      %608 = vmatprep.subr.bf16.mxu0 0
      %609 = vmatpush1.bf16.msra.mxu0 0
      %610 = vmatprep.subr.bf16.mxu0 0
      %611 = vmatpush1.bf16.msra.mxu0 0
      %612 = vmatprep.subr.bf16.mxu0 0
      %613 = vmatpush1.bf16.msra.mxu0 0
      %614 = vmatprep.subr.bf16.mxu0 0
      %615 = vmatpush1.bf16.msra.mxu0 0
      %616 = vmatprep.subr.bf16.mxu0 0
      %617 = vmatpush1.bf16.msra.mxu0 0
      %618 = vmatprep.subr.bf16.mxu0 0
      %619 = vmatpush1.bf16.msra.mxu0 0
      %620 = vmatprep.subr.bf16.mxu0 0
      %621 = vmatpush1.bf16.msra.mxu0 0
      %622 = vmatprep.subr.bf16.mxu0 0
      %623 = vmatpush1.bf16.msra.mxu0 0
      %624 = vmatprep.mubr.bf16.mxu0 0
      %625 = vmatmul.mubr.bf16.gmra.mrb[0].mxu0 %v535
      %v626 = vpop.f32.mrb[0].mxu0
      %v627 = vadd.f32 0.0, %v626
      %v628 = vpop.f32.mrb[0].mxu0
      %v629 = vpop.f32.mrb[0].mxu0
      %v630 = vadd.f32 0.0, %v629
      %v631 = vpop.f32.mrb[0].mxu0
      %632 = vmatprep.mubr.bf16.mxu0 0
      %633 = vmatmul.mubr.bf16.gmra.mrb[0].mxu0 %v538
      %v634 = vpop.f32.mrb[0].mxu0
      %v635 = vadd.f32 0.0, %v634
      %v636 = vpop.f32.mrb[0].mxu0
      %v637 = vpop.f32.mrb[0].mxu0
      %v638 = vadd.f32 0.0, %v637
      %v639 = vpop.f32.mrb[0].mxu0
      %640 = vmatprep.mubr.bf16.mxu0 0
      %641 = vmatmul.mubr.bf16.gmra.mrb[0].mxu0 %v541
      %v642 = vpop.f32.mrb[0].mxu0
      %v643 = vadd.f32 0.0, %v642
      %v644 = vpop.f32.mrb[0].mxu0
      %v645 = vpop.f32.mrb[0].mxu0
      %v646 = vadd.f32 0.0, %v645
      %v647 = vpop.f32.mrb[0].mxu0
      %648 = vmatprep.mubr.bf16.mxu0 0
      %649 = vmatmul.mubr.bf16.gmra.mrb[0].mxu0 %v544
      %v650 = vpop.f32.mrb[0].mxu0
      %v651 = vadd.f32 0.0, %v650
      %v652 = vpop.f32.mrb[0].mxu0
      %v653 = vpop.f32.mrb[0].mxu0
      %v654 = vadd.f32 0.0, %v653
      %v655 = vpop.f32.mrb[0].mxu0
      %656 = vmatprep.mubr.bf16.mxu0 0
      %657 = vmatmul.mubr.bf16.gmra.mrb[0].mxu0 %v547
      %v658 = vpop.f32.mrb[0].mxu0
      %v659 = vadd.f32 0.0, %v658
      %v660 = vpop.f32.mrb[0].mxu0
      %v661 = vpop.f32.mrb[0].mxu0
      %v662 = vadd.f32 0.0, %v661
      %v663 = vpop.f32.mrb[0].mxu0
      %664 = vmatprep.mubr.bf16.mxu0 0
      %665 = vmatmul.mubr.bf16.gmra.mrb[0].mxu0 %v550
      %v666 = vpop.f32.mrb[0].mxu0
      %v667 = vadd.f32 0.0, %v666
      %v668 = vpop.f32.mrb[0].mxu0
      %v669 = vpop.f32.mrb[0].mxu0
      %v670 = vadd.f32 0.0, %v669
      %v671 = vpop.f32.mrb[0].mxu0
      %672 = vmatprep.mubr.bf16.mxu0 0
      %673 = vmatmul.mubr.bf16.gmra.mrb[0].mxu0 %v553
      %v674 = vpop.f32.mrb[0].mxu0
      %v675 = vadd.f32 0.0, %v674
      %v676 = vpop.f32.mrb[0].mxu0
      %v677 = vpop.f32.mrb[0].mxu0
      %v678 = vadd.f32 0.0, %v677
      %v679 = vpop.f32.mrb[0].mxu0
      %680 = vmatprep.mubr.bf16.mxu0 0
      %681 = vmatmul.mubr.bf16.gmra.mrb[0].mxu0 %v556
      %v682 = vpop.f32.mrb[0].mxu0
      %v683 = vadd.f32 0.0, %v682
      %v684 = vpop.f32.mrb[0].mxu0
      %v685 = vpop.f32.mrb[0].mxu0
      %v686 = vadd.f32 0.0, %v685
      %v687 = vpop.f32.mrb[0].mxu0
      %688 = vmatprep.mubr.bf16.mxu0 0
      %689 = vmatmul.mubr.bf16.gmra.mrb[0].mxu0 %v559
      %v690 = vpop.f32.mrb[0].mxu0
      %v691 = vadd.f32 0.0, %v690
      %v692 = vpop.f32.mrb[0].mxu0
      %v693 = vpop.f32.mrb[0].mxu0
      %v694 = vadd.f32 0.0, %v693
      %v695 = vpop.f32.mrb[0].mxu0
      %696 = vmatprep.mubr.bf16.mxu0 0
      %697 = vmatmul.mubr.bf16.gmra.mrb[0].mxu0 %v562
      %v698 = vpop.f32.mrb[0].mxu0
      %v699 = vadd.f32 0.0, %v698
      %v700 = vpop.f32.mrb[0].mxu0
      %v701 = vpop.f32.mrb[0].mxu0
      %v702 = vadd.f32 0.0, %v701
      %v703 = vpop.f32.mrb[0].mxu0
      %704 = vmatprep.mubr.bf16.mxu0 0
      %705 = vmatmul.mubr.bf16.gmra.mrb[0].mxu0 %v565
      %v706 = vpop.f32.mrb[0].mxu0
      %v707 = vadd.f32 0.0, %v706
      %v708 = vpop.f32.mrb[0].mxu0
      %v709 = vpop.f32.mrb[0].mxu0
      %v710 = vadd.f32 0.0, %v709
      %v711 = vpop.f32.mrb[0].mxu0
      %712 = vmatprep.mubr.bf16.mxu0 0
      %713 = vmatmul.mubr.bf16.gmra.mrb[0].mxu0 %v568
      %v714 = vpop.f32.mrb[0].mxu0
      %v715 = vadd.f32 0.0, %v714
      %v716 = vpop.f32.mrb[0].mxu0
      %v717 = vpop.f32.mrb[0].mxu0
      %v718 = vadd.f32 0.0, %v717
      %v719 = vpop.f32.mrb[0].mxu0
      %720 = vmatprep.mubr.bf16.mxu0 0
      %721 = vmatmul.mubr.bf16.gmra.mrb[0].mxu0 %v571
      %v722 = vpop.f32.mrb[0].mxu0
      %v723 = vadd.f32 0.0, %v722
      %v724 = vpop.f32.mrb[0].mxu0
      %v725 = vpop.f32.mrb[0].mxu0
      %v726 = vadd.f32 0.0, %v725
      %v727 = vpop.f32.mrb[0].mxu0
      %728 = vmatprep.mubr.bf16.mxu0 0
      %729 = vmatmul.mubr.bf16.gmra.mrb[0].mxu0 %v574
      %v730 = vpop.f32.mrb[0].mxu0
      %v731 = vadd.f32 0.0, %v730
      %v732 = vpop.f32.mrb[0].mxu0
      %v733 = vpop.f32.mrb[0].mxu0
      %v734 = vadd.f32 0.0, %v733
      %v735 = vpop.f32.mrb[0].mxu0
      %736 = vmatprep.mubr.bf16.mxu0 0
      %737 = vmatmul.mubr.bf16.gmra.mrb[0].mxu0 %v577
      %v738 = vpop.f32.mrb[0].mxu0
      %v739 = vadd.f32 0.0, %v738
      %v740 = vpop.f32.mrb[0].mxu0
      %v741 = vpop.f32.mrb[0].mxu0
      %v742 = vadd.f32 0.0, %v741
      %v743 = vpop.f32.mrb[0].mxu0
      %744 = vmatprep.mubr.bf16.mxu0 0
      %745 = vmatmul.mubr.bf16.gmra.mrb[0].mxu0 %v580
      %v746 = vpop.f32.mrb[0].mxu0
      %v747 = vadd.f32 0.0, %v746
      %v748 = vpop.f32.mrb[0].mxu0
      %v749 = vpop.f32.mrb[0].mxu0
      %v750 = vadd.f32 0.0, %v749
      %v751 = vpop.f32.mrb[0].mxu0
      %752 = vmatprep.mubr.bf16.mxu0 0
      %753 = vmatmul.mubr.bf16.gmra.mrb[0].mxu0 %v583
      %v754 = vpop.f32.mrb[0].mxu0
      %v755 = vadd.f32 0.0, %v754
      %v756 = vpop.f32.mrb[0].mxu0
      %v757 = vpop.f32.mrb[0].mxu0
      %v758 = vadd.f32 0.0, %v757
      %v759 = vpop.f32.mrb[0].mxu0
      %760 = vmatprep.mubr.bf16.mxu0 0
      %761 = vmatmul.mubr.bf16.gmra.mrb[0].mxu0 %v586
      %v762 = vpop.f32.mrb[0].mxu0
      %v763 = vadd.f32 0.0, %v762
      %v764 = vpop.f32.mrb[0].mxu0
      %v765 = vpop.f32.mrb[0].mxu0
      %v766 = vadd.f32 0.0, %v765
      %v767 = vpop.f32.mrb[0].mxu0
      %768 = vdwg.mxu0
      %v769 = vsel %vm533, %v365, 0
      %v771 = vsel %vm533, %v366, 0
      %v773 = vsel %vm533, %v367, 0
      %v775 = vsel %vm533, %v368, 0
      %v777 = vsel %vm533, %v369, 0
      %v779 = vsel %vm533, %v370, 0
      %v781 = vsel %vm533, %v371, 0
      %v783 = vsel %vm533, %v372, 0
      %v785 = vsel %vm533, %v373, 0
      %v787 = vsel %vm533, %v374, 0
      %v789 = vsel %vm533, %v375, 0
      %v791 = vsel %vm533, %v376, 0
      %v793 = vsel %vm533, %v377, 0
      %v795 = vsel %vm533, %v378, 0
      %v797 = vsel %vm533, %v379, 0
      %v799 = vsel %vm533, %v380, 0
      %v801 = vsel %vm533, %v381, 0
      %v803 = vsel %vm533, %v382, 0
      %v806 = vsel %vm588, %v288, 0
      %808 = vmatprep.subr.bf16.mxu0 0
      %809 = vmatpush1.bf16.msra.mxu0 %v806
      %810 = vmatprep.subr.bf16.mxu0 0
      %811 = vmatpush1.bf16.msra.mxu0 0
      %812 = vmatprep.subr.bf16.mxu0 0
      %813 = vmatpush1.bf16.msra.mxu0 0
      %814 = vmatprep.subr.bf16.mxu0 0
      %815 = vmatpush1.bf16.msra.mxu0 0
      %816 = vmatprep.subr.bf16.mxu0 0
      %817 = vmatpush1.bf16.msra.mxu0 0
      %818 = vmatprep.subr.bf16.mxu0 0
      %819 = vmatpush1.bf16.msra.mxu0 0
      %820 = vmatprep.subr.bf16.mxu0 0
      %821 = vmatpush1.bf16.msra.mxu0 0
      %822 = vmatprep.subr.bf16.mxu0 0
      %823 = vmatpush1.bf16.msra.mxu0 0
      %824 = vmatprep.subr.bf16.mxu0 0
      %825 = vmatpush1.bf16.msra.mxu0 0
      %826 = vmatprep.subr.bf16.mxu0 0
      %827 = vmatpush1.bf16.msra.mxu0 0
      %828 = vmatprep.subr.bf16.mxu0 0
      %829 = vmatpush1.bf16.msra.mxu0 0
      %830 = vmatprep.subr.bf16.mxu0 0
      %831 = vmatpush1.bf16.msra.mxu0 0
      %832 = vmatprep.subr.bf16.mxu0 0
      %833 = vmatpush1.bf16.msra.mxu0 0
      %834 = vmatprep.subr.bf16.mxu0 0
      %835 = vmatpush1.bf16.msra.mxu0 0
      %836 = vmatprep.subr.bf16.mxu0 0
      %837 = vmatpush1.bf16.msra.mxu0 0
      %838 = vmatprep.subr.bf16.mxu0 0
      %839 = vmatpush1.bf16.msra.mxu0 0
      %840 = vmatprep.mubr.bf16.mxu0 0
      %841 = vmatmul.mubr.bf16.gmra.mrb[0].mxu0 %v769
      %v842 = vpop.f32.mrb[0].mxu0
      %v843 = vadd.f32 %v627, %v842
      %v844 = vpop.f32.mrb[0].mxu0
      %v845 = vpop.f32.mrb[0].mxu0
      %v846 = vadd.f32 %v630, %v845
      %v847 = vpop.f32.mrb[0].mxu0
      %848 = vmatprep.mubr.bf16.mxu0 0
      %849 = vmatmul.mubr.bf16.gmra.mrb[0].mxu0 %v771
      %v850 = vpop.f32.mrb[0].mxu0
      %v851 = vadd.f32 %v635, %v850
      %v852 = vpop.f32.mrb[0].mxu0
      %v853 = vpop.f32.mrb[0].mxu0
      %v854 = vadd.f32 %v638, %v853
      %v855 = vpop.f32.mrb[0].mxu0
      %856 = vmatprep.mubr.bf16.mxu0 0
      %857 = vmatmul.mubr.bf16.gmra.mrb[0].mxu0 %v773
      %v858 = vpop.f32.mrb[0].mxu0
      %v859 = vadd.f32 %v643, %v858
      %v860 = vpop.f32.mrb[0].mxu0
      %v861 = vpop.f32.mrb[0].mxu0
      %v862 = vadd.f32 %v646, %v861
      %v863 = vpop.f32.mrb[0].mxu0
      %864 = vmatprep.mubr.bf16.mxu0 0
      %865 = vmatmul.mubr.bf16.gmra.mrb[0].mxu0 %v775
      %v866 = vpop.f32.mrb[0].mxu0
      %v867 = vadd.f32 %v651, %v866
      %v868 = vpop.f32.mrb[0].mxu0
      %v869 = vpop.f32.mrb[0].mxu0
      %v870 = vadd.f32 %v654, %v869
      %v871 = vpop.f32.mrb[0].mxu0
      %872 = vmatprep.mubr.bf16.mxu0 0
      %873 = vmatmul.mubr.bf16.gmra.mrb[0].mxu0 %v777
      %v874 = vpop.f32.mrb[0].mxu0
      %v875 = vadd.f32 %v659, %v874
      %v876 = vpop.f32.mrb[0].mxu0
      %v877 = vpop.f32.mrb[0].mxu0
      %v878 = vadd.f32 %v662, %v877
      %v879 = vpop.f32.mrb[0].mxu0
      %880 = vmatprep.mubr.bf16.mxu0 0
      %881 = vmatmul.mubr.bf16.gmra.mrb[0].mxu0 %v779
      %v882 = vpop.f32.mrb[0].mxu0
      %v883 = vadd.f32 %v667, %v882
      %v884 = vpop.f32.mrb[0].mxu0
      %v885 = vpop.f32.mrb[0].mxu0
      %v886 = vadd.f32 %v670, %v885
      %v887 = vpop.f32.mrb[0].mxu0
      %888 = vmatprep.mubr.bf16.mxu0 0
      %889 = vmatmul.mubr.bf16.gmra.mrb[0].mxu0 %v781
      %v890 = vpop.f32.mrb[0].mxu0
      %v891 = vadd.f32 %v675, %v890
      %v892 = vpop.f32.mrb[0].mxu0
      %v893 = vpop.f32.mrb[0].mxu0
      %v894 = vadd.f32 %v678, %v893
      %v895 = vpop.f32.mrb[0].mxu0
      %896 = vmatprep.mubr.bf16.mxu0 0
      %897 = vmatmul.mubr.bf16.gmra.mrb[0].mxu0 %v783
      %v898 = vpop.f32.mrb[0].mxu0
      %v899 = vadd.f32 %v683, %v898
      %v900 = vpop.f32.mrb[0].mxu0
      %v901 = vpop.f32.mrb[0].mxu0
      %v902 = vadd.f32 %v686, %v901
      %v903 = vpop.f32.mrb[0].mxu0
      %904 = vmatprep.mubr.bf16.mxu0 0
      %905 = vmatmul.mubr.bf16.gmra.mrb[0].mxu0 %v785
      %v906 = vpop.f32.mrb[0].mxu0
      %v907 = vadd.f32 %v691, %v906
      %v908 = vpop.f32.mrb[0].mxu0
      %v909 = vpop.f32.mrb[0].mxu0
      %v910 = vadd.f32 %v694, %v909
      %v911 = vpop.f32.mrb[0].mxu0
      %912 = vmatprep.mubr.bf16.mxu0 0
      %913 = vmatmul.mubr.bf16.gmra.mrb[0].mxu0 %v787
      %v914 = vpop.f32.mrb[0].mxu0
      %v915 = vadd.f32 %v699, %v914
      %v916 = vpop.f32.mrb[0].mxu0
      %v917 = vpop.f32.mrb[0].mxu0
      %v918 = vadd.f32 %v702, %v917
      %v919 = vpop.f32.mrb[0].mxu0
      %920 = vmatprep.mubr.bf16.mxu0 0
      %921 = vmatmul.mubr.bf16.gmra.mrb[0].mxu0 %v789
      %v922 = vpop.f32.mrb[0].mxu0
      %v923 = vadd.f32 %v707, %v922
      %v924 = vpop.f32.mrb[0].mxu0
      %v925 = vpop.f32.mrb[0].mxu0
      %v926 = vadd.f32 %v710, %v925
      %v927 = vpop.f32.mrb[0].mxu0
      %928 = vmatprep.mubr.bf16.mxu0 0
      %929 = vmatmul.mubr.bf16.gmra.mrb[0].mxu0 %v791
      %v930 = vpop.f32.mrb[0].mxu0
      %v931 = vadd.f32 %v715, %v930
      %v932 = vpop.f32.mrb[0].mxu0
      %v933 = vpop.f32.mrb[0].mxu0
      %v934 = vadd.f32 %v718, %v933
      %v935 = vpop.f32.mrb[0].mxu0
      %936 = vmatprep.mubr.bf16.mxu0 0
      %937 = vmatmul.mubr.bf16.gmra.mrb[0].mxu0 %v793
      %v938 = vpop.f32.mrb[0].mxu0
      %v939 = vadd.f32 %v723, %v938
      %v940 = vpop.f32.mrb[0].mxu0
      %v941 = vpop.f32.mrb[0].mxu0
      %v942 = vadd.f32 %v726, %v941
      %v943 = vpop.f32.mrb[0].mxu0
      %944 = vmatprep.mubr.bf16.mxu0 0
      %945 = vmatmul.mubr.bf16.gmra.mrb[0].mxu0 %v795
      %v946 = vpop.f32.mrb[0].mxu0
      %v947 = vadd.f32 %v731, %v946
      %v948 = vpop.f32.mrb[0].mxu0
      %v949 = vpop.f32.mrb[0].mxu0
      %v950 = vadd.f32 %v734, %v949
      %v951 = vpop.f32.mrb[0].mxu0
      %952 = vmatprep.mubr.bf16.mxu0 0
      %953 = vmatmul.mubr.bf16.gmra.mrb[0].mxu0 %v797
      %v954 = vpop.f32.mrb[0].mxu0
      %v955 = vadd.f32 %v739, %v954
      %v956 = vpop.f32.mrb[0].mxu0
      %v957 = vpop.f32.mrb[0].mxu0
      %v958 = vadd.f32 %v742, %v957
      %v959 = vpop.f32.mrb[0].mxu0
      %960 = vmatprep.mubr.bf16.mxu0 0
      %961 = vmatmul.mubr.bf16.gmra.mrb[0].mxu0 %v799
      %v962 = vpop.f32.mrb[0].mxu0
      %v963 = vadd.f32 %v747, %v962
      %v964 = vpop.f32.mrb[0].mxu0
      %v965 = vpop.f32.mrb[0].mxu0
      %v966 = vadd.f32 %v750, %v965
      %v967 = vpop.f32.mrb[0].mxu0
      %968 = vmatprep.mubr.bf16.mxu0 0
      %969 = vmatmul.mubr.bf16.gmra.mrb[0].mxu0 %v801
      %v970 = vpop.f32.mrb[0].mxu0
      %v971 = vadd.f32 %v755, %v970
      %v972 = vpop.f32.mrb[0].mxu0
      %v973 = vpop.f32.mrb[0].mxu0
      %v974 = vadd.f32 %v758, %v973
      %v975 = vpop.f32.mrb[0].mxu0
      %976 = vmatprep.mubr.bf16.mxu0 0
      %977 = vmatmul.mubr.bf16.gmra.mrb[0].mxu0 %v803
      %v978 = vpop.f32.mrb[0].mxu0
      %v979 = vadd.f32 %v763, %v978
      %v980 = vpop.f32.mrb[0].mxu0
      %v981 = vpop.f32.mrb[0].mxu0
      %v982 = vadd.f32 %v766, %v981
      %v983 = vpop.f32.mrb[0].mxu0
      %984 = vdwg.mxu0
      %s985 = scalar_lea.vmem %s1, 4
      %v986 = vld [vmem:[%s985] sm:$0x3]
      %vm987 = vcmask 1046528
      %v988 = vrot.slane %v365, 1
      %v989 = vrot.slane %v366, 1
      %v990 = vsel %vm987, %v988, %v989
      %v991 = vrot.slane %v367, 1
      %v992 = vsel %vm987, %v989, %v991
      %v993 = vrot.slane %v368, 1
      %v994 = vsel %vm987, %v991, %v993
      %v995 = vrot.slane %v369, 1
      %v996 = vsel %vm987, %v993, %v995
      %v997 = vrot.slane %v370, 1
      %v998 = vsel %vm987, %v995, %v997
      %v999 = vrot.slane %v371, 1
      %v1000 = vsel %vm987, %v997, %v999
      %v1001 = vrot.slane %v372, 1
      %v1002 = vsel %vm987, %v999, %v1001
      %v1003 = vrot.slane %v373, 1
      %v1004 = vsel %vm987, %v1001, %v1003
      %v1005 = vrot.slane %v374, 1
      %v1006 = vsel %vm987, %v1003, %v1005
      %v1007 = vrot.slane %v375, 1
      %v1008 = vsel %vm987, %v1005, %v1007
      %v1009 = vrot.slane %v376, 1
      %v1010 = vsel %vm987, %v1007, %v1009
      %v1011 = vrot.slane %v377, 1
      %v1012 = vsel %vm987, %v1009, %v1011
      %v1013 = vrot.slane %v378, 1
      %v1014 = vsel %vm987, %v1011, %v1013
      %v1015 = vrot.slane %v379, 1
      %v1016 = vsel %vm987, %v1013, %v1015
      %v1017 = vrot.slane %v380, 1
      %v1018 = vsel %vm987, %v1015, %v1017
      %v1019 = vrot.slane %v381, 1
      %v1020 = vsel %vm987, %v1017, %v1019
      %v1021 = vrot.slane %v382, 1
      %v1022 = vsel %vm987, %v1019, %v1021
      %v1023 = vrot.slane %v383, 1
      %v1024 = vsel %vm987, %v1021, %v1023
      %v1026 = vsel %vm533, %v990, 0
      %v1029 = vsel %vm533, %v992, 0
      %v1032 = vsel %vm533, %v994, 0
      %v1035 = vsel %vm533, %v996, 0
      %v1038 = vsel %vm533, %v998, 0
      %v1041 = vsel %vm533, %v1000, 0
      %v1044 = vsel %vm533, %v1002, 0
      %v1047 = vsel %vm533, %v1004, 0
      %v1050 = vsel %vm533, %v1006, 0
      %v1053 = vsel %vm533, %v1008, 0
      %v1056 = vsel %vm533, %v1010, 0
      %v1059 = vsel %vm533, %v1012, 0
      %v1062 = vsel %vm533, %v1014, 0
      %v1065 = vsel %vm533, %v1016, 0
      %v1068 = vsel %vm533, %v1018, 0
      %v1071 = vsel %vm533, %v1020, 0
      %v1074 = vsel %vm533, %v1022, 0
      %v1077 = vsel %vm533, %v1024, 0
      %v1080 = vsel %vm588, %v986, 0
      %1082 = vmatprep.subr.bf16.mxu0 0
      %1083 = vmatpush1.bf16.msra.mxu0 %v1080
      %1084 = vmatprep.subr.bf16.mxu0 0
      %1085 = vmatpush1.bf16.msra.mxu0 0
      %1086 = vmatprep.subr.bf16.mxu0 0
      %1087 = vmatpush1.bf16.msra.mxu0 0
      %1088 = vmatprep.subr.bf16.mxu0 0
      %1089 = vmatpush1.bf16.msra.mxu0 0
      %1090 = vmatprep.subr.bf16.mxu0 0
      %1091 = vmatpush1.bf16.msra.mxu0 0
      %1092 = vmatprep.subr.bf16.mxu0 0
      %1093 = vmatpush1.bf16.msra.mxu0 0
      %1094 = vmatprep.subr.bf16.mxu0 0
      %1095 = vmatpush1.bf16.msra.mxu0 0
      %1096 = vmatprep.subr.bf16.mxu0 0
      %1097 = vmatpush1.bf16.msra.mxu0 0
      %1098 = vmatprep.subr.bf16.mxu0 0
      %1099 = vmatpush1.bf16.msra.mxu0 0
      %1100 = vmatprep.subr.bf16.mxu0 0
      %1101 = vmatpush1.bf16.msra.mxu0 0
      %1102 = vmatprep.subr.bf16.mxu0 0
      %1103 = vmatpush1.bf16.msra.mxu0 0
      %1104 = vmatprep.subr.bf16.mxu0 0
      %1105 = vmatpush1.bf16.msra.mxu0 0
      %1106 = vmatprep.subr.bf16.mxu0 0
      %1107 = vmatpush1.bf16.msra.mxu0 0
      %1108 = vmatprep.subr.bf16.mxu0 0
      %1109 = vmatpush1.bf16.msra.mxu0 0
      %1110 = vmatprep.subr.bf16.mxu0 0
      %1111 = vmatpush1.bf16.msra.mxu0 0
      %1112 = vmatprep.subr.bf16.mxu0 0
      %1113 = vmatpush1.bf16.msra.mxu0 0
      %1114 = vmatprep.mubr.bf16.mxu0 0
      %1115 = vmatmul.mubr.bf16.gmra.mrb[0].mxu0 %v1026
      %v1116 = vpop.f32.mrb[0].mxu0
      %v1117 = vadd.f32 0.0, %v1116
      %v1118 = vpop.f32.mrb[0].mxu0
      %v1119 = vpop.f32.mrb[0].mxu0
      %v1120 = vadd.f32 0.0, %v1119
      %v1121 = vpop.f32.mrb[0].mxu0
      %1122 = vmatprep.mubr.bf16.mxu0 0
      %1123 = vmatmul.mubr.bf16.gmra.mrb[0].mxu0 %v1029
      %v1124 = vpop.f32.mrb[0].mxu0
      %v1125 = vadd.f32 0.0, %v1124
      %v1126 = vpop.f32.mrb[0].mxu0
      %v1127 = vpop.f32.mrb[0].mxu0
      %v1128 = vadd.f32 0.0, %v1127
      %v1129 = vpop.f32.mrb[0].mxu0
      %1130 = vmatprep.mubr.bf16.mxu0 0
      %1131 = vmatmul.mubr.bf16.gmra.mrb[0].mxu0 %v1032
      %v1132 = vpop.f32.mrb[0].mxu0
      %v1133 = vadd.f32 0.0, %v1132
      %v1134 = vpop.f32.mrb[0].mxu0
      %v1135 = vpop.f32.mrb[0].mxu0
      %v1136 = vadd.f32 0.0, %v1135
      %v1137 = vpop.f32.mrb[0].mxu0
      %1138 = vmatprep.mubr.bf16.mxu0 0
      %1139 = vmatmul.mubr.bf16.gmra.mrb[0].mxu0 %v1035
      %v1140 = vpop.f32.mrb[0].mxu0
      %v1141 = vadd.f32 0.0, %v1140
      %v1142 = vpop.f32.mrb[0].mxu0
      %v1143 = vpop.f32.mrb[0].mxu0
      %v1144 = vadd.f32 0.0, %v1143
      %v1145 = vpop.f32.mrb[0].mxu0
      %1146 = vmatprep.mubr.bf16.mxu0 0
      %1147 = vmatmul.mubr.bf16.gmra.mrb[0].mxu0 %v1038
      %v1148 = vpop.f32.mrb[0].mxu0
      %v1149 = vadd.f32 0.0, %v1148
      %v1150 = vpop.f32.mrb[0].mxu0
      %v1151 = vpop.f32.mrb[0].mxu0
      %v1152 = vadd.f32 0.0, %v1151
      %v1153 = vpop.f32.mrb[0].mxu0
      %1154 = vmatprep.mubr.bf16.mxu0 0
      %1155 = vmatmul.mubr.bf16.gmra.mrb[0].mxu0 %v1041
      %v1156 = vpop.f32.mrb[0].mxu0
      %v1157 = vadd.f32 0.0, %v1156
      %v1158 = vpop.f32.mrb[0].mxu0
      %v1159 = vpop.f32.mrb[0].mxu0
      %v1160 = vadd.f32 0.0, %v1159
      %v1161 = vpop.f32.mrb[0].mxu0
      %1162 = vmatprep.mubr.bf16.mxu0 0
      %1163 = vmatmul.mubr.bf16.gmra.mrb[0].mxu0 %v1044
      %v1164 = vpop.f32.mrb[0].mxu0
      %v1165 = vadd.f32 0.0, %v1164
      %v1166 = vpop.f32.mrb[0].mxu0
      %v1167 = vpop.f32.mrb[0].mxu0
      %v1168 = vadd.f32 0.0, %v1167
      %v1169 = vpop.f32.mrb[0].mxu0
      %1170 = vmatprep.mubr.bf16.mxu0 0
      %1171 = vmatmul.mubr.bf16.gmra.mrb[0].mxu0 %v1047
      %v1172 = vpop.f32.mrb[0].mxu0
      %v1173 = vadd.f32 0.0, %v1172
      %v1174 = vpop.f32.mrb[0].mxu0
      %v1175 = vpop.f32.mrb[0].mxu0
      %v1176 = vadd.f32 0.0, %v1175
      %v1177 = vpop.f32.mrb[0].mxu0
      %1178 = vmatprep.mubr.bf16.mxu0 0
      %1179 = vmatmul.mubr.bf16.gmra.mrb[0].mxu0 %v1050
      %v1180 = vpop.f32.mrb[0].mxu0
      %v1181 = vadd.f32 0.0, %v1180
      %v1182 = vpop.f32.mrb[0].mxu0
      %v1183 = vpop.f32.mrb[0].mxu0
      %v1184 = vadd.f32 0.0, %v1183
      %v1185 = vpop.f32.mrb[0].mxu0
      %1186 = vmatprep.mubr.bf16.mxu0 0
      %1187 = vmatmul.mubr.bf16.gmra.mrb[0].mxu0 %v1053
      %v1188 = vpop.f32.mrb[0].mxu0
      %v1189 = vadd.f32 0.0, %v1188
      %v1190 = vpop.f32.mrb[0].mxu0
      %v1191 = vpop.f32.mrb[0].mxu0
      %v1192 = vadd.f32 0.0, %v1191
      %v1193 = vpop.f32.mrb[0].mxu0
      %1194 = vmatprep.mubr.bf16.mxu0 0
      %1195 = vmatmul.mubr.bf16.gmra.mrb[0].mxu0 %v1056
      %v1196 = vpop.f32.mrb[0].mxu0
      %v1197 = vadd.f32 0.0, %v1196
      %v1198 = vpop.f32.mrb[0].mxu0
      %v1199 = vpop.f32.mrb[0].mxu0
      %v1200 = vadd.f32 0.0, %v1199
      %v1201 = vpop.f32.mrb[0].mxu0
      %1202 = vmatprep.mubr.bf16.mxu0 0
      %1203 = vmatmul.mubr.bf16.gmra.mrb[0].mxu0 %v1059
      %v1204 = vpop.f32.mrb[0].mxu0
      %v1205 = vadd.f32 0.0, %v1204
      %v1206 = vpop.f32.mrb[0].mxu0
      %v1207 = vpop.f32.mrb[0].mxu0
      %v1208 = vadd.f32 0.0, %v1207
      %v1209 = vpop.f32.mrb[0].mxu0
      %1210 = vmatprep.mubr.bf16.mxu0 0
      %1211 = vmatmul.mubr.bf16.gmra.mrb[0].mxu0 %v1062
      %v1212 = vpop.f32.mrb[0].mxu0
      %v1213 = vadd.f32 0.0, %v1212
      %v1214 = vpop.f32.mrb[0].mxu0
      %v1215 = vpop.f32.mrb[0].mxu0
      %v1216 = vadd.f32 0.0, %v1215
      %v1217 = vpop.f32.mrb[0].mxu0
      %1218 = vmatprep.mubr.bf16.mxu0 0
      %1219 = vmatmul.mubr.bf16.gmra.mrb[0].mxu0 %v1065
      %v1220 = vpop.f32.mrb[0].mxu0
      %v1221 = vadd.f32 0.0, %v1220
      %v1222 = vpop.f32.mrb[0].mxu0
      %v1223 = vpop.f32.mrb[0].mxu0
      %v1224 = vadd.f32 0.0, %v1223
      %v1225 = vpop.f32.mrb[0].mxu0
      %1226 = vmatprep.mubr.bf16.mxu0 0
      %1227 = vmatmul.mubr.bf16.gmra.mrb[0].mxu0 %v1068
      %v1228 = vpop.f32.mrb[0].mxu0
      %v1229 = vadd.f32 0.0, %v1228
      %v1230 = vpop.f32.mrb[0].mxu0
      %v1231 = vpop.f32.mrb[0].mxu0
      %v1232 = vadd.f32 0.0, %v1231
      %v1233 = vpop.f32.mrb[0].mxu0
      %1234 = vmatprep.mubr.bf16.mxu0 0
      %1235 = vmatmul.mubr.bf16.gmra.mrb[0].mxu0 %v1071
      %v1236 = vpop.f32.mrb[0].mxu0
      %v1237 = vadd.f32 0.0, %v1236
      %v1238 = vpop.f32.mrb[0].mxu0
      %v1239 = vpop.f32.mrb[0].mxu0
      %v1240 = vadd.f32 0.0, %v1239
      %v1241 = vpop.f32.mrb[0].mxu0
      %1242 = vmatprep.mubr.bf16.mxu0 0
      %1243 = vmatmul.mubr.bf16.gmra.mrb[0].mxu0 %v1074
      %v1244 = vpop.f32.mrb[0].mxu0
      %v1245 = vadd.f32 0.0, %v1244
      %v1246 = vpop.f32.mrb[0].mxu0
      %v1247 = vpop.f32.mrb[0].mxu0
      %v1248 = vadd.f32 0.0, %v1247
      %v1249 = vpop.f32.mrb[0].mxu0
      %1250 = vmatprep.mubr.bf16.mxu0 0
      %1251 = vmatmul.mubr.bf16.gmra.mrb[0].mxu0 %v1077
      %v1252 = vpop.f32.mrb[0].mxu0
      %v1253 = vadd.f32 0.0, %v1252
      %v1254 = vpop.f32.mrb[0].mxu0
      %v1255 = vpop.f32.mrb[0].mxu0
      %v1256 = vadd.f32 0.0, %v1255
      %v1257 = vpop.f32.mrb[0].mxu0
      %1258 = vdwg.mxu0
      %v1259 = vadd.f32 %v843, %v1117
      %v1260 = vadd.f32 %v846, %v1120
      %v1261 = vadd.f32 %v851, %v1125
      %v1262 = vadd.f32 %v854, %v1128
      %v1263 = vadd.f32 %v859, %v1133
      %v1264 = vadd.f32 %v862, %v1136
      %v1265 = vadd.f32 %v867, %v1141
      %v1266 = vadd.f32 %v870, %v1144
      %v1267 = vadd.f32 %v875, %v1149
      %v1268 = vadd.f32 %v878, %v1152
      %v1269 = vadd.f32 %v883, %v1157
      %v1270 = vadd.f32 %v886, %v1160
      %v1271 = vadd.f32 %v891, %v1165
      %v1272 = vadd.f32 %v894, %v1168
      %v1273 = vadd.f32 %v899, %v1173
      %v1274 = vadd.f32 %v902, %v1176
      %v1275 = vadd.f32 %v907, %v1181
      %v1276 = vadd.f32 %v910, %v1184
      %v1277 = vadd.f32 %v915, %v1189
      %v1278 = vadd.f32 %v918, %v1192
      %v1279 = vadd.f32 %v923, %v1197
      %v1280 = vadd.f32 %v926, %v1200
      %v1281 = vadd.f32 %v931, %v1205
      %v1282 = vadd.f32 %v934, %v1208
      %v1283 = vadd.f32 %v939, %v1213
      %v1284 = vadd.f32 %v942, %v1216
      %v1285 = vadd.f32 %v947, %v1221
      %v1286 = vadd.f32 %v950, %v1224
      %v1287 = vadd.f32 %v955, %v1229
      %v1288 = vadd.f32 %v958, %v1232
      %v1289 = vadd.f32 %v963, %v1237
      %v1290 = vadd.f32 %v966, %v1240
      %v1291 = vadd.f32 %v971, %v1245
      %v1292 = vadd.f32 %v974, %v1248
      %v1293 = vadd.f32 %v979, %v1253
      %v1294 = vadd.f32 %v982, %v1256
      %s1295 = scalar_lea.vmem %s1, 6
      %v1296 = vld [vmem:[%s1295] sm:$0x3]
      %v1299 = vunpack.c.l.b16 %v284
      %v1300 = vunpack.c.l.b16 %v285
      %v1301 = vpack.c.b16 %v1299, %v364
      %v1302 = vpack.c.b16 %v1300, %v1300
      %v1303 = vrot.slane %v1301, 1
      %v1304 = vsel %vm987, %v1021, %v1303
      %v1305 = vrot.slane %v1302, 1
      %v1306 = vsel %vm987, %v1303, %v1305
      %v1308 = vsel %vm533, %v1304, 0
      %v1311 = vsel %vm533, %v1306, 0
      %v1314 = vsel %vm588, %v1296, 0
      %1316 = vmatprep.subr.bf16.mxu0 0
      %1317 = vmatpush1.bf16.msra.mxu0 %v1314
      %1318 = vmatprep.subr.bf16.mxu0 0
      %1319 = vmatpush1.bf16.msra.mxu0 0
      %1320 = vmatprep.subr.bf16.mxu0 0
      %1321 = vmatpush1.bf16.msra.mxu0 0
      %1322 = vmatprep.subr.bf16.mxu0 0
      %1323 = vmatpush1.bf16.msra.mxu0 0
      %1324 = vmatprep.subr.bf16.mxu0 0
      %1325 = vmatpush1.bf16.msra.mxu0 0
      %1326 = vmatprep.subr.bf16.mxu0 0
      %1327 = vmatpush1.bf16.msra.mxu0 0
      %1328 = vmatprep.subr.bf16.mxu0 0
      %1329 = vmatpush1.bf16.msra.mxu0 0
      %1330 = vmatprep.subr.bf16.mxu0 0
      %1331 = vmatpush1.bf16.msra.mxu0 0
      %1332 = vmatprep.subr.bf16.mxu0 0
      %1333 = vmatpush1.bf16.msra.mxu0 0
      %1334 = vmatprep.subr.bf16.mxu0 0
      %1335 = vmatpush1.bf16.msra.mxu0 0
      %1336 = vmatprep.subr.bf16.mxu0 0
      %1337 = vmatpush1.bf16.msra.mxu0 0
      %1338 = vmatprep.subr.bf16.mxu0 0
      %1339 = vmatpush1.bf16.msra.mxu0 0
      %1340 = vmatprep.subr.bf16.mxu0 0
      %1341 = vmatpush1.bf16.msra.mxu0 0
      %1342 = vmatprep.subr.bf16.mxu0 0
      %1343 = vmatpush1.bf16.msra.mxu0 0
      %1344 = vmatprep.subr.bf16.mxu0 0
      %1345 = vmatpush1.bf16.msra.mxu0 0
      %1346 = vmatprep.subr.bf16.mxu0 0
      %1347 = vmatpush1.bf16.msra.mxu0 0
      %1348 = vmatprep.mubr.bf16.mxu0 0
      %1349 = vmatmul.mubr.bf16.gmra.mrb[0].mxu0 %v1029
      %v1350 = vpop.f32.mrb[0].mxu0
      %v1351 = vadd.f32 0.0, %v1350
      %v1352 = vpop.f32.mrb[0].mxu0
      %v1353 = vpop.f32.mrb[0].mxu0
      %v1354 = vadd.f32 0.0, %v1353
      %v1355 = vpop.f32.mrb[0].mxu0
      %1356 = vmatprep.mubr.bf16.mxu0 0
      %1357 = vmatmul.mubr.bf16.gmra.mrb[0].mxu0 %v1032
      %v1358 = vpop.f32.mrb[0].mxu0
      %v1359 = vadd.f32 0.0, %v1358
      %v1360 = vpop.f32.mrb[0].mxu0
      %v1361 = vpop.f32.mrb[0].mxu0
      %v1362 = vadd.f32 0.0, %v1361
      %v1363 = vpop.f32.mrb[0].mxu0
      %1364 = vmatprep.mubr.bf16.mxu0 0
      %1365 = vmatmul.mubr.bf16.gmra.mrb[0].mxu0 %v1035
      %v1366 = vpop.f32.mrb[0].mxu0
      %v1367 = vadd.f32 0.0, %v1366
      %v1368 = vpop.f32.mrb[0].mxu0
      %v1369 = vpop.f32.mrb[0].mxu0
      %v1370 = vadd.f32 0.0, %v1369
      %v1371 = vpop.f32.mrb[0].mxu0
      %1372 = vmatprep.mubr.bf16.mxu0 0
      %1373 = vmatmul.mubr.bf16.gmra.mrb[0].mxu0 %v1038
      %v1374 = vpop.f32.mrb[0].mxu0
      %v1375 = vadd.f32 0.0, %v1374
      %v1376 = vpop.f32.mrb[0].mxu0
      %v1377 = vpop.f32.mrb[0].mxu0
      %v1378 = vadd.f32 0.0, %v1377
      %v1379 = vpop.f32.mrb[0].mxu0
      %1380 = vmatprep.mubr.bf16.mxu0 0
      %1381 = vmatmul.mubr.bf16.gmra.mrb[0].mxu0 %v1041
      %v1382 = vpop.f32.mrb[0].mxu0
      %v1383 = vadd.f32 0.0, %v1382
      %v1384 = vpop.f32.mrb[0].mxu0
      %v1385 = vpop.f32.mrb[0].mxu0
      %v1386 = vadd.f32 0.0, %v1385
      %v1387 = vpop.f32.mrb[0].mxu0
      %1388 = vmatprep.mubr.bf16.mxu0 0
      %1389 = vmatmul.mubr.bf16.gmra.mrb[0].mxu0 %v1044
      %v1390 = vpop.f32.mrb[0].mxu0
      %v1391 = vadd.f32 0.0, %v1390
      %v1392 = vpop.f32.mrb[0].mxu0
      %v1393 = vpop.f32.mrb[0].mxu0
      %v1394 = vadd.f32 0.0, %v1393
      %v1395 = vpop.f32.mrb[0].mxu0
      %1396 = vmatprep.mubr.bf16.mxu0 0
      %1397 = vmatmul.mubr.bf16.gmra.mrb[0].mxu0 %v1047
      %v1398 = vpop.f32.mrb[0].mxu0
      %v1399 = vadd.f32 0.0, %v1398
      %v1400 = vpop.f32.mrb[0].mxu0
      %v1401 = vpop.f32.mrb[0].mxu0
      %v1402 = vadd.f32 0.0, %v1401
      %v1403 = vpop.f32.mrb[0].mxu0
      %1404 = vmatprep.mubr.bf16.mxu0 0
      %1405 = vmatmul.mubr.bf16.gmra.mrb[0].mxu0 %v1050
      %v1406 = vpop.f32.mrb[0].mxu0
      %v1407 = vadd.f32 0.0, %v1406
      %v1408 = vpop.f32.mrb[0].mxu0
      %v1409 = vpop.f32.mrb[0].mxu0
      %v1410 = vadd.f32 0.0, %v1409
      %v1411 = vpop.f32.mrb[0].mxu0
      %1412 = vmatprep.mubr.bf16.mxu0 0
      %1413 = vmatmul.mubr.bf16.gmra.mrb[0].mxu0 %v1053
      %v1414 = vpop.f32.mrb[0].mxu0
      %v1415 = vadd.f32 0.0, %v1414
      %v1416 = vpop.f32.mrb[0].mxu0
      %v1417 = vpop.f32.mrb[0].mxu0
      %v1418 = vadd.f32 0.0, %v1417
      %v1419 = vpop.f32.mrb[0].mxu0
      %1420 = vmatprep.mubr.bf16.mxu0 0
      %1421 = vmatmul.mubr.bf16.gmra.mrb[0].mxu0 %v1056
      %v1422 = vpop.f32.mrb[0].mxu0
      %v1423 = vadd.f32 0.0, %v1422
      %v1424 = vpop.f32.mrb[0].mxu0
      %v1425 = vpop.f32.mrb[0].mxu0
      %v1426 = vadd.f32 0.0, %v1425
      %v1427 = vpop.f32.mrb[0].mxu0
      %1428 = vmatprep.mubr.bf16.mxu0 0
      %1429 = vmatmul.mubr.bf16.gmra.mrb[0].mxu0 %v1059
      %v1430 = vpop.f32.mrb[0].mxu0
      %v1431 = vadd.f32 0.0, %v1430
      %v1432 = vpop.f32.mrb[0].mxu0
      %v1433 = vpop.f32.mrb[0].mxu0
      %v1434 = vadd.f32 0.0, %v1433
      %v1435 = vpop.f32.mrb[0].mxu0
      %1436 = vmatprep.mubr.bf16.mxu0 0
      %1437 = vmatmul.mubr.bf16.gmra.mrb[0].mxu0 %v1062
      %v1438 = vpop.f32.mrb[0].mxu0
      %v1439 = vadd.f32 0.0, %v1438
      %v1440 = vpop.f32.mrb[0].mxu0
      %v1441 = vpop.f32.mrb[0].mxu0
      %v1442 = vadd.f32 0.0, %v1441
      %v1443 = vpop.f32.mrb[0].mxu0
      %1444 = vmatprep.mubr.bf16.mxu0 0
      %1445 = vmatmul.mubr.bf16.gmra.mrb[0].mxu0 %v1065
      %v1446 = vpop.f32.mrb[0].mxu0
      %v1447 = vadd.f32 0.0, %v1446
      %v1448 = vpop.f32.mrb[0].mxu0
      %v1449 = vpop.f32.mrb[0].mxu0
      %v1450 = vadd.f32 0.0, %v1449
      %v1451 = vpop.f32.mrb[0].mxu0
      %1452 = vmatprep.mubr.bf16.mxu0 0
      %1453 = vmatmul.mubr.bf16.gmra.mrb[0].mxu0 %v1068
      %v1454 = vpop.f32.mrb[0].mxu0
      %v1455 = vadd.f32 0.0, %v1454
      %v1456 = vpop.f32.mrb[0].mxu0
      %v1457 = vpop.f32.mrb[0].mxu0
      %v1458 = vadd.f32 0.0, %v1457
      %v1459 = vpop.f32.mrb[0].mxu0
      %1460 = vmatprep.mubr.bf16.mxu0 0
      %1461 = vmatmul.mubr.bf16.gmra.mrb[0].mxu0 %v1071
      %v1462 = vpop.f32.mrb[0].mxu0
      %v1463 = vadd.f32 0.0, %v1462
      %v1464 = vpop.f32.mrb[0].mxu0
      %v1465 = vpop.f32.mrb[0].mxu0
      %v1466 = vadd.f32 0.0, %v1465
      %v1467 = vpop.f32.mrb[0].mxu0
      %1468 = vmatprep.mubr.bf16.mxu0 0
      %1469 = vmatmul.mubr.bf16.gmra.mrb[0].mxu0 %v1074
      %v1470 = vpop.f32.mrb[0].mxu0
      %v1471 = vadd.f32 0.0, %v1470
      %v1472 = vpop.f32.mrb[0].mxu0
      %v1473 = vpop.f32.mrb[0].mxu0
      %v1474 = vadd.f32 0.0, %v1473
      %v1475 = vpop.f32.mrb[0].mxu0
      %1476 = vmatprep.mubr.bf16.mxu0 0
      %1477 = vmatmul.mubr.bf16.gmra.mrb[0].mxu0 %v1308
      %v1478 = vpop.f32.mrb[0].mxu0
      %v1479 = vadd.f32 0.0, %v1478
      %v1480 = vpop.f32.mrb[0].mxu0
      %v1481 = vpop.f32.mrb[0].mxu0
      %v1482 = vadd.f32 0.0, %v1481
      %v1483 = vpop.f32.mrb[0].mxu0
      %1484 = vmatprep.mubr.bf16.mxu0 0
      %1485 = vmatmul.mubr.bf16.gmra.mrb[0].mxu0 %v1311
      %v1486 = vpop.f32.mrb[0].mxu0
      %v1487 = vadd.f32 0.0, %v1486
      %v1488 = vpop.f32.mrb[0].mxu0
      %v1489 = vpop.f32.mrb[0].mxu0
      %v1490 = vadd.f32 0.0, %v1489
      %v1491 = vpop.f32.mrb[0].mxu0
      %1492 = vdwg.mxu0
      %v1493 = vadd.f32 %v1259, %v1351
      %v1494 = vadd.f32 %v1260, %v1354
      %v1495 = vadd.f32 %v1261, %v1359
      %v1496 = vadd.f32 %v1262, %v1362
      %v1497 = vadd.f32 %v1263, %v1367
      %v1498 = vadd.f32 %v1264, %v1370
      %v1499 = vadd.f32 %v1265, %v1375
      %v1500 = vadd.f32 %v1266, %v1378
      %v1501 = vadd.f32 %v1267, %v1383
      %v1502 = vadd.f32 %v1268, %v1386
      %v1503 = vadd.f32 %v1269, %v1391
      %v1504 = vadd.f32 %v1270, %v1394
      %v1505 = vadd.f32 %v1271, %v1399
      %v1506 = vadd.f32 %v1272, %v1402
      %v1507 = vadd.f32 %v1273, %v1407
      %v1508 = vadd.f32 %v1274, %v1410
      %v1509 = vadd.f32 %v1275, %v1415
      %v1510 = vadd.f32 %v1276, %v1418
      %v1511 = vadd.f32 %v1277, %v1423
      %v1512 = vadd.f32 %v1278, %v1426
      %v1513 = vadd.f32 %v1279, %v1431
      %v1514 = vadd.f32 %v1280, %v1434
      %v1515 = vadd.f32 %v1281, %v1439
      %v1516 = vadd.f32 %v1282, %v1442
      %v1517 = vadd.f32 %v1283, %v1447
      %v1518 = vadd.f32 %v1284, %v1450
      %v1519 = vadd.f32 %v1285, %v1455
      %v1520 = vadd.f32 %v1286, %v1458
      %v1521 = vadd.f32 %v1287, %v1463
      %v1522 = vadd.f32 %v1288, %v1466
      %v1523 = vadd.f32 %v1289, %v1471
      %v1524 = vadd.f32 %v1290, %v1474
      %v1525 = vadd.f32 %v1291, %v1479
      %v1526 = vadd.f32 %v1292, %v1482
      %v1527 = vadd.f32 %v1293, %v1487
      %v1528 = vadd.f32 %v1294, %v1490
      %s1529 = scalar_lea.vmem %s1, 8
      %v1530 = vld [vmem:[%s1529] sm:$0x3]
      %vm1531 = vsmask.f32 6400
      %v1532 = vrot.slane %v397, 1
      %v1533 = vrot.slane %v393, 2
      %v1534 = vor.u32 %v1532, %v1533
      %v1535 = vrot.slane %v405, 1
      %v1536 = vrot.slane %v401, 2
      %v1537 = vor.u32 %v1535, %v1536
      %v1538 = vsel %vm1531, %v1534, %v1537
      %v1539 = vrot.slane %v413, 1
      %v1540 = vrot.slane %v409, 2
      %v1541 = vor.u32 %v1539, %v1540
      %v1542 = vsel %vm1531, %v1537, %v1541
      %v1543 = vrot.slane %v421, 1
      %v1544 = vrot.slane %v417, 2
      %v1545 = vor.u32 %v1543, %v1544
      %v1546 = vsel %vm1531, %v1541, %v1545
      %v1547 = vrot.slane %v429, 1
      %v1548 = vrot.slane %v425, 2
      %v1549 = vor.u32 %v1547, %v1548
      %v1550 = vsel %vm1531, %v1545, %v1549
      %v1551 = vrot.slane %v437, 1
      %v1552 = vrot.slane %v433, 2
      %v1553 = vor.u32 %v1551, %v1552
      %v1554 = vsel %vm1531, %v1549, %v1553
      %v1555 = vrot.slane %v445, 1
      %v1556 = vrot.slane %v441, 2
      %v1557 = vor.u32 %v1555, %v1556
      %v1558 = vsel %vm1531, %v1553, %v1557
      %v1559 = vrot.slane %v453, 1
      %v1560 = vrot.slane %v449, 2
      %v1561 = vor.u32 %v1559, %v1560
      %v1562 = vsel %vm1531, %v1557, %v1561
      %v1563 = vrot.slane %v461, 1
      %v1564 = vrot.slane %v457, 2
      %v1565 = vor.u32 %v1563, %v1564
      %v1566 = vsel %vm1531, %v1561, %v1565
      %v1567 = vrot.slane %v469, 1
      %v1568 = vrot.slane %v465, 2
      %v1569 = vor.u32 %v1567, %v1568
      %v1570 = vsel %vm1531, %v1565, %v1569
      %v1571 = vrot.slane %v477, 1
      %v1572 = vrot.slane %v473, 2
      %v1573 = vor.u32 %v1571, %v1572
      %v1574 = vsel %vm1531, %v1569, %v1573
      %v1575 = vrot.slane %v485, 1
      %v1576 = vrot.slane %v481, 2
      %v1577 = vor.u32 %v1575, %v1576
      %v1578 = vsel %vm1531, %v1573, %v1577
      %v1579 = vrot.slane %v493, 1
      %v1580 = vrot.slane %v489, 2
      %v1581 = vor.u32 %v1579, %v1580
      %v1582 = vsel %vm1531, %v1577, %v1581
      %v1583 = vrot.slane %v501, 1
      %v1584 = vrot.slane %v497, 2
      %v1585 = vor.u32 %v1583, %v1584
      %v1586 = vsel %vm1531, %v1581, %v1585
      %v1587 = vrot.slane %v509, 1
      %v1588 = vrot.slane %v505, 2
      %v1589 = vor.u32 %v1587, %v1588
      %v1590 = vsel %vm1531, %v1585, %v1589
      %v1591 = vrot.slane %v517, 1
      %v1592 = vrot.slane %v513, 2
      %v1593 = vor.u32 %v1591, %v1592
      %v1594 = vsel %vm1531, %v1589, %v1593
      %v1595 = vrot.slane %v525, 1
      %v1596 = vrot.slane %v521, 2
      %v1597 = vor.u32 %v1595, %v1596
      %v1598 = vsel %vm1531, %v1593, %v1597
      %v1600 = vshrl.u32 %v1301, 16
      %v1602 = vrot.slane %v1600, 1
      %v1603 = vshll.u32 %v1301, 16
      %v1605 = vrot.slane %v1603, 2
      %v1606 = vor.u32 %v1602, %v1605
      %v1607 = vsel %vm1531, %v1597, %v1606
      %v1609 = vshrl.u32 %v1302, 16
      %v1611 = vrot.slane %v1609, 1
      %v1612 = vshll.u32 %v1302, 16
      %v1614 = vrot.slane %v1612, 2
      %v1615 = vor.u32 %v1611, %v1614
      %v1616 = vsel %vm1531, %v1606, %v1615
      %v1618 = vsel %vm533, %v1538, 0
      %v1621 = vsel %vm533, %v1542, 0
      %v1624 = vsel %vm533, %v1546, 0
      %v1627 = vsel %vm533, %v1550, 0
      %v1630 = vsel %vm533, %v1554, 0
      %v1633 = vsel %vm533, %v1558, 0
      %v1636 = vsel %vm533, %v1562, 0
      %v1639 = vsel %vm533, %v1566, 0
      %v1642 = vsel %vm533, %v1570, 0
      %v1645 = vsel %vm533, %v1574, 0
      %v1648 = vsel %vm533, %v1578, 0
      %v1651 = vsel %vm533, %v1582, 0
      %v1654 = vsel %vm533, %v1586, 0
      %v1657 = vsel %vm533, %v1590, 0
      %v1660 = vsel %vm533, %v1594, 0
      %v1663 = vsel %vm533, %v1598, 0
      %v1666 = vsel %vm533, %v1607, 0
      %v1669 = vsel %vm533, %v1616, 0
      %v1672 = vsel %vm588, %v1530, 0
      %1674 = vmatprep.subr.bf16.mxu0 0
      %1675 = vmatpush1.bf16.msra.mxu0 %v1672
      %1676 = vmatprep.subr.bf16.mxu0 0
      %1677 = vmatpush1.bf16.msra.mxu0 0
      %1678 = vmatprep.subr.bf16.mxu0 0
      %1679 = vmatpush1.bf16.msra.mxu0 0
      %1680 = vmatprep.subr.bf16.mxu0 0
      %1681 = vmatpush1.bf16.msra.mxu0 0
      %1682 = vmatprep.subr.bf16.mxu0 0
      %1683 = vmatpush1.bf16.msra.mxu0 0
      %1684 = vmatprep.subr.bf16.mxu0 0
      %1685 = vmatpush1.bf16.msra.mxu0 0
      %1686 = vmatprep.subr.bf16.mxu0 0
      %1687 = vmatpush1.bf16.msra.mxu0 0
      %1688 = vmatprep.subr.bf16.mxu0 0
      %1689 = vmatpush1.bf16.msra.mxu0 0
      %1690 = vmatprep.subr.bf16.mxu0 0
      %1691 = vmatpush1.bf16.msra.mxu0 0
      %1692 = vmatprep.subr.bf16.mxu0 0
      %1693 = vmatpush1.bf16.msra.mxu0 0
      %1694 = vmatprep.subr.bf16.mxu0 0
      %1695 = vmatpush1.bf16.msra.mxu0 0
      %1696 = vmatprep.subr.bf16.mxu0 0
      %1697 = vmatpush1.bf16.msra.mxu0 0
      %1698 = vmatprep.subr.bf16.mxu0 0
      %1699 = vmatpush1.bf16.msra.mxu0 0
      %1700 = vmatprep.subr.bf16.mxu0 0
      %1701 = vmatpush1.bf16.msra.mxu0 0
      %1702 = vmatprep.subr.bf16.mxu0 0
      %1703 = vmatpush1.bf16.msra.mxu0 0
      %1704 = vmatprep.subr.bf16.mxu0 0
      %1705 = vmatpush1.bf16.msra.mxu0 0
      %1706 = vmatprep.mubr.bf16.mxu0 0
      %1707 = vmatmul.mubr.bf16.gmra.mrb[0].mxu0 %v1618
      %v1708 = vpop.f32.mrb[0].mxu0
      %v1709 = vadd.f32 0.0, %v1708
      %v1710 = vpop.f32.mrb[0].mxu0
      %v1711 = vpop.f32.mrb[0].mxu0
      %v1712 = vadd.f32 0.0, %v1711
      %v1713 = vpop.f32.mrb[0].mxu0
      %1714 = vmatprep.mubr.bf16.mxu0 0
      %1715 = vmatmul.mubr.bf16.gmra.mrb[0].mxu0 %v1621
      %v1716 = vpop.f32.mrb[0].mxu0
      %v1717 = vadd.f32 0.0, %v1716
      %v1718 = vpop.f32.mrb[0].mxu0
      %v1719 = vpop.f32.mrb[0].mxu0
      %v1720 = vadd.f32 0.0, %v1719
      %v1721 = vpop.f32.mrb[0].mxu0
      %1722 = vmatprep.mubr.bf16.mxu0 0
      %1723 = vmatmul.mubr.bf16.gmra.mrb[0].mxu0 %v1624
      %v1724 = vpop.f32.mrb[0].mxu0
      %v1725 = vadd.f32 0.0, %v1724
      %v1726 = vpop.f32.mrb[0].mxu0
      %v1727 = vpop.f32.mrb[0].mxu0
      %v1728 = vadd.f32 0.0, %v1727
      %v1729 = vpop.f32.mrb[0].mxu0
      %1730 = vmatprep.mubr.bf16.mxu0 0
      %1731 = vmatmul.mubr.bf16.gmra.mrb[0].mxu0 %v1627
      %v1732 = vpop.f32.mrb[0].mxu0
      %v1733 = vadd.f32 0.0, %v1732
      %v1734 = vpop.f32.mrb[0].mxu0
      %v1735 = vpop.f32.mrb[0].mxu0
      %v1736 = vadd.f32 0.0, %v1735
      %v1737 = vpop.f32.mrb[0].mxu0
      %1738 = vmatprep.mubr.bf16.mxu0 0
      %1739 = vmatmul.mubr.bf16.gmra.mrb[0].mxu0 %v1630
      %v1740 = vpop.f32.mrb[0].mxu0
      %v1741 = vadd.f32 0.0, %v1740
      %v1742 = vpop.f32.mrb[0].mxu0
      %v1743 = vpop.f32.mrb[0].mxu0
      %v1744 = vadd.f32 0.0, %v1743
      %v1745 = vpop.f32.mrb[0].mxu0
      %1746 = vmatprep.mubr.bf16.mxu0 0
      %1747 = vmatmul.mubr.bf16.gmra.mrb[0].mxu0 %v1633
      %v1748 = vpop.f32.mrb[0].mxu0
      %v1749 = vadd.f32 0.0, %v1748
      %v1750 = vpop.f32.mrb[0].mxu0
      %v1751 = vpop.f32.mrb[0].mxu0
      %v1752 = vadd.f32 0.0, %v1751
      %v1753 = vpop.f32.mrb[0].mxu0
      %1754 = vmatprep.mubr.bf16.mxu0 0
      %1755 = vmatmul.mubr.bf16.gmra.mrb[0].mxu0 %v1636
      %v1756 = vpop.f32.mrb[0].mxu0
      %v1757 = vadd.f32 0.0, %v1756
      %v1758 = vpop.f32.mrb[0].mxu0
      %v1759 = vpop.f32.mrb[0].mxu0
      %v1760 = vadd.f32 0.0, %v1759
      %v1761 = vpop.f32.mrb[0].mxu0
      %1762 = vmatprep.mubr.bf16.mxu0 0
      %1763 = vmatmul.mubr.bf16.gmra.mrb[0].mxu0 %v1639
      %v1764 = vpop.f32.mrb[0].mxu0
      %v1765 = vadd.f32 0.0, %v1764
      %v1766 = vpop.f32.mrb[0].mxu0
      %v1767 = vpop.f32.mrb[0].mxu0
      %v1768 = vadd.f32 0.0, %v1767
      %v1769 = vpop.f32.mrb[0].mxu0
      %1770 = vmatprep.mubr.bf16.mxu0 0
      %1771 = vmatmul.mubr.bf16.gmra.mrb[0].mxu0 %v1642
      %v1772 = vpop.f32.mrb[0].mxu0
      %v1773 = vadd.f32 0.0, %v1772
      %v1774 = vpop.f32.mrb[0].mxu0
      %v1775 = vpop.f32.mrb[0].mxu0
      %v1776 = vadd.f32 0.0, %v1775
      %v1777 = vpop.f32.mrb[0].mxu0
      %1778 = vmatprep.mubr.bf16.mxu0 0
      %1779 = vmatmul.mubr.bf16.gmra.mrb[0].mxu0 %v1645
      %v1780 = vpop.f32.mrb[0].mxu0
      %v1781 = vadd.f32 0.0, %v1780
      %v1782 = vpop.f32.mrb[0].mxu0
      %v1783 = vpop.f32.mrb[0].mxu0
      %v1784 = vadd.f32 0.0, %v1783
      %v1785 = vpop.f32.mrb[0].mxu0
      %1786 = vmatprep.mubr.bf16.mxu0 0
      %1787 = vmatmul.mubr.bf16.gmra.mrb[0].mxu0 %v1648
      %v1788 = vpop.f32.mrb[0].mxu0
      %v1789 = vadd.f32 0.0, %v1788
      %v1790 = vpop.f32.mrb[0].mxu0
      %v1791 = vpop.f32.mrb[0].mxu0
      %v1792 = vadd.f32 0.0, %v1791
      %v1793 = vpop.f32.mrb[0].mxu0
      %1794 = vmatprep.mubr.bf16.mxu0 0
      %1795 = vmatmul.mubr.bf16.gmra.mrb[0].mxu0 %v1651
      %v1796 = vpop.f32.mrb[0].mxu0
      %v1797 = vadd.f32 0.0, %v1796
      %v1798 = vpop.f32.mrb[0].mxu0
      %v1799 = vpop.f32.mrb[0].mxu0
      %v1800 = vadd.f32 0.0, %v1799
      %v1801 = vpop.f32.mrb[0].mxu0
      %1802 = vmatprep.mubr.bf16.mxu0 0
      %1803 = vmatmul.mubr.bf16.gmra.mrb[0].mxu0 %v1654
      %v1804 = vpop.f32.mrb[0].mxu0
      %v1805 = vadd.f32 0.0, %v1804
      %v1806 = vpop.f32.mrb[0].mxu0
      %v1807 = vpop.f32.mrb[0].mxu0
      %v1808 = vadd.f32 0.0, %v1807
      %v1809 = vpop.f32.mrb[0].mxu0
      %1810 = vmatprep.mubr.bf16.mxu0 0
      %1811 = vmatmul.mubr.bf16.gmra.mrb[0].mxu0 %v1657
      %v1812 = vpop.f32.mrb[0].mxu0
      %v1813 = vadd.f32 0.0, %v1812
      %v1814 = vpop.f32.mrb[0].mxu0
      %v1815 = vpop.f32.mrb[0].mxu0
      %v1816 = vadd.f32 0.0, %v1815
      %v1817 = vpop.f32.mrb[0].mxu0
      %1818 = vmatprep.mubr.bf16.mxu0 0
      %1819 = vmatmul.mubr.bf16.gmra.mrb[0].mxu0 %v1660
      %v1820 = vpop.f32.mrb[0].mxu0
      %v1821 = vadd.f32 0.0, %v1820
      %v1822 = vpop.f32.mrb[0].mxu0
      %v1823 = vpop.f32.mrb[0].mxu0
      %v1824 = vadd.f32 0.0, %v1823
      %v1825 = vpop.f32.mrb[0].mxu0
      %1826 = vmatprep.mubr.bf16.mxu0 0
      %1827 = vmatmul.mubr.bf16.gmra.mrb[0].mxu0 %v1663
      %v1828 = vpop.f32.mrb[0].mxu0
      %v1829 = vadd.f32 0.0, %v1828
      %v1830 = vpop.f32.mrb[0].mxu0
      %v1831 = vpop.f32.mrb[0].mxu0
      %v1832 = vadd.f32 0.0, %v1831
      %v1833 = vpop.f32.mrb[0].mxu0
      %1834 = vmatprep.mubr.bf16.mxu0 0
      %1835 = vmatmul.mubr.bf16.gmra.mrb[0].mxu0 %v1666
      %v1836 = vpop.f32.mrb[0].mxu0
      %v1837 = vadd.f32 0.0, %v1836
      %v1838 = vpop.f32.mrb[0].mxu0
      %v1839 = vpop.f32.mrb[0].mxu0
      %v1840 = vadd.f32 0.0, %v1839
      %v1841 = vpop.f32.mrb[0].mxu0
      %1842 = vmatprep.mubr.bf16.mxu0 0
      %1843 = vmatmul.mubr.bf16.gmra.mrb[0].mxu0 %v1669
      %v1844 = vpop.f32.mrb[0].mxu0
      %v1845 = vadd.f32 0.0, %v1844
      %v1846 = vpop.f32.mrb[0].mxu0
      %v1847 = vpop.f32.mrb[0].mxu0
      %v1848 = vadd.f32 0.0, %v1847
      %v1849 = vpop.f32.mrb[0].mxu0
      %1850 = vdwg.mxu0
      %v1851 = vadd.f32 %v1493, %v1709
      %v1852 = vadd.f32 %v1494, %v1712
      %v1853 = vadd.f32 %v1495, %v1717
      %v1854 = vadd.f32 %v1496, %v1720
      %v1855 = vadd.f32 %v1497, %v1725
      %v1856 = vadd.f32 %v1498, %v1728
      %v1857 = vadd.f32 %v1499, %v1733
      %v1858 = vadd.f32 %v1500, %v1736
      %v1859 = vadd.f32 %v1501, %v1741
      %v1860 = vadd.f32 %v1502, %v1744
      %v1861 = vadd.f32 %v1503, %v1749
      %v1862 = vadd.f32 %v1504, %v1752
      %v1863 = vadd.f32 %v1505, %v1757
      %v1864 = vadd.f32 %v1506, %v1760
      %v1865 = vadd.f32 %v1507, %v1765
      %v1866 = vadd.f32 %v1508, %v1768
      %v1867 = vadd.f32 %v1509, %v1773
      %v1868 = vadd.f32 %v1510, %v1776
      %v1869 = vadd.f32 %v1511, %v1781
      %v1870 = vadd.f32 %v1512, %v1784
      %v1871 = vadd.f32 %v1513, %v1789
      %v1872 = vadd.f32 %v1514, %v1792
      %v1873 = vadd.f32 %v1515, %v1797
      %v1874 = vadd.f32 %v1516, %v1800
      %v1875 = vadd.f32 %v1517, %v1805
      %v1876 = vadd.f32 %v1518, %v1808
      %v1877 = vadd.f32 %v1519, %v1813
      %v1878 = vadd.f32 %v1520, %v1816
      %v1879 = vadd.f32 %v1521, %v1821
      %v1880 = vadd.f32 %v1522, %v1824
      %v1881 = vadd.f32 %v1523, %v1829
      %v1882 = vadd.f32 %v1524, %v1832
      %v1883 = vadd.f32 %v1525, %v1837
      %v1884 = vadd.f32 %v1526, %v1840
      %v1885 = vadd.f32 %v1527, %v1845
      %v1886 = vadd.f32 %v1528, %v1848
      %s1887 = scalar_lea.vmem %s1, 10
      %v1888 = vld [vmem:[%s1887] sm:$0x3]
      %vm1889 = vcmask 1045504
      %v1890 = vrot.slane %v366, 2
      %v1891 = vrot.slane %v367, 2
      %v1892 = vsel %vm1889, %v1890, %v1891
      %v1893 = vrot.slane %v368, 2
      %v1894 = vsel %vm1889, %v1891, %v1893
      %v1895 = vrot.slane %v369, 2
      %v1896 = vsel %vm1889, %v1893, %v1895
      %v1897 = vrot.slane %v370, 2
      %v1898 = vsel %vm1889, %v1895, %v1897
      %v1899 = vrot.slane %v371, 2
      %v1900 = vsel %vm1889, %v1897, %v1899
      %v1901 = vrot.slane %v372, 2
      %v1902 = vsel %vm1889, %v1899, %v1901
      %v1903 = vrot.slane %v373, 2
      %v1904 = vsel %vm1889, %v1901, %v1903
      %v1905 = vrot.slane %v374, 2
      %v1906 = vsel %vm1889, %v1903, %v1905
      %v1907 = vrot.slane %v375, 2
      %v1908 = vsel %vm1889, %v1905, %v1907
      %v1909 = vrot.slane %v376, 2
      %v1910 = vsel %vm1889, %v1907, %v1909
      %v1911 = vrot.slane %v377, 2
      %v1912 = vsel %vm1889, %v1909, %v1911
      %v1913 = vrot.slane %v378, 2
      %v1914 = vsel %vm1889, %v1911, %v1913
      %v1915 = vrot.slane %v379, 2
      %v1916 = vsel %vm1889, %v1913, %v1915
      %v1917 = vrot.slane %v380, 2
      %v1918 = vsel %vm1889, %v1915, %v1917
      %v1919 = vrot.slane %v381, 2
      %v1920 = vsel %vm1889, %v1917, %v1919
      %v1921 = vrot.slane %v382, 2
      %v1922 = vsel %vm1889, %v1919, %v1921
      %v1923 = vrot.slane %v1301, 2
      %v1924 = vsel %vm1889, %v1921, %v1923
      %v1925 = vrot.slane %v1302, 2
      %v1926 = vsel %vm1889, %v1923, %v1925
      %v1928 = vsel %vm533, %v1892, 0
      %v1931 = vsel %vm533, %v1894, 0
      %v1934 = vsel %vm533, %v1896, 0
      %v1937 = vsel %vm533, %v1898, 0
      %v1940 = vsel %vm533, %v1900, 0
      %v1943 = vsel %vm533, %v1902, 0
      %v1946 = vsel %vm533, %v1904, 0
      %v1949 = vsel %vm533, %v1906, 0
      %v1952 = vsel %vm533, %v1908, 0
      %v1955 = vsel %vm533, %v1910, 0
      %v1958 = vsel %vm533, %v1912, 0
      %v1961 = vsel %vm533, %v1914, 0
      %v1964 = vsel %vm533, %v1916, 0
      %v1967 = vsel %vm533, %v1918, 0
      %v1970 = vsel %vm533, %v1920, 0
      %v1973 = vsel %vm533, %v1922, 0
      %v1976 = vsel %vm533, %v1924, 0
      %v1979 = vsel %vm533, %v1926, 0
      %v1982 = vsel %vm588, %v1888, 0
      %1984 = vmatprep.subr.bf16.mxu0 0
      %1985 = vmatpush1.bf16.msra.mxu0 %v1982
      %1986 = vmatprep.subr.bf16.mxu0 0
      %1987 = vmatpush1.bf16.msra.mxu0 0
      %1988 = vmatprep.subr.bf16.mxu0 0
      %1989 = vmatpush1.bf16.msra.mxu0 0
      %1990 = vmatprep.subr.bf16.mxu0 0
      %1991 = vmatpush1.bf16.msra.mxu0 0
      %1992 = vmatprep.subr.bf16.mxu0 0
      %1993 = vmatpush1.bf16.msra.mxu0 0
      %1994 = vmatprep.subr.bf16.mxu0 0
      %1995 = vmatpush1.bf16.msra.mxu0 0
      %1996 = vmatprep.subr.bf16.mxu0 0
      %1997 = vmatpush1.bf16.msra.mxu0 0
      %1998 = vmatprep.subr.bf16.mxu0 0
      %1999 = vmatpush1.bf16.msra.mxu0 0
      %2000 = vmatprep.subr.bf16.mxu0 0
      %2001 = vmatpush1.bf16.msra.mxu0 0
      %2002 = vmatprep.subr.bf16.mxu0 0
      %2003 = vmatpush1.bf16.msra.mxu0 0
      %2004 = vmatprep.subr.bf16.mxu0 0
      %2005 = vmatpush1.bf16.msra.mxu0 0
      %2006 = vmatprep.subr.bf16.mxu0 0
      %2007 = vmatpush1.bf16.msra.mxu0 0
      %2008 = vmatprep.subr.bf16.mxu0 0
      %2009 = vmatpush1.bf16.msra.mxu0 0
      %2010 = vmatprep.subr.bf16.mxu0 0
      %2011 = vmatpush1.bf16.msra.mxu0 0
      %2012 = vmatprep.subr.bf16.mxu0 0
      %2013 = vmatpush1.bf16.msra.mxu0 0
      %2014 = vmatprep.subr.bf16.mxu0 0
      %2015 = vmatpush1.bf16.msra.mxu0 0
      %2016 = vmatprep.mubr.bf16.mxu0 0
      %2017 = vmatmul.mubr.bf16.gmra.mrb[0].mxu0 %v1928
      %v2018 = vpop.f32.mrb[0].mxu0
      %v2019 = vadd.f32 0.0, %v2018
      %v2020 = vpop.f32.mrb[0].mxu0
      %v2021 = vpop.f32.mrb[0].mxu0
      %v2022 = vadd.f32 0.0, %v2021
      %v2023 = vpop.f32.mrb[0].mxu0
      %2024 = vmatprep.mubr.bf16.mxu0 0
      %2025 = vmatmul.mubr.bf16.gmra.mrb[0].mxu0 %v1931
      %v2026 = vpop.f32.mrb[0].mxu0
      %v2027 = vadd.f32 0.0, %v2026
      %v2028 = vpop.f32.mrb[0].mxu0
      %v2029 = vpop.f32.mrb[0].mxu0
      %v2030 = vadd.f32 0.0, %v2029
      %v2031 = vpop.f32.mrb[0].mxu0
      %2032 = vmatprep.mubr.bf16.mxu0 0
      %2033 = vmatmul.mubr.bf16.gmra.mrb[0].mxu0 %v1934
      %v2034 = vpop.f32.mrb[0].mxu0
      %v2035 = vadd.f32 0.0, %v2034
      %v2036 = vpop.f32.mrb[0].mxu0
      %v2037 = vpop.f32.mrb[0].mxu0
      %v2038 = vadd.f32 0.0, %v2037
      %v2039 = vpop.f32.mrb[0].mxu0
      %2040 = vmatprep.mubr.bf16.mxu0 0
      %2041 = vmatmul.mubr.bf16.gmra.mrb[0].mxu0 %v1937
      %v2042 = vpop.f32.mrb[0].mxu0
      %v2043 = vadd.f32 0.0, %v2042
      %v2044 = vpop.f32.mrb[0].mxu0
      %v2045 = vpop.f32.mrb[0].mxu0
      %v2046 = vadd.f32 0.0, %v2045
      %v2047 = vpop.f32.mrb[0].mxu0
      %2048 = vmatprep.mubr.bf16.mxu0 0
      %2049 = vmatmul.mubr.bf16.gmra.mrb[0].mxu0 %v1940
      %v2050 = vpop.f32.mrb[0].mxu0
      %v2051 = vadd.f32 0.0, %v2050
      %v2052 = vpop.f32.mrb[0].mxu0
      %v2053 = vpop.f32.mrb[0].mxu0
      %v2054 = vadd.f32 0.0, %v2053
      %v2055 = vpop.f32.mrb[0].mxu0
      %2056 = vmatprep.mubr.bf16.mxu0 0
      %2057 = vmatmul.mubr.bf16.gmra.mrb[0].mxu0 %v1943
      %v2058 = vpop.f32.mrb[0].mxu0
      %v2059 = vadd.f32 0.0, %v2058
      %v2060 = vpop.f32.mrb[0].mxu0
      %v2061 = vpop.f32.mrb[0].mxu0
      %v2062 = vadd.f32 0.0, %v2061
      %v2063 = vpop.f32.mrb[0].mxu0
      %2064 = vmatprep.mubr.bf16.mxu0 0
      %2065 = vmatmul.mubr.bf16.gmra.mrb[0].mxu0 %v1946
      %v2066 = vpop.f32.mrb[0].mxu0
      %v2067 = vadd.f32 0.0, %v2066
      %v2068 = vpop.f32.mrb[0].mxu0
      %v2069 = vpop.f32.mrb[0].mxu0
      %v2070 = vadd.f32 0.0, %v2069
      %v2071 = vpop.f32.mrb[0].mxu0
      %2072 = vmatprep.mubr.bf16.mxu0 0
      %2073 = vmatmul.mubr.bf16.gmra.mrb[0].mxu0 %v1949
      %v2074 = vpop.f32.mrb[0].mxu0
      %v2075 = vadd.f32 0.0, %v2074
      %v2076 = vpop.f32.mrb[0].mxu0
      %v2077 = vpop.f32.mrb[0].mxu0
      %v2078 = vadd.f32 0.0, %v2077
      %v2079 = vpop.f32.mrb[0].mxu0
      %2080 = vmatprep.mubr.bf16.mxu0 0
      %2081 = vmatmul.mubr.bf16.gmra.mrb[0].mxu0 %v1952
      %v2082 = vpop.f32.mrb[0].mxu0
      %v2083 = vadd.f32 0.0, %v2082
      %v2084 = vpop.f32.mrb[0].mxu0
      %v2085 = vpop.f32.mrb[0].mxu0
      %v2086 = vadd.f32 0.0, %v2085
      %v2087 = vpop.f32.mrb[0].mxu0
      %2088 = vmatprep.mubr.bf16.mxu0 0
      %2089 = vmatmul.mubr.bf16.gmra.mrb[0].mxu0 %v1955
      %v2090 = vpop.f32.mrb[0].mxu0
      %v2091 = vadd.f32 0.0, %v2090
      %v2092 = vpop.f32.mrb[0].mxu0
      %v2093 = vpop.f32.mrb[0].mxu0
      %v2094 = vadd.f32 0.0, %v2093
      %v2095 = vpop.f32.mrb[0].mxu0
      %2096 = vmatprep.mubr.bf16.mxu0 0
      %2097 = vmatmul.mubr.bf16.gmra.mrb[0].mxu0 %v1958
      %v2098 = vpop.f32.mrb[0].mxu0
      %v2099 = vadd.f32 0.0, %v2098
      %v2100 = vpop.f32.mrb[0].mxu0
      %v2101 = vpop.f32.mrb[0].mxu0
      %v2102 = vadd.f32 0.0, %v2101
      %v2103 = vpop.f32.mrb[0].mxu0
      %2104 = vmatprep.mubr.bf16.mxu0 0
      %2105 = vmatmul.mubr.bf16.gmra.mrb[0].mxu0 %v1961
      %v2106 = vpop.f32.mrb[0].mxu0
      %v2107 = vadd.f32 0.0, %v2106
      %v2108 = vpop.f32.mrb[0].mxu0
      %v2109 = vpop.f32.mrb[0].mxu0
      %v2110 = vadd.f32 0.0, %v2109
      %v2111 = vpop.f32.mrb[0].mxu0
      %2112 = vmatprep.mubr.bf16.mxu0 0
      %2113 = vmatmul.mubr.bf16.gmra.mrb[0].mxu0 %v1964
      %v2114 = vpop.f32.mrb[0].mxu0
      %v2115 = vadd.f32 0.0, %v2114
      %v2116 = vpop.f32.mrb[0].mxu0
      %v2117 = vpop.f32.mrb[0].mxu0
      %v2118 = vadd.f32 0.0, %v2117
      %v2119 = vpop.f32.mrb[0].mxu0
      %2120 = vmatprep.mubr.bf16.mxu0 0
      %2121 = vmatmul.mubr.bf16.gmra.mrb[0].mxu0 %v1967
      %v2122 = vpop.f32.mrb[0].mxu0
      %v2123 = vadd.f32 0.0, %v2122
      %v2124 = vpop.f32.mrb[0].mxu0
      %v2125 = vpop.f32.mrb[0].mxu0
      %v2126 = vadd.f32 0.0, %v2125
      %v2127 = vpop.f32.mrb[0].mxu0
      %2128 = vmatprep.mubr.bf16.mxu0 0
      %2129 = vmatmul.mubr.bf16.gmra.mrb[0].mxu0 %v1970
      %v2130 = vpop.f32.mrb[0].mxu0
      %v2131 = vadd.f32 0.0, %v2130
      %v2132 = vpop.f32.mrb[0].mxu0
      %v2133 = vpop.f32.mrb[0].mxu0
      %v2134 = vadd.f32 0.0, %v2133
      %v2135 = vpop.f32.mrb[0].mxu0
      %2136 = vmatprep.mubr.bf16.mxu0 0
      %2137 = vmatmul.mubr.bf16.gmra.mrb[0].mxu0 %v1973
      %v2138 = vpop.f32.mrb[0].mxu0
      %v2139 = vadd.f32 0.0, %v2138
      %v2140 = vpop.f32.mrb[0].mxu0
      %v2141 = vpop.f32.mrb[0].mxu0
      %v2142 = vadd.f32 0.0, %v2141
      %v2143 = vpop.f32.mrb[0].mxu0
      %2144 = vmatprep.mubr.bf16.mxu0 0
      %2145 = vmatmul.mubr.bf16.gmra.mrb[0].mxu0 %v1976
      %v2146 = vpop.f32.mrb[0].mxu0
      %v2147 = vadd.f32 0.0, %v2146
      %v2148 = vpop.f32.mrb[0].mxu0
      %v2149 = vpop.f32.mrb[0].mxu0
      %v2150 = vadd.f32 0.0, %v2149
      %v2151 = vpop.f32.mrb[0].mxu0
      %2152 = vmatprep.mubr.bf16.mxu0 0
      %2153 = vmatmul.mubr.bf16.gmra.mrb[0].mxu0 %v1979
      %v2154 = vpop.f32.mrb[0].mxu0
      %v2155 = vadd.f32 0.0, %v2154
      %v2156 = vpop.f32.mrb[0].mxu0
      %v2157 = vpop.f32.mrb[0].mxu0
      %v2158 = vadd.f32 0.0, %v2157
      %v2159 = vpop.f32.mrb[0].mxu0
      %2160 = vdwg.mxu0
      %v2161 = vadd.f32 %v1851, %v2019
      %v2162 = vadd.f32 %v1852, %v2022
      %v2163 = vadd.f32 %v1853, %v2027
      %v2164 = vadd.f32 %v1854, %v2030
      %v2165 = vadd.f32 %v1855, %v2035
      %v2166 = vadd.f32 %v1856, %v2038
      %v2167 = vadd.f32 %v1857, %v2043
      %v2168 = vadd.f32 %v1858, %v2046
      %v2169 = vadd.f32 %v1859, %v2051
      %v2170 = vadd.f32 %v1860, %v2054
      %v2171 = vadd.f32 %v1861, %v2059
      %v2172 = vadd.f32 %v1862, %v2062
      %v2173 = vadd.f32 %v1863, %v2067
      %v2174 = vadd.f32 %v1864, %v2070
      %v2175 = vadd.f32 %v1865, %v2075
      %v2176 = vadd.f32 %v1866, %v2078
      %v2177 = vadd.f32 %v1867, %v2083
      %v2178 = vadd.f32 %v1868, %v2086
      %v2179 = vadd.f32 %v1869, %v2091
      %v2180 = vadd.f32 %v1870, %v2094
      %v2181 = vadd.f32 %v1871, %v2099
      %v2182 = vadd.f32 %v1872, %v2102
      %v2183 = vadd.f32 %v1873, %v2107
      %v2184 = vadd.f32 %v1874, %v2110
      %v2185 = vadd.f32 %v1875, %v2115
      %v2186 = vadd.f32 %v1876, %v2118
      %v2187 = vadd.f32 %v1877, %v2123
      %v2188 = vadd.f32 %v1878, %v2126
      %v2189 = vadd.f32 %v1879, %v2131
      %v2190 = vadd.f32 %v1880, %v2134
      %v2191 = vadd.f32 %v1881, %v2139
      %v2192 = vadd.f32 %v1882, %v2142
      %v2193 = vadd.f32 %v1883, %v2147
      %v2194 = vadd.f32 %v1884, %v2150
      %v2195 = vadd.f32 %v1885, %v2155
      %v2196 = vadd.f32 %v1886, %v2158
      %s2197 = scalar_lea.vmem %s1, 12
      %v2198 = vld [vmem:[%s2197] sm:$0x3]
      %v2201 = vunpack.c.l.b16 %v286
      %v2202 = vunpack.c.l.b16 %v287
      %v2203 = vpack.c.b16 %v2201, %v1300
      %v2204 = vpack.c.b16 %v2202, %v2202
      %v2205 = vrot.slane %v2203, 2
      %v2206 = vsel %vm1889, %v1923, %v2205
      %v2207 = vrot.slane %v2204, 2
      %v2208 = vsel %vm1889, %v2205, %v2207
      %v2210 = vsel %vm533, %v2206, 0
      %v2213 = vsel %vm533, %v2208, 0
      %v2216 = vsel %vm588, %v2198, 0
      %2218 = vmatprep.subr.bf16.mxu0 0
      %2219 = vmatpush1.bf16.msra.mxu0 %v2216
      %2220 = vmatprep.subr.bf16.mxu0 0
      %2221 = vmatpush1.bf16.msra.mxu0 0
      %2222 = vmatprep.subr.bf16.mxu0 0
      %2223 = vmatpush1.bf16.msra.mxu0 0
      %2224 = vmatprep.subr.bf16.mxu0 0
      %2225 = vmatpush1.bf16.msra.mxu0 0
      %2226 = vmatprep.subr.bf16.mxu0 0
      %2227 = vmatpush1.bf16.msra.mxu0 0
      %2228 = vmatprep.subr.bf16.mxu0 0
      %2229 = vmatpush1.bf16.msra.mxu0 0
      %2230 = vmatprep.subr.bf16.mxu0 0
      %2231 = vmatpush1.bf16.msra.mxu0 0
      %2232 = vmatprep.subr.bf16.mxu0 0
      %2233 = vmatpush1.bf16.msra.mxu0 0
      %2234 = vmatprep.subr.bf16.mxu0 0
      %2235 = vmatpush1.bf16.msra.mxu0 0
      %2236 = vmatprep.subr.bf16.mxu0 0
      %2237 = vmatpush1.bf16.msra.mxu0 0
      %2238 = vmatprep.subr.bf16.mxu0 0
      %2239 = vmatpush1.bf16.msra.mxu0 0
      %2240 = vmatprep.subr.bf16.mxu0 0
      %2241 = vmatpush1.bf16.msra.mxu0 0
      %2242 = vmatprep.subr.bf16.mxu0 0
      %2243 = vmatpush1.bf16.msra.mxu0 0
      %2244 = vmatprep.subr.bf16.mxu0 0
      %2245 = vmatpush1.bf16.msra.mxu0 0
      %2246 = vmatprep.subr.bf16.mxu0 0
      %2247 = vmatpush1.bf16.msra.mxu0 0
      %2248 = vmatprep.subr.bf16.mxu0 0
      %2249 = vmatpush1.bf16.msra.mxu0 0
      %2250 = vmatprep.mubr.bf16.mxu0 0
      %2251 = vmatmul.mubr.bf16.gmra.mrb[0].mxu0 %v1931
      %v2252 = vpop.f32.mrb[0].mxu0
      %v2253 = vadd.f32 0.0, %v2252
      %v2254 = vpop.f32.mrb[0].mxu0
      %v2255 = vpop.f32.mrb[0].mxu0
      %v2256 = vadd.f32 0.0, %v2255
      %v2257 = vpop.f32.mrb[0].mxu0
      %2258 = vmatprep.mubr.bf16.mxu0 0
      %2259 = vmatmul.mubr.bf16.gmra.mrb[0].mxu0 %v1934
      %v2260 = vpop.f32.mrb[0].mxu0
      %v2261 = vadd.f32 0.0, %v2260
      %v2262 = vpop.f32.mrb[0].mxu0
      %v2263 = vpop.f32.mrb[0].mxu0
      %v2264 = vadd.f32 0.0, %v2263
      %v2265 = vpop.f32.mrb[0].mxu0
      %2266 = vmatprep.mubr.bf16.mxu0 0
      %2267 = vmatmul.mubr.bf16.gmra.mrb[0].mxu0 %v1937
      %v2268 = vpop.f32.mrb[0].mxu0
      %v2269 = vadd.f32 0.0, %v2268
      %v2270 = vpop.f32.mrb[0].mxu0
      %v2271 = vpop.f32.mrb[0].mxu0
      %v2272 = vadd.f32 0.0, %v2271
      %v2273 = vpop.f32.mrb[0].mxu0
      %2274 = vmatprep.mubr.bf16.mxu0 0
      %2275 = vmatmul.mubr.bf16.gmra.mrb[0].mxu0 %v1940
      %v2276 = vpop.f32.mrb[0].mxu0
      %v2277 = vadd.f32 0.0, %v2276
      %v2278 = vpop.f32.mrb[0].mxu0
      %v2279 = vpop.f32.mrb[0].mxu0
      %v2280 = vadd.f32 0.0, %v2279
      %v2281 = vpop.f32.mrb[0].mxu0
      %2282 = vmatprep.mubr.bf16.mxu0 0
      %2283 = vmatmul.mubr.bf16.gmra.mrb[0].mxu0 %v1943
      %v2284 = vpop.f32.mrb[0].mxu0
      %v2285 = vadd.f32 0.0, %v2284
      %v2286 = vpop.f32.mrb[0].mxu0
      %v2287 = vpop.f32.mrb[0].mxu0
      %v2288 = vadd.f32 0.0, %v2287
      %v2289 = vpop.f32.mrb[0].mxu0
      %2290 = vmatprep.mubr.bf16.mxu0 0
      %2291 = vmatmul.mubr.bf16.gmra.mrb[0].mxu0 %v1946
      %v2292 = vpop.f32.mrb[0].mxu0
      %v2293 = vadd.f32 0.0, %v2292
      %v2294 = vpop.f32.mrb[0].mxu0
      %v2295 = vpop.f32.mrb[0].mxu0
      %v2296 = vadd.f32 0.0, %v2295
      %v2297 = vpop.f32.mrb[0].mxu0
      %2298 = vmatprep.mubr.bf16.mxu0 0
      %2299 = vmatmul.mubr.bf16.gmra.mrb[0].mxu0 %v1949
      %v2300 = vpop.f32.mrb[0].mxu0
      %v2301 = vadd.f32 0.0, %v2300
      %v2302 = vpop.f32.mrb[0].mxu0
      %v2303 = vpop.f32.mrb[0].mxu0
      %v2304 = vadd.f32 0.0, %v2303
      %v2305 = vpop.f32.mrb[0].mxu0
      %2306 = vmatprep.mubr.bf16.mxu0 0
      %2307 = vmatmul.mubr.bf16.gmra.mrb[0].mxu0 %v1952
      %v2308 = vpop.f32.mrb[0].mxu0
      %v2309 = vadd.f32 0.0, %v2308
      %v2310 = vpop.f32.mrb[0].mxu0
      %v2311 = vpop.f32.mrb[0].mxu0
      %v2312 = vadd.f32 0.0, %v2311
      %v2313 = vpop.f32.mrb[0].mxu0
      %2314 = vmatprep.mubr.bf16.mxu0 0
      %2315 = vmatmul.mubr.bf16.gmra.mrb[0].mxu0 %v1955
      %v2316 = vpop.f32.mrb[0].mxu0
      %v2317 = vadd.f32 0.0, %v2316
      %v2318 = vpop.f32.mrb[0].mxu0
      %v2319 = vpop.f32.mrb[0].mxu0
      %v2320 = vadd.f32 0.0, %v2319
      %v2321 = vpop.f32.mrb[0].mxu0
      %2322 = vmatprep.mubr.bf16.mxu0 0
      %2323 = vmatmul.mubr.bf16.gmra.mrb[0].mxu0 %v1958
      %v2324 = vpop.f32.mrb[0].mxu0
      %v2325 = vadd.f32 0.0, %v2324
      %v2326 = vpop.f32.mrb[0].mxu0
      %v2327 = vpop.f32.mrb[0].mxu0
      %v2328 = vadd.f32 0.0, %v2327
      %v2329 = vpop.f32.mrb[0].mxu0
      %2330 = vmatprep.mubr.bf16.mxu0 0
      %2331 = vmatmul.mubr.bf16.gmra.mrb[0].mxu0 %v1961
      %v2332 = vpop.f32.mrb[0].mxu0
      %v2333 = vadd.f32 0.0, %v2332
      %v2334 = vpop.f32.mrb[0].mxu0
      %v2335 = vpop.f32.mrb[0].mxu0
      %v2336 = vadd.f32 0.0, %v2335
      %v2337 = vpop.f32.mrb[0].mxu0
      %2338 = vmatprep.mubr.bf16.mxu0 0
      %2339 = vmatmul.mubr.bf16.gmra.mrb[0].mxu0 %v1964
      %v2340 = vpop.f32.mrb[0].mxu0
      %v2341 = vadd.f32 0.0, %v2340
      %v2342 = vpop.f32.mrb[0].mxu0
      %v2343 = vpop.f32.mrb[0].mxu0
      %v2344 = vadd.f32 0.0, %v2343
      %v2345 = vpop.f32.mrb[0].mxu0
      %2346 = vmatprep.mubr.bf16.mxu0 0
      %2347 = vmatmul.mubr.bf16.gmra.mrb[0].mxu0 %v1967
      %v2348 = vpop.f32.mrb[0].mxu0
      %v2349 = vadd.f32 0.0, %v2348
      %v2350 = vpop.f32.mrb[0].mxu0
      %v2351 = vpop.f32.mrb[0].mxu0
      %v2352 = vadd.f32 0.0, %v2351
      %v2353 = vpop.f32.mrb[0].mxu0
      %2354 = vmatprep.mubr.bf16.mxu0 0
      %2355 = vmatmul.mubr.bf16.gmra.mrb[0].mxu0 %v1970
      %v2356 = vpop.f32.mrb[0].mxu0
      %v2357 = vadd.f32 0.0, %v2356
      %v2358 = vpop.f32.mrb[0].mxu0
      %v2359 = vpop.f32.mrb[0].mxu0
      %v2360 = vadd.f32 0.0, %v2359
      %v2361 = vpop.f32.mrb[0].mxu0
      %2362 = vmatprep.mubr.bf16.mxu0 0
      %2363 = vmatmul.mubr.bf16.gmra.mrb[0].mxu0 %v1973
      %v2364 = vpop.f32.mrb[0].mxu0
      %v2365 = vadd.f32 0.0, %v2364
      %v2366 = vpop.f32.mrb[0].mxu0
      %v2367 = vpop.f32.mrb[0].mxu0
      %v2368 = vadd.f32 0.0, %v2367
      %v2369 = vpop.f32.mrb[0].mxu0
      %2370 = vmatprep.mubr.bf16.mxu0 0
      %2371 = vmatmul.mubr.bf16.gmra.mrb[0].mxu0 %v1976
      %v2372 = vpop.f32.mrb[0].mxu0
      %v2373 = vadd.f32 0.0, %v2372
      %v2374 = vpop.f32.mrb[0].mxu0
      %v2375 = vpop.f32.mrb[0].mxu0
      %v2376 = vadd.f32 0.0, %v2375
      %v2377 = vpop.f32.mrb[0].mxu0
      %2378 = vmatprep.mubr.bf16.mxu0 0
      %2379 = vmatmul.mubr.bf16.gmra.mrb[0].mxu0 %v2210
      %v2380 = vpop.f32.mrb[0].mxu0
      %v2381 = vadd.f32 0.0, %v2380
      %v2382 = vpop.f32.mrb[0].mxu0
      %v2383 = vpop.f32.mrb[0].mxu0
      %v2384 = vadd.f32 0.0, %v2383
      %v2385 = vpop.f32.mrb[0].mxu0
      %2386 = vmatprep.mubr.bf16.mxu0 0
      %2387 = vmatmul.mubr.bf16.gmra.mrb[0].mxu0 %v2213
      %v2388 = vpop.f32.mrb[0].mxu0
      %v2389 = vadd.f32 0.0, %v2388
      %v2390 = vpop.f32.mrb[0].mxu0
      %v2391 = vpop.f32.mrb[0].mxu0
      %v2392 = vadd.f32 0.0, %v2391
      %v2393 = vpop.f32.mrb[0].mxu0
      %2394 = vdwg.mxu0
      %v2395 = vadd.f32 %v2161, %v2253
      %v2396 = vadd.f32 %v2162, %v2256
      %v2397 = vadd.f32 %v2163, %v2261
      %v2398 = vadd.f32 %v2164, %v2264
      %v2399 = vadd.f32 %v2165, %v2269
      %v2400 = vadd.f32 %v2166, %v2272
      %v2401 = vadd.f32 %v2167, %v2277
      %v2402 = vadd.f32 %v2168, %v2280
      %v2403 = vadd.f32 %v2169, %v2285
      %v2404 = vadd.f32 %v2170, %v2288
      %v2405 = vadd.f32 %v2171, %v2293
      %v2406 = vadd.f32 %v2172, %v2296
      %v2407 = vadd.f32 %v2173, %v2301
      %v2408 = vadd.f32 %v2174, %v2304
      %v2409 = vadd.f32 %v2175, %v2309
      %v2410 = vadd.f32 %v2176, %v2312
      %v2411 = vadd.f32 %v2177, %v2317
      %v2412 = vadd.f32 %v2178, %v2320
      %v2413 = vadd.f32 %v2179, %v2325
      %v2414 = vadd.f32 %v2180, %v2328
      %v2415 = vadd.f32 %v2181, %v2333
      %v2416 = vadd.f32 %v2182, %v2336
      %v2417 = vadd.f32 %v2183, %v2341
      %v2418 = vadd.f32 %v2184, %v2344
      %v2419 = vadd.f32 %v2185, %v2349
      %v2420 = vadd.f32 %v2186, %v2352
      %v2421 = vadd.f32 %v2187, %v2357
      %v2422 = vadd.f32 %v2188, %v2360
      %v2423 = vadd.f32 %v2189, %v2365
      %v2424 = vadd.f32 %v2190, %v2368
      %v2425 = vadd.f32 %v2191, %v2373
      %v2426 = vadd.f32 %v2192, %v2376
      %v2427 = vadd.f32 %v2193, %v2381
      %v2428 = vadd.f32 %v2194, %v2384
      %v2429 = vadd.f32 %v2195, %v2389
      %v2430 = vadd.f32 %v2196, %v2392
      %s2431 = scalar_lea.vmem %s1, 14
      %v2432 = vld [vmem:[%s2431] sm:$0x3]
      %vm2433 = vsmask.f32 5376
      %v2434 = vrot.slane %v405, 2
      %v2435 = vrot.slane %v401, 3
      %v2436 = vor.u32 %v2434, %v2435
      %v2437 = vrot.slane %v413, 2
      %v2438 = vrot.slane %v409, 3
      %v2439 = vor.u32 %v2437, %v2438
      %v2440 = vsel %vm2433, %v2436, %v2439
      %v2441 = vrot.slane %v421, 2
      %v2442 = vrot.slane %v417, 3
      %v2443 = vor.u32 %v2441, %v2442
      %v2444 = vsel %vm2433, %v2439, %v2443
      %v2445 = vrot.slane %v429, 2
      %v2446 = vrot.slane %v425, 3
      %v2447 = vor.u32 %v2445, %v2446
      %v2448 = vsel %vm2433, %v2443, %v2447
      %v2449 = vrot.slane %v437, 2
      %v2450 = vrot.slane %v433, 3
      %v2451 = vor.u32 %v2449, %v2450
      %v2452 = vsel %vm2433, %v2447, %v2451
      %v2453 = vrot.slane %v445, 2
      %v2454 = vrot.slane %v441, 3
      %v2455 = vor.u32 %v2453, %v2454
      %v2456 = vsel %vm2433, %v2451, %v2455
      %v2457 = vrot.slane %v453, 2
      %v2458 = vrot.slane %v449, 3
      %v2459 = vor.u32 %v2457, %v2458
      %v2460 = vsel %vm2433, %v2455, %v2459
      %v2461 = vrot.slane %v461, 2
      %v2462 = vrot.slane %v457, 3
      %v2463 = vor.u32 %v2461, %v2462
      %v2464 = vsel %vm2433, %v2459, %v2463
      %v2465 = vrot.slane %v469, 2
      %v2466 = vrot.slane %v465, 3
      %v2467 = vor.u32 %v2465, %v2466
      %v2468 = vsel %vm2433, %v2463, %v2467
      %v2469 = vrot.slane %v477, 2
      %v2470 = vrot.slane %v473, 3
      %v2471 = vor.u32 %v2469, %v2470
      %v2472 = vsel %vm2433, %v2467, %v2471
      %v2473 = vrot.slane %v485, 2
      %v2474 = vrot.slane %v481, 3
      %v2475 = vor.u32 %v2473, %v2474
      %v2476 = vsel %vm2433, %v2471, %v2475
      %v2477 = vrot.slane %v493, 2
      %v2478 = vrot.slane %v489, 3
      %v2479 = vor.u32 %v2477, %v2478
      %v2480 = vsel %vm2433, %v2475, %v2479
      %v2481 = vrot.slane %v501, 2
      %v2482 = vrot.slane %v497, 3
      %v2483 = vor.u32 %v2481, %v2482
      %v2484 = vsel %vm2433, %v2479, %v2483
      %v2485 = vrot.slane %v509, 2
      %v2486 = vrot.slane %v505, 3
      %v2487 = vor.u32 %v2485, %v2486
      %v2488 = vsel %vm2433, %v2483, %v2487
      %v2489 = vrot.slane %v517, 2
      %v2490 = vrot.slane %v513, 3
      %v2491 = vor.u32 %v2489, %v2490
      %v2492 = vsel %vm2433, %v2487, %v2491
      %v2493 = vrot.slane %v525, 2
      %v2494 = vrot.slane %v521, 3
      %v2495 = vor.u32 %v2493, %v2494
      %v2496 = vsel %vm2433, %v2491, %v2495
      %v2497 = vrot.slane %v1600, 2
      %v2498 = vrot.slane %v1603, 3
      %v2499 = vor.u32 %v2497, %v2498
      %v2500 = vsel %vm2433, %v2495, %v2499
      %v2502 = vshrl.u32 %v2203, 16
      %v2504 = vrot.slane %v2502, 2
      %v2505 = vshll.u32 %v2203, 16
      %v2507 = vrot.slane %v2505, 3
      %v2508 = vor.u32 %v2504, %v2507
      %v2509 = vsel %vm2433, %v2499, %v2508
      %v2511 = vshrl.u32 %v2204, 16
      %v2513 = vrot.slane %v2511, 2
      %v2514 = vshll.u32 %v2204, 16
      %v2516 = vrot.slane %v2514, 3
      %v2517 = vor.u32 %v2513, %v2516
      %v2518 = vsel %vm2433, %v2508, %v2517
      %v2520 = vsel %vm533, %v2440, 0
      %v2523 = vsel %vm533, %v2444, 0
      %v2526 = vsel %vm533, %v2448, 0
      %v2529 = vsel %vm533, %v2452, 0
      %v2532 = vsel %vm533, %v2456, 0
      %v2535 = vsel %vm533, %v2460, 0
      %v2538 = vsel %vm533, %v2464, 0
      %v2541 = vsel %vm533, %v2468, 0
      %v2544 = vsel %vm533, %v2472, 0
      %v2547 = vsel %vm533, %v2476, 0
      %v2550 = vsel %vm533, %v2480, 0
      %v2553 = vsel %vm533, %v2484, 0
      %v2556 = vsel %vm533, %v2488, 0
      %v2559 = vsel %vm533, %v2492, 0
      %v2562 = vsel %vm533, %v2496, 0
      %v2565 = vsel %vm533, %v2500, 0
      %v2568 = vsel %vm533, %v2509, 0
      %v2571 = vsel %vm533, %v2518, 0
      %v2574 = vsel %vm588, %v2432, 0
      %2576 = vmatprep.subr.bf16.mxu0 0
      %2577 = vmatpush1.bf16.msra.mxu0 %v2574
      %2578 = vmatprep.subr.bf16.mxu0 0
      %2579 = vmatpush1.bf16.msra.mxu0 0
      %2580 = vmatprep.subr.bf16.mxu0 0
      %2581 = vmatpush1.bf16.msra.mxu0 0
      %2582 = vmatprep.subr.bf16.mxu0 0
      %2583 = vmatpush1.bf16.msra.mxu0 0
      %2584 = vmatprep.subr.bf16.mxu0 0
      %2585 = vmatpush1.bf16.msra.mxu0 0
      %2586 = vmatprep.subr.bf16.mxu0 0
      %2587 = vmatpush1.bf16.msra.mxu0 0
      %2588 = vmatprep.subr.bf16.mxu0 0
      %2589 = vmatpush1.bf16.msra.mxu0 0
      %2590 = vmatprep.subr.bf16.mxu0 0
      %2591 = vmatpush1.bf16.msra.mxu0 0
      %2592 = vmatprep.subr.bf16.mxu0 0
      %2593 = vmatpush1.bf16.msra.mxu0 0
      %2594 = vmatprep.subr.bf16.mxu0 0
      %2595 = vmatpush1.bf16.msra.mxu0 0
      %2596 = vmatprep.subr.bf16.mxu0 0
      %2597 = vmatpush1.bf16.msra.mxu0 0
      %2598 = vmatprep.subr.bf16.mxu0 0
      %2599 = vmatpush1.bf16.msra.mxu0 0
      %2600 = vmatprep.subr.bf16.mxu0 0
      %2601 = vmatpush1.bf16.msra.mxu0 0
      %2602 = vmatprep.subr.bf16.mxu0 0
      %2603 = vmatpush1.bf16.msra.mxu0 0
      %2604 = vmatprep.subr.bf16.mxu0 0
      %2605 = vmatpush1.bf16.msra.mxu0 0
      %2606 = vmatprep.subr.bf16.mxu0 0
      %2607 = vmatpush1.bf16.msra.mxu0 0
      %2608 = vmatprep.mubr.bf16.mxu0 0
      %2609 = vmatmul.mubr.bf16.gmra.mrb[0].mxu0 %v2520
      %v2610 = vpop.f32.mrb[0].mxu0
      %v2611 = vadd.f32 0.0, %v2610
      %v2612 = vpop.f32.mrb[0].mxu0
      %v2613 = vpop.f32.mrb[0].mxu0
      %v2614 = vadd.f32 0.0, %v2613
      %v2615 = vpop.f32.mrb[0].mxu0
      %2616 = vmatprep.mubr.bf16.mxu0 0
      %2617 = vmatmul.mubr.bf16.gmra.mrb[0].mxu0 %v2523
      %v2618 = vpop.f32.mrb[0].mxu0
      %v2619 = vadd.f32 0.0, %v2618
      %v2620 = vpop.f32.mrb[0].mxu0
      %v2621 = vpop.f32.mrb[0].mxu0
      %v2622 = vadd.f32 0.0, %v2621
      %v2623 = vpop.f32.mrb[0].mxu0
      %2624 = vmatprep.mubr.bf16.mxu0 0
      %2625 = vmatmul.mubr.bf16.gmra.mrb[0].mxu0 %v2526
      %v2626 = vpop.f32.mrb[0].mxu0
      %v2627 = vadd.f32 0.0, %v2626
      %v2628 = vpop.f32.mrb[0].mxu0
      %v2629 = vpop.f32.mrb[0].mxu0
      %v2630 = vadd.f32 0.0, %v2629
      %v2631 = vpop.f32.mrb[0].mxu0
      %2632 = vmatprep.mubr.bf16.mxu0 0
      %2633 = vmatmul.mubr.bf16.gmra.mrb[0].mxu0 %v2529
      %v2634 = vpop.f32.mrb[0].mxu0
      %v2635 = vadd.f32 0.0, %v2634
      %v2636 = vpop.f32.mrb[0].mxu0
      %v2637 = vpop.f32.mrb[0].mxu0
      %v2638 = vadd.f32 0.0, %v2637
      %v2639 = vpop.f32.mrb[0].mxu0
      %2640 = vmatprep.mubr.bf16.mxu0 0
      %2641 = vmatmul.mubr.bf16.gmra.mrb[0].mxu0 %v2532
      %v2642 = vpop.f32.mrb[0].mxu0
      %v2643 = vadd.f32 0.0, %v2642
      %v2644 = vpop.f32.mrb[0].mxu0
      %v2645 = vpop.f32.mrb[0].mxu0
      %v2646 = vadd.f32 0.0, %v2645
      %v2647 = vpop.f32.mrb[0].mxu0
      %2648 = vmatprep.mubr.bf16.mxu0 0
      %2649 = vmatmul.mubr.bf16.gmra.mrb[0].mxu0 %v2535
      %v2650 = vpop.f32.mrb[0].mxu0
      %v2651 = vadd.f32 0.0, %v2650
      %v2652 = vpop.f32.mrb[0].mxu0
      %v2653 = vpop.f32.mrb[0].mxu0
      %v2654 = vadd.f32 0.0, %v2653
      %v2655 = vpop.f32.mrb[0].mxu0
      %2656 = vmatprep.mubr.bf16.mxu0 0
      %2657 = vmatmul.mubr.bf16.gmra.mrb[0].mxu0 %v2538
      %v2658 = vpop.f32.mrb[0].mxu0
      %v2659 = vadd.f32 0.0, %v2658
      %v2660 = vpop.f32.mrb[0].mxu0
      %v2661 = vpop.f32.mrb[0].mxu0
      %v2662 = vadd.f32 0.0, %v2661
      %v2663 = vpop.f32.mrb[0].mxu0
      %2664 = vmatprep.mubr.bf16.mxu0 0
      %2665 = vmatmul.mubr.bf16.gmra.mrb[0].mxu0 %v2541
      %v2666 = vpop.f32.mrb[0].mxu0
      %v2667 = vadd.f32 0.0, %v2666
      %v2668 = vpop.f32.mrb[0].mxu0
      %v2669 = vpop.f32.mrb[0].mxu0
      %v2670 = vadd.f32 0.0, %v2669
      %v2671 = vpop.f32.mrb[0].mxu0
      %2672 = vmatprep.mubr.bf16.mxu0 0
      %2673 = vmatmul.mubr.bf16.gmra.mrb[0].mxu0 %v2544
      %v2674 = vpop.f32.mrb[0].mxu0
      %v2675 = vadd.f32 0.0, %v2674
      %v2676 = vpop.f32.mrb[0].mxu0
      %v2677 = vpop.f32.mrb[0].mxu0
      %v2678 = vadd.f32 0.0, %v2677
      %v2679 = vpop.f32.mrb[0].mxu0
      %2680 = vmatprep.mubr.bf16.mxu0 0
      %2681 = vmatmul.mubr.bf16.gmra.mrb[0].mxu0 %v2547
      %v2682 = vpop.f32.mrb[0].mxu0
      %v2683 = vadd.f32 0.0, %v2682
      %v2684 = vpop.f32.mrb[0].mxu0
      %v2685 = vpop.f32.mrb[0].mxu0
      %v2686 = vadd.f32 0.0, %v2685
      %v2687 = vpop.f32.mrb[0].mxu0
      %2688 = vmatprep.mubr.bf16.mxu0 0
      %2689 = vmatmul.mubr.bf16.gmra.mrb[0].mxu0 %v2550
      %v2690 = vpop.f32.mrb[0].mxu0
      %v2691 = vadd.f32 0.0, %v2690
      %v2692 = vpop.f32.mrb[0].mxu0
      %v2693 = vpop.f32.mrb[0].mxu0
      %v2694 = vadd.f32 0.0, %v2693
      %v2695 = vpop.f32.mrb[0].mxu0
      %2696 = vmatprep.mubr.bf16.mxu0 0
      %2697 = vmatmul.mubr.bf16.gmra.mrb[0].mxu0 %v2553
      %v2698 = vpop.f32.mrb[0].mxu0
      %v2699 = vadd.f32 0.0, %v2698
      %v2700 = vpop.f32.mrb[0].mxu0
      %v2701 = vpop.f32.mrb[0].mxu0
      %v2702 = vadd.f32 0.0, %v2701
      %v2703 = vpop.f32.mrb[0].mxu0
      %2704 = vmatprep.mubr.bf16.mxu0 0
      %2705 = vmatmul.mubr.bf16.gmra.mrb[0].mxu0 %v2556
      %v2706 = vpop.f32.mrb[0].mxu0
      %v2707 = vadd.f32 0.0, %v2706
      %v2708 = vpop.f32.mrb[0].mxu0
      %v2709 = vpop.f32.mrb[0].mxu0
      %v2710 = vadd.f32 0.0, %v2709
      %v2711 = vpop.f32.mrb[0].mxu0
      %2712 = vmatprep.mubr.bf16.mxu0 0
      %2713 = vmatmul.mubr.bf16.gmra.mrb[0].mxu0 %v2559
      %v2714 = vpop.f32.mrb[0].mxu0
      %v2715 = vadd.f32 0.0, %v2714
      %v2716 = vpop.f32.mrb[0].mxu0
      %v2717 = vpop.f32.mrb[0].mxu0
      %v2718 = vadd.f32 0.0, %v2717
      %v2719 = vpop.f32.mrb[0].mxu0
      %2720 = vmatprep.mubr.bf16.mxu0 0
      %2721 = vmatmul.mubr.bf16.gmra.mrb[0].mxu0 %v2562
      %v2722 = vpop.f32.mrb[0].mxu0
      %v2723 = vadd.f32 0.0, %v2722
      %v2724 = vpop.f32.mrb[0].mxu0
      %v2725 = vpop.f32.mrb[0].mxu0
      %v2726 = vadd.f32 0.0, %v2725
      %v2727 = vpop.f32.mrb[0].mxu0
      %2728 = vmatprep.mubr.bf16.mxu0 0
      %2729 = vmatmul.mubr.bf16.gmra.mrb[0].mxu0 %v2565
      %v2730 = vpop.f32.mrb[0].mxu0
      %v2731 = vadd.f32 0.0, %v2730
      %v2732 = vpop.f32.mrb[0].mxu0
      %v2733 = vpop.f32.mrb[0].mxu0
      %v2734 = vadd.f32 0.0, %v2733
      %v2735 = vpop.f32.mrb[0].mxu0
      %2736 = vmatprep.mubr.bf16.mxu0 0
      %2737 = vmatmul.mubr.bf16.gmra.mrb[0].mxu0 %v2568
      %v2738 = vpop.f32.mrb[0].mxu0
      %v2739 = vadd.f32 0.0, %v2738
      %v2740 = vpop.f32.mrb[0].mxu0
      %v2741 = vpop.f32.mrb[0].mxu0
      %v2742 = vadd.f32 0.0, %v2741
      %v2743 = vpop.f32.mrb[0].mxu0
      %2744 = vmatprep.mubr.bf16.mxu0 0
      %2745 = vmatmul.mubr.bf16.gmra.mrb[0].mxu0 %v2571
      %v2746 = vpop.f32.mrb[0].mxu0
      %v2747 = vadd.f32 0.0, %v2746
      %v2748 = vpop.f32.mrb[0].mxu0
      %v2749 = vpop.f32.mrb[0].mxu0
      %v2750 = vadd.f32 0.0, %v2749
      %v2751 = vpop.f32.mrb[0].mxu0
      %2752 = vdwg.mxu0
      %v2753 = vadd.f32 %v2395, %v2611
      %v2754 = vadd.f32 %v2396, %v2614
      %v2755 = vadd.f32 %v2397, %v2619
      %v2756 = vadd.f32 %v2398, %v2622
      %v2757 = vadd.f32 %v2399, %v2627
      %v2758 = vadd.f32 %v2400, %v2630
      %v2759 = vadd.f32 %v2401, %v2635
      %v2760 = vadd.f32 %v2402, %v2638
      %v2761 = vadd.f32 %v2403, %v2643
      %v2762 = vadd.f32 %v2404, %v2646
      %v2763 = vadd.f32 %v2405, %v2651
      %v2764 = vadd.f32 %v2406, %v2654
      %v2765 = vadd.f32 %v2407, %v2659
      %v2766 = vadd.f32 %v2408, %v2662
      %v2767 = vadd.f32 %v2409, %v2667
      %v2768 = vadd.f32 %v2410, %v2670
      %v2769 = vadd.f32 %v2411, %v2675
      %v2770 = vadd.f32 %v2412, %v2678
      %v2771 = vadd.f32 %v2413, %v2683
      %v2772 = vadd.f32 %v2414, %v2686
      %v2773 = vadd.f32 %v2415, %v2691
      %v2774 = vadd.f32 %v2416, %v2694
      %v2775 = vadd.f32 %v2417, %v2699
      %v2776 = vadd.f32 %v2418, %v2702
      %v2777 = vadd.f32 %v2419, %v2707
      %v2778 = vadd.f32 %v2420, %v2710
      %v2779 = vadd.f32 %v2421, %v2715
      %v2780 = vadd.f32 %v2422, %v2718
      %v2781 = vadd.f32 %v2423, %v2723
      %v2782 = vadd.f32 %v2424, %v2726
      %v2783 = vadd.f32 %v2425, %v2731
      %v2784 = vadd.f32 %v2426, %v2734
      %v2785 = vadd.f32 %v2427, %v2739
      %v2786 = vadd.f32 %v2428, %v2742
      %v2787 = vadd.f32 %v2429, %v2747
      %v2788 = vadd.f32 %v2430, %v2750
      %s2789 = scalar_lea.vmem %s1, 16
      %v2790 = vld [vmem:[%s2789] sm:$0x3]
      %vm2791 = vcmask 1044480
      %v2792 = vrot.slane %v367, 3
      %v2793 = vrot.slane %v368, 3
      %v2794 = vsel %vm2791, %v2792, %v2793
      %v2795 = vrot.slane %v369, 3
      %v2796 = vsel %vm2791, %v2793, %v2795
      %v2797 = vrot.slane %v370, 3
      %v2798 = vsel %vm2791, %v2795, %v2797
      %v2799 = vrot.slane %v371, 3
      %v2800 = vsel %vm2791, %v2797, %v2799
      %v2801 = vrot.slane %v372, 3
      %v2802 = vsel %vm2791, %v2799, %v2801
      %v2803 = vrot.slane %v373, 3
      %v2804 = vsel %vm2791, %v2801, %v2803
      %v2805 = vrot.slane %v374, 3
      %v2806 = vsel %vm2791, %v2803, %v2805
      %v2807 = vrot.slane %v375, 3
      %v2808 = vsel %vm2791, %v2805, %v2807
      %v2809 = vrot.slane %v376, 3
      %v2810 = vsel %vm2791, %v2807, %v2809
      %v2811 = vrot.slane %v377, 3
      %v2812 = vsel %vm2791, %v2809, %v2811
      %v2813 = vrot.slane %v378, 3
      %v2814 = vsel %vm2791, %v2811, %v2813
      %v2815 = vrot.slane %v379, 3
      %v2816 = vsel %vm2791, %v2813, %v2815
      %v2817 = vrot.slane %v380, 3
      %v2818 = vsel %vm2791, %v2815, %v2817
      %v2819 = vrot.slane %v381, 3
      %v2820 = vsel %vm2791, %v2817, %v2819
      %v2821 = vrot.slane %v382, 3
      %v2822 = vsel %vm2791, %v2819, %v2821
      %v2823 = vrot.slane %v1301, 3
      %v2824 = vsel %vm2791, %v2821, %v2823
      %v2825 = vrot.slane %v2203, 3
      %v2826 = vsel %vm2791, %v2823, %v2825
      %v2827 = vrot.slane %v2204, 3
      %v2828 = vsel %vm2791, %v2825, %v2827
      %v2830 = vsel %vm533, %v2794, 0
      %v2833 = vsel %vm533, %v2796, 0
      %v2836 = vsel %vm533, %v2798, 0
      %v2839 = vsel %vm533, %v2800, 0
      %v2842 = vsel %vm533, %v2802, 0
      %v2845 = vsel %vm533, %v2804, 0
      %v2848 = vsel %vm533, %v2806, 0
      %v2851 = vsel %vm533, %v2808, 0
      %v2854 = vsel %vm533, %v2810, 0
      %v2857 = vsel %vm533, %v2812, 0
      %v2860 = vsel %vm533, %v2814, 0
      %v2863 = vsel %vm533, %v2816, 0
      %v2866 = vsel %vm533, %v2818, 0
      %v2869 = vsel %vm533, %v2820, 0
      %v2872 = vsel %vm533, %v2822, 0
      %v2875 = vsel %vm533, %v2824, 0
      %v2878 = vsel %vm533, %v2826, 0
      %v2881 = vsel %vm533, %v2828, 0
      %v2884 = vsel %vm588, %v2790, 0
      %2886 = vmatprep.subr.bf16.mxu0 0
      %2887 = vmatpush1.bf16.msra.mxu0 %v2884
      %2888 = vmatprep.subr.bf16.mxu0 0
      %2889 = vmatpush1.bf16.msra.mxu0 0
      %2890 = vmatprep.subr.bf16.mxu0 0
      %2891 = vmatpush1.bf16.msra.mxu0 0
      %2892 = vmatprep.subr.bf16.mxu0 0
      %2893 = vmatpush1.bf16.msra.mxu0 0
      %2894 = vmatprep.subr.bf16.mxu0 0
      %2895 = vmatpush1.bf16.msra.mxu0 0
      %2896 = vmatprep.subr.bf16.mxu0 0
      %2897 = vmatpush1.bf16.msra.mxu0 0
      %2898 = vmatprep.subr.bf16.mxu0 0
      %2899 = vmatpush1.bf16.msra.mxu0 0
      %2900 = vmatprep.subr.bf16.mxu0 0
      %2901 = vmatpush1.bf16.msra.mxu0 0
      %2902 = vmatprep.subr.bf16.mxu0 0
      %2903 = vmatpush1.bf16.msra.mxu0 0
      %2904 = vmatprep.subr.bf16.mxu0 0
      %2905 = vmatpush1.bf16.msra.mxu0 0
      %2906 = vmatprep.subr.bf16.mxu0 0
      %2907 = vmatpush1.bf16.msra.mxu0 0
      %2908 = vmatprep.subr.bf16.mxu0 0
      %2909 = vmatpush1.bf16.msra.mxu0 0
      %2910 = vmatprep.subr.bf16.mxu0 0
      %2911 = vmatpush1.bf16.msra.mxu0 0
      %2912 = vmatprep.subr.bf16.mxu0 0
      %2913 = vmatpush1.bf16.msra.mxu0 0
      %2914 = vmatprep.subr.bf16.mxu0 0
      %2915 = vmatpush1.bf16.msra.mxu0 0
      %2916 = vmatprep.subr.bf16.mxu0 0
      %2917 = vmatpush1.bf16.msra.mxu0 0
      %2918 = vmatprep.mubr.bf16.mxu0 0
      %2919 = vmatmul.mubr.bf16.gmra.mrb[0].mxu0 %v2830
      %v2920 = vpop.f32.mrb[0].mxu0
      %v2921 = vadd.f32 0.0, %v2920
      %v2922 = vpop.f32.mrb[0].mxu0
      %v2923 = vpop.f32.mrb[0].mxu0
      %v2924 = vadd.f32 0.0, %v2923
      %v2925 = vpop.f32.mrb[0].mxu0
      %2926 = vmatprep.mubr.bf16.mxu0 0
      %2927 = vmatmul.mubr.bf16.gmra.mrb[0].mxu0 %v2833
      %v2928 = vpop.f32.mrb[0].mxu0
      %v2929 = vadd.f32 0.0, %v2928
      %v2930 = vpop.f32.mrb[0].mxu0
      %v2931 = vpop.f32.mrb[0].mxu0
      %v2932 = vadd.f32 0.0, %v2931
      %v2933 = vpop.f32.mrb[0].mxu0
      %2934 = vmatprep.mubr.bf16.mxu0 0
      %2935 = vmatmul.mubr.bf16.gmra.mrb[0].mxu0 %v2836
      %v2936 = vpop.f32.mrb[0].mxu0
      %v2937 = vadd.f32 0.0, %v2936
      %v2938 = vpop.f32.mrb[0].mxu0
      %v2939 = vpop.f32.mrb[0].mxu0
      %v2940 = vadd.f32 0.0, %v2939
      %v2941 = vpop.f32.mrb[0].mxu0
      %2942 = vmatprep.mubr.bf16.mxu0 0
      %2943 = vmatmul.mubr.bf16.gmra.mrb[0].mxu0 %v2839
      %v2944 = vpop.f32.mrb[0].mxu0
      %v2945 = vadd.f32 0.0, %v2944
      %v2946 = vpop.f32.mrb[0].mxu0
      %v2947 = vpop.f32.mrb[0].mxu0
      %v2948 = vadd.f32 0.0, %v2947
      %v2949 = vpop.f32.mrb[0].mxu0
      %2950 = vmatprep.mubr.bf16.mxu0 0
      %2951 = vmatmul.mubr.bf16.gmra.mrb[0].mxu0 %v2842
      %v2952 = vpop.f32.mrb[0].mxu0
      %v2953 = vadd.f32 0.0, %v2952
      %v2954 = vpop.f32.mrb[0].mxu0
      %v2955 = vpop.f32.mrb[0].mxu0
      %v2956 = vadd.f32 0.0, %v2955
      %v2957 = vpop.f32.mrb[0].mxu0
      %2958 = vmatprep.mubr.bf16.mxu0 0
      %2959 = vmatmul.mubr.bf16.gmra.mrb[0].mxu0 %v2845
      %v2960 = vpop.f32.mrb[0].mxu0
      %v2961 = vadd.f32 0.0, %v2960
      %v2962 = vpop.f32.mrb[0].mxu0
      %v2963 = vpop.f32.mrb[0].mxu0
      %v2964 = vadd.f32 0.0, %v2963
      %v2965 = vpop.f32.mrb[0].mxu0
      %2966 = vmatprep.mubr.bf16.mxu0 0
      %2967 = vmatmul.mubr.bf16.gmra.mrb[0].mxu0 %v2848
      %v2968 = vpop.f32.mrb[0].mxu0
      %v2969 = vadd.f32 0.0, %v2968
      %v2970 = vpop.f32.mrb[0].mxu0
      %v2971 = vpop.f32.mrb[0].mxu0
      %v2972 = vadd.f32 0.0, %v2971
      %v2973 = vpop.f32.mrb[0].mxu0
      %2974 = vmatprep.mubr.bf16.mxu0 0
      %2975 = vmatmul.mubr.bf16.gmra.mrb[0].mxu0 %v2851
      %v2976 = vpop.f32.mrb[0].mxu0
      %v2977 = vadd.f32 0.0, %v2976
      %v2978 = vpop.f32.mrb[0].mxu0
      %v2979 = vpop.f32.mrb[0].mxu0
      %v2980 = vadd.f32 0.0, %v2979
      %v2981 = vpop.f32.mrb[0].mxu0
      %2982 = vmatprep.mubr.bf16.mxu0 0
      %2983 = vmatmul.mubr.bf16.gmra.mrb[0].mxu0 %v2854
      %v2984 = vpop.f32.mrb[0].mxu0
      %v2985 = vadd.f32 0.0, %v2984
      %v2986 = vpop.f32.mrb[0].mxu0
      %v2987 = vpop.f32.mrb[0].mxu0
      %v2988 = vadd.f32 0.0, %v2987
      %v2989 = vpop.f32.mrb[0].mxu0
      %2990 = vmatprep.mubr.bf16.mxu0 0
      %2991 = vmatmul.mubr.bf16.gmra.mrb[0].mxu0 %v2857
      %v2992 = vpop.f32.mrb[0].mxu0
      %v2993 = vadd.f32 0.0, %v2992
      %v2994 = vpop.f32.mrb[0].mxu0
      %v2995 = vpop.f32.mrb[0].mxu0
      %v2996 = vadd.f32 0.0, %v2995
      %v2997 = vpop.f32.mrb[0].mxu0
      %2998 = vmatprep.mubr.bf16.mxu0 0
      %2999 = vmatmul.mubr.bf16.gmra.mrb[0].mxu0 %v2860
      %v3000 = vpop.f32.mrb[0].mxu0
      %v3001 = vadd.f32 0.0, %v3000
      %v3002 = vpop.f32.mrb[0].mxu0
      %v3003 = vpop.f32.mrb[0].mxu0
      %v3004 = vadd.f32 0.0, %v3003
      %v3005 = vpop.f32.mrb[0].mxu0
      %3006 = vmatprep.mubr.bf16.mxu0 0
      %3007 = vmatmul.mubr.bf16.gmra.mrb[0].mxu0 %v2863
      %v3008 = vpop.f32.mrb[0].mxu0
      %v3009 = vadd.f32 0.0, %v3008
      %v3010 = vpop.f32.mrb[0].mxu0
      %v3011 = vpop.f32.mrb[0].mxu0
      %v3012 = vadd.f32 0.0, %v3011
      %v3013 = vpop.f32.mrb[0].mxu0
      %3014 = vmatprep.mubr.bf16.mxu0 0
      %3015 = vmatmul.mubr.bf16.gmra.mrb[0].mxu0 %v2866
      %v3016 = vpop.f32.mrb[0].mxu0
      %v3017 = vadd.f32 0.0, %v3016
      %v3018 = vpop.f32.mrb[0].mxu0
      %v3019 = vpop.f32.mrb[0].mxu0
      %v3020 = vadd.f32 0.0, %v3019
      %v3021 = vpop.f32.mrb[0].mxu0
      %3022 = vmatprep.mubr.bf16.mxu0 0
      %3023 = vmatmul.mubr.bf16.gmra.mrb[0].mxu0 %v2869
      %v3024 = vpop.f32.mrb[0].mxu0
      %v3025 = vadd.f32 0.0, %v3024
      %v3026 = vpop.f32.mrb[0].mxu0
      %v3027 = vpop.f32.mrb[0].mxu0
      %v3028 = vadd.f32 0.0, %v3027
      %v3029 = vpop.f32.mrb[0].mxu0
      %3030 = vmatprep.mubr.bf16.mxu0 0
      %3031 = vmatmul.mubr.bf16.gmra.mrb[0].mxu0 %v2872
      %v3032 = vpop.f32.mrb[0].mxu0
      %v3033 = vadd.f32 0.0, %v3032
      %v3034 = vpop.f32.mrb[0].mxu0
      %v3035 = vpop.f32.mrb[0].mxu0
      %v3036 = vadd.f32 0.0, %v3035
      %v3037 = vpop.f32.mrb[0].mxu0
      %3038 = vmatprep.mubr.bf16.mxu0 0
      %3039 = vmatmul.mubr.bf16.gmra.mrb[0].mxu0 %v2875
      %v3040 = vpop.f32.mrb[0].mxu0
      %v3041 = vadd.f32 0.0, %v3040
      %v3042 = vpop.f32.mrb[0].mxu0
      %v3043 = vpop.f32.mrb[0].mxu0
      %v3044 = vadd.f32 0.0, %v3043
      %v3045 = vpop.f32.mrb[0].mxu0
      %3046 = vmatprep.mubr.bf16.mxu0 0
      %3047 = vmatmul.mubr.bf16.gmra.mrb[0].mxu0 %v2878
      %v3048 = vpop.f32.mrb[0].mxu0
      %v3049 = vadd.f32 0.0, %v3048
      %v3050 = vpop.f32.mrb[0].mxu0
      %v3051 = vpop.f32.mrb[0].mxu0
      %v3052 = vadd.f32 0.0, %v3051
      %v3053 = vpop.f32.mrb[0].mxu0
      %3054 = vmatprep.mubr.bf16.mxu0 0
      %3055 = vmatmul.mubr.bf16.gmra.mrb[0].mxu0 %v2881
      %v3056 = vpop.f32.mrb[0].mxu0
      %v3057 = vadd.f32 0.0, %v3056
      %v3058 = vpop.f32.mrb[0].mxu0
      %v3059 = vpop.f32.mrb[0].mxu0
      %v3060 = vadd.f32 0.0, %v3059
      %v3061 = vpop.f32.mrb[0].mxu0
      %3062 = vdwg.mxu0
      %v3063 = vadd.f32 %v2753, %v2921
      %v3064 = vadd.f32 %v2754, %v2924
      %v3065 = vadd.f32 %v2755, %v2929
      %v3066 = vadd.f32 %v2756, %v2932
      %v3067 = vadd.f32 %v2757, %v2937
      %v3068 = vadd.f32 %v2758, %v2940
      %v3069 = vadd.f32 %v2759, %v2945
      %v3070 = vadd.f32 %v2760, %v2948
      %v3071 = vadd.f32 %v2761, %v2953
      %v3072 = vadd.f32 %v2762, %v2956
      %v3073 = vadd.f32 %v2763, %v2961
      %v3074 = vadd.f32 %v2764, %v2964
      %v3075 = vadd.f32 %v2765, %v2969
      %v3076 = vadd.f32 %v2766, %v2972
      %v3077 = vadd.f32 %v2767, %v2977
      %v3078 = vadd.f32 %v2768, %v2980
      %v3079 = vadd.f32 %v2769, %v2985
      %v3080 = vadd.f32 %v2770, %v2988
      %v3081 = vadd.f32 %v2771, %v2993
      %v3082 = vadd.f32 %v2772, %v2996
      %v3083 = vadd.f32 %v2773, %v3001
      %v3084 = vadd.f32 %v2774, %v3004
      %v3085 = vadd.f32 %v2775, %v3009
      %v3086 = vadd.f32 %v2776, %v3012
      %v3087 = vadd.f32 %v2777, %v3017
      %v3088 = vadd.f32 %v2778, %v3020
      %v3089 = vadd.f32 %v2779, %v3025
      %v3090 = vadd.f32 %v2780, %v3028
      %v3091 = vadd.f32 %v2781, %v3033
      %v3092 = vadd.f32 %v2782, %v3036
      %v3093 = vadd.f32 %v2783, %v3041
      %v3094 = vadd.f32 %v2784, %v3044
      %v3095 = vadd.f32 %v2785, %v3049
      %v3096 = vadd.f32 %v2786, %v3052
      %v3097 = vadd.f32 %v2787, %v3057
      %v3098 = vadd.f32 %v2788, %v3060
      %v3099 = vpack.c.bf16 %v3064, %v3063
      %v3100 = vpack.c.bf16 %v3066, %v3065
      %v3101 = vpack.c.bf16 %v3068, %v3067
      %v3102 = vpack.c.bf16 %v3070, %v3069
      %v3103 = vpack.c.bf16 %v3072, %v3071
      %v3104 = vpack.c.bf16 %v3074, %v3073
      %v3105 = vpack.c.bf16 %v3076, %v3075
      %v3106 = vpack.c.bf16 %v3078, %v3077
      %v3107 = vpack.c.bf16 %v3080, %v3079
      %v3108 = vpack.c.bf16 %v3082, %v3081
      %v3109 = vpack.c.bf16 %v3084, %v3083
      %v3110 = vpack.c.bf16 %v3086, %v3085
      %v3111 = vpack.c.bf16 %v3088, %v3087
      %v3112 = vpack.c.bf16 %v3090, %v3089
      %v3113 = vpack.c.bf16 %v3092, %v3091
      %v3114 = vpack.c.bf16 %v3094, %v3093
      %v3115 = vpack.c.bf16 %v3096, %v3095
      %v3116 = vpack.c.bf16 %v3098, %v3097
      %v3135 = vunpack.c.l.b16 %v3099
      %v3136 = vunpack.c.h.b16 %v3099
      %v3137 = vunpack.c.l.b16 %v3100
      %v3138 = vunpack.c.h.b16 %v3100
      %v3139 = vunpack.c.l.b16 %v3101
      %v3140 = vunpack.c.h.b16 %v3101
      %v3141 = vunpack.c.l.b16 %v3102
      %v3142 = vunpack.c.h.b16 %v3102
      %v3143 = vunpack.c.l.b16 %v3103
      %v3144 = vunpack.c.h.b16 %v3103
      %v3145 = vunpack.c.l.b16 %v3104
      %v3146 = vunpack.c.h.b16 %v3104
      %v3147 = vunpack.c.l.b16 %v3105
      %v3148 = vunpack.c.h.b16 %v3105
      %v3149 = vunpack.c.l.b16 %v3106
      %v3150 = vunpack.c.h.b16 %v3106
      %v3151 = vunpack.c.l.b16 %v3107
      %v3152 = vunpack.c.h.b16 %v3107
      %v3153 = vunpack.c.l.b16 %v3108
      %v3154 = vunpack.c.h.b16 %v3108
      %v3155 = vunpack.c.l.b16 %v3109
      %v3156 = vunpack.c.h.b16 %v3109
      %v3157 = vunpack.c.l.b16 %v3110
      %v3158 = vunpack.c.h.b16 %v3110
      %v3159 = vunpack.c.l.b16 %v3111
      %v3160 = vunpack.c.h.b16 %v3111
      %v3161 = vunpack.c.l.b16 %v3112
      %v3162 = vunpack.c.h.b16 %v3112
      %v3163 = vunpack.c.l.b16 %v3113
      %v3164 = vunpack.c.h.b16 %v3113
      %v3165 = vunpack.c.l.b16 %v3114
      %v3166 = vunpack.c.h.b16 %v3114
      %v3167 = vunpack.c.l.b16 %v3115
      %v3168 = vunpack.c.h.b16 %v3115
      %v3169 = vunpack.c.l.b16 %v3116
      %v3170 = vunpack.c.h.b16 %v3116
      %v3171 = vpack.c.b16 %v3135, %v3135
      %v3172 = vpack.c.b16 %v3136, %v3136
      %v3173 = vpack.c.b16 %v3137, %v3137
      %v3174 = vpack.c.b16 %v3138, %v3138
      %v3175 = vpack.c.b16 %v3139, %v3139
      %v3176 = vpack.c.b16 %v3140, %v3140
      %v3177 = vpack.c.b16 %v3141, %v3141
      %v3178 = vpack.c.b16 %v3142, %v3142
      %v3179 = vpack.c.b16 %v3143, %v3143
      %v3180 = vpack.c.b16 %v3144, %v3144
      %v3181 = vpack.c.b16 %v3145, %v3145
      %v3182 = vpack.c.b16 %v3146, %v3146
      %v3183 = vpack.c.b16 %v3147, %v3147
      %v3184 = vpack.c.b16 %v3148, %v3148
      %v3185 = vpack.c.b16 %v3149, %v3149
      %v3186 = vpack.c.b16 %v3150, %v3150
      %v3187 = vpack.c.b16 %v3151, %v3151
      %v3188 = vpack.c.b16 %v3152, %v3152
      %v3189 = vpack.c.b16 %v3153, %v3153
      %v3190 = vpack.c.b16 %v3154, %v3154
      %v3191 = vpack.c.b16 %v3155, %v3155
      %v3192 = vpack.c.b16 %v3156, %v3156
      %v3193 = vpack.c.b16 %v3157, %v3157
      %v3194 = vpack.c.b16 %v3158, %v3158
      %v3195 = vpack.c.b16 %v3159, %v3159
      %v3196 = vpack.c.b16 %v3160, %v3160
      %v3197 = vpack.c.b16 %v3161, %v3161
      %v3198 = vpack.c.b16 %v3162, %v3162
      %v3199 = vpack.c.b16 %v3163, %v3163
      %v3200 = vpack.c.b16 %v3164, %v3164
      %v3201 = vpack.c.b16 %v3165, %v3165
      %v3202 = vpack.c.b16 %v3166, %v3166
      %v3203 = vpack.c.b16 %v3167, %v3167
      %v3204 = vpack.c.b16 %v3168, %v3168
      %v3205 = vpack.c.b16 %v3169, %v3169
      %v3206 = vpack.c.b16 %v3170, %v3170
      %3243 = vst [vmem:[%s237] sm:$0xf] %v3171
      %3244 = vst [vmem:[%s237 + $0x4] sm:$0xf] %v3172
      %3245 = vst [vmem:[%s237 + $0x8] sm:$0xf] %v3173
      %3246 = vst [vmem:[%s237 + $0xc] sm:$0xf] %v3174
      %3247 = vst [vmem:[%s237 + $0x10] sm:$0xf] %v3175
      %3248 = vst [vmem:[%s237 + $0x14] sm:$0xf] %v3176
      %3249 = vst [vmem:[%s237 + $0x18] sm:$0xf] %v3177
      %3250 = vst [vmem:[%s237 + $0x1c] sm:$0xf] %v3178
      %3251 = vst [vmem:[%s237 + $0x20] sm:$0xf] %v3179
      %3252 = vst [vmem:[%s237 + $0x24] sm:$0xf] %v3180
      %3253 = vst [vmem:[%s237 + $0x28] sm:$0xf] %v3181
      %3254 = vst [vmem:[%s237 + $0x2c] sm:$0xf] %v3182
      %3255 = vst [vmem:[%s237 + $0x30] sm:$0xf] %v3183
      %3256 = vst [vmem:[%s237 + $0x34] sm:$0xf] %v3184
      %3257 = vst [vmem:[%s237 + $0x38] sm:$0xf] %v3185
      %3258 = vst [vmem:[%s237 + $0x3c] sm:$0xf] %v3186
      %3259 = vst [vmem:[%s237 + $0x40] sm:$0xf] %v3187
      %3260 = vst [vmem:[%s237 + $0x44] sm:$0xf] %v3188
      %3261 = vst [vmem:[%s237 + $0x48] sm:$0xf] %v3189
      %3262 = vst [vmem:[%s237 + $0x4c] sm:$0xf] %v3190
      %3263 = vst [vmem:[%s237 + $0x50] sm:$0xf] %v3191
      %3264 = vst [vmem:[%s237 + $0x54] sm:$0xf] %v3192
      %3265 = vst [vmem:[%s237 + $0x58] sm:$0xf] %v3193
      %3266 = vst [vmem:[%s237 + $0x5c] sm:$0xf] %v3194
      %3267 = vst [vmem:[%s237 + $0x60] sm:$0xf] %v3195
      %3268 = vst [vmem:[%s237 + $0x64] sm:$0xf] %v3196
      %3269 = vst [vmem:[%s237 + $0x68] sm:$0xf] %v3197
      %3270 = vst [vmem:[%s237 + $0x6c] sm:$0xf] %v3198
      %3271 = vst [vmem:[%s237 + $0x70] sm:$0xf] %v3199
      %3272 = vst [vmem:[%s237 + $0x74] sm:$0xf] %v3200
      %3273 = vst [vmem:[%s237 + $0x78] sm:$0xf] %v3201
      %3274 = vst [vmem:[%s237 + $0x7c] sm:$0xf] %v3202
      %3275 = vst [vmem:[%s237 + $0x80] sm:$0xf] %v3203
      %3276 = vst [vmem:[%s237 + $0x84] sm:$0xf] %v3204
      %3277 = vst [vmem:[%s237 + $0x88] sm:$0xf] %v3205
      %3278 = vst [vmem:[%s237 + $0x8c] sm:$0xf] %v3206
      %v3279 = vld [vmem:[%s2] sm:$0xff]
      %v3280 = vld [vmem:[%s2 + $0x8] sm:$0xff]
      %v3281 = vld [vmem:[%s2 + $0x10] sm:$0xff]
      %v3282 = vld [vmem:[%s2 + $0x18] sm:$0xff]
      %v3283 = vld [vmem:[%s2 + $0x20] sm:$0xff]
      %v3284 = vld [vmem:[%s2 + $0x28] sm:$0xff]
      %v3285 = vld [vmem:[%s2 + $0x30] sm:$0xff]
      %v3286 = vld [vmem:[%s2 + $0x38] sm:$0xff]
      %v3287 = vld [vmem:[%s2 + $0x40] sm:$0xff]
      %v3288 = vld [vmem:[%s2 + $0x48] sm:$0xff]
      %v3289 = vld [vmem:[%s2 + $0x50] sm:$0xff]
      %v3290 = vld [vmem:[%s2 + $0x58] sm:$0xff]
      %v3291 = vld [vmem:[%s2 + $0x60] sm:$0xff]
      %v3292 = vld [vmem:[%s2 + $0x68] sm:$0xff]
      %v3293 = vld [vmem:[%s2 + $0x70] sm:$0xff]
      %v3294 = vld [vmem:[%s2 + $0x78] sm:$0xff]
      %v3295 = vld [vmem:[%s2 + $0x80] sm:$0xff]
      %v3296 = vld [vmem:[%s2 + $0x88] sm:$0xff]
      %v3297 = vld [vmem:[%s2 + $0x90] sm:$0xff]
      %v3298 = vld [vmem:[%s2 + $0x98] sm:$0xff]
      %v3299 = vld [vmem:[%s2 + $0xa0] sm:$0xff]
      %v3300 = vld [vmem:[%s2 + $0xa8] sm:$0xff]
      %v3301 = vld [vmem:[%s2 + $0xb0] sm:$0xff]
      %v3302 = vld [vmem:[%s2 + $0xb8] sm:$0xff]
      %v3303 = vld [vmem:[%s2 + $0xc0] sm:$0xff]
      %v3304 = vld [vmem:[%s2 + $0xc8] sm:$0xff]
      %v3305 = vld [vmem:[%s2 + $0xd0] sm:$0xff]
      %v3306 = vld [vmem:[%s2 + $0xd8] sm:$0xff]
      %v3307 = vld [vmem:[%s2 + $0xe0] sm:$0xff]
      %v3308 = vld [vmem:[%s2 + $0xe8] sm:$0xff]
      %v3309 = vld [vmem:[%s2 + $0xf0] sm:$0xff]
      %v3310 = vld [vmem:[%s2 + $0xf8] sm:$0xff]
      %v3311 = vld [vmem:[%s2 + $0x100] sm:$0xff]
      %v3312 = vld [vmem:[%s2 + $0x108] sm:$0xff]
      %v3313 = vld [vmem:[%s2 + $0x110] sm:$0xff]
      %v3314 = vld [vmem:[%s2 + $0x118] sm:$0xff]
      %3316 = vset.pattern.permute.xlu0 0
      %3317 = vperm.xlu0 %3316, %v3279
      %v3318 = vpop.permute.xlu0 %3317
      %3321 = vset.pattern.permute.xlu0 0
      %3322 = vperm.xlu0 %3321, %v3280
      %v3323 = vpop.permute.xlu0 %3322
      %3326 = vset.pattern.permute.xlu0 0
      %3327 = vperm.xlu0 %3326, %v3281
      %v3328 = vpop.permute.xlu0 %3327
      %3331 = vset.pattern.permute.xlu0 0
      %3332 = vperm.xlu0 %3331, %v3282
      %v3333 = vpop.permute.xlu0 %3332
      %3336 = vset.pattern.permute.xlu0 0
      %3337 = vperm.xlu0 %3336, %v3283
      %v3338 = vpop.permute.xlu0 %3337
      %3341 = vset.pattern.permute.xlu0 0
      %3342 = vperm.xlu0 %3341, %v3284
      %v3343 = vpop.permute.xlu0 %3342
      %3346 = vset.pattern.permute.xlu0 0
      %3347 = vperm.xlu0 %3346, %v3285
      %v3348 = vpop.permute.xlu0 %3347
      %3351 = vset.pattern.permute.xlu0 0
      %3352 = vperm.xlu0 %3351, %v3286
      %v3353 = vpop.permute.xlu0 %3352
      %3356 = vset.pattern.permute.xlu0 0
      %3357 = vperm.xlu0 %3356, %v3287
      %v3358 = vpop.permute.xlu0 %3357
      %3361 = vset.pattern.permute.xlu0 0
      %3362 = vperm.xlu0 %3361, %v3288
      %v3363 = vpop.permute.xlu0 %3362
      %3366 = vset.pattern.permute.xlu0 0
      %3367 = vperm.xlu0 %3366, %v3289
      %v3368 = vpop.permute.xlu0 %3367
      %3371 = vset.pattern.permute.xlu0 0
      %3372 = vperm.xlu0 %3371, %v3290
      %v3373 = vpop.permute.xlu0 %3372
      %3376 = vset.pattern.permute.xlu0 0
      %3377 = vperm.xlu0 %3376, %v3291
      %v3378 = vpop.permute.xlu0 %3377
      %3381 = vset.pattern.permute.xlu0 0
      %3382 = vperm.xlu0 %3381, %v3292
      %v3383 = vpop.permute.xlu0 %3382
      %3386 = vset.pattern.permute.xlu0 0
      %3387 = vperm.xlu0 %3386, %v3293
      %v3388 = vpop.permute.xlu0 %3387
      %3391 = vset.pattern.permute.xlu0 0
      %3392 = vperm.xlu0 %3391, %v3294
      %v3393 = vpop.permute.xlu0 %3392
      %3396 = vset.pattern.permute.xlu0 0
      %3397 = vperm.xlu0 %3396, %v3295
      %v3398 = vpop.permute.xlu0 %3397
      %3401 = vset.pattern.permute.xlu0 0
      %3402 = vperm.xlu0 %3401, %v3296
      %v3403 = vpop.permute.xlu0 %3402
      %3406 = vset.pattern.permute.xlu0 0
      %3407 = vperm.xlu0 %3406, %v3297
      %v3408 = vpop.permute.xlu0 %3407
      %3411 = vset.pattern.permute.xlu0 0
      %3412 = vperm.xlu0 %3411, %v3298
      %v3413 = vpop.permute.xlu0 %3412
      %3416 = vset.pattern.permute.xlu0 0
      %3417 = vperm.xlu0 %3416, %v3299
      %v3418 = vpop.permute.xlu0 %3417
      %3421 = vset.pattern.permute.xlu0 0
      %3422 = vperm.xlu0 %3421, %v3300
      %v3423 = vpop.permute.xlu0 %3422
      %3426 = vset.pattern.permute.xlu0 0
      %3427 = vperm.xlu0 %3426, %v3301
      %v3428 = vpop.permute.xlu0 %3427
      %3431 = vset.pattern.permute.xlu0 0
      %3432 = vperm.xlu0 %3431, %v3302
      %v3433 = vpop.permute.xlu0 %3432
      %3436 = vset.pattern.permute.xlu0 0
      %3437 = vperm.xlu0 %3436, %v3303
      %v3438 = vpop.permute.xlu0 %3437
      %3441 = vset.pattern.permute.xlu0 0
      %3442 = vperm.xlu0 %3441, %v3304
      %v3443 = vpop.permute.xlu0 %3442
      %3446 = vset.pattern.permute.xlu0 0
      %3447 = vperm.xlu0 %3446, %v3305
      %v3448 = vpop.permute.xlu0 %3447
      %3451 = vset.pattern.permute.xlu0 0
      %3452 = vperm.xlu0 %3451, %v3306
      %v3453 = vpop.permute.xlu0 %3452
      %3456 = vset.pattern.permute.xlu0 0
      %3457 = vperm.xlu0 %3456, %v3307
      %v3458 = vpop.permute.xlu0 %3457
      %3461 = vset.pattern.permute.xlu0 0
      %3462 = vperm.xlu0 %3461, %v3308
      %v3463 = vpop.permute.xlu0 %3462
      %3466 = vset.pattern.permute.xlu0 0
      %3467 = vperm.xlu0 %3466, %v3309
      %v3468 = vpop.permute.xlu0 %3467
      %3471 = vset.pattern.permute.xlu0 0
      %3472 = vperm.xlu0 %3471, %v3310
      %v3473 = vpop.permute.xlu0 %3472
      %3476 = vset.pattern.permute.xlu0 0
      %3477 = vperm.xlu0 %3476, %v3311
      %v3478 = vpop.permute.xlu0 %3477
      %3481 = vset.pattern.permute.xlu0 0
      %3482 = vperm.xlu0 %3481, %v3312
      %v3483 = vpop.permute.xlu0 %3482
      %3486 = vset.pattern.permute.xlu0 0
      %3487 = vperm.xlu0 %3486, %v3313
      %v3488 = vpop.permute.xlu0 %3487
      %3491 = vset.pattern.permute.xlu0 0
      %3492 = vperm.xlu0 %3491, %v3314
      %v3493 = vpop.permute.xlu0 %3492
      %v3495 = vmul.f32 %v3063, %v3318
      %v3496 = vmul.f32 %v3064, %v3323
      %v3497 = vmul.f32 %v3065, %v3328
      %v3498 = vmul.f32 %v3066, %v3333
      %v3499 = vmul.f32 %v3067, %v3338
      %v3500 = vmul.f32 %v3068, %v3343
      %v3501 = vmul.f32 %v3069, %v3348
      %v3502 = vmul.f32 %v3070, %v3353
      %v3503 = vmul.f32 %v3071, %v3358
      %v3504 = vmul.f32 %v3072, %v3363
      %v3505 = vmul.f32 %v3073, %v3368
      %v3506 = vmul.f32 %v3074, %v3373
      %v3507 = vmul.f32 %v3075, %v3378
      %v3508 = vmul.f32 %v3076, %v3383
      %v3509 = vmul.f32 %v3077, %v3388
      %v3510 = vmul.f32 %v3078, %v3393
      %v3511 = vmul.f32 %v3079, %v3398
      %v3512 = vmul.f32 %v3080, %v3403
      %v3513 = vmul.f32 %v3081, %v3408
      %v3514 = vmul.f32 %v3082, %v3413
      %v3515 = vmul.f32 %v3083, %v3418
      %v3516 = vmul.f32 %v3084, %v3423
      %v3517 = vmul.f32 %v3085, %v3428
      %v3518 = vmul.f32 %v3086, %v3433
      %v3519 = vmul.f32 %v3087, %v3438
      %v3520 = vmul.f32 %v3088, %v3443
      %v3521 = vmul.f32 %v3089, %v3448
      %v3522 = vmul.f32 %v3090, %v3453
      %v3523 = vmul.f32 %v3091, %v3458
      %v3524 = vmul.f32 %v3092, %v3463
      %v3525 = vmul.f32 %v3093, %v3468
      %v3526 = vmul.f32 %v3094, %v3473
      %v3527 = vmul.f32 %v3095, %v3478
      %v3528 = vmul.f32 %v3096, %v3483
      %v3529 = vmul.f32 %v3097, %v3488
      %v3530 = vmul.f32 %v3098, %v3493
      %v3531 = vadd.f32 %v3495, %v3496
      %v3532 = vadd.f32 %v3531, %v3497
      %v3533 = vadd.f32 %v3532, %v3498
      %v3534 = vadd.f32 %v3533, %v3499
      %v3535 = vadd.f32 %v3534, %v3500
      %v3536 = vadd.f32 %v3535, %v3501
      %v3537 = vadd.f32 %v3536, %v3502
      %v3538 = vadd.f32 %v3537, %v3503
      %v3539 = vadd.f32 %v3538, %v3504
      %v3540 = vadd.f32 %v3539, %v3505
      %v3541 = vadd.f32 %v3540, %v3506
      %v3542 = vadd.f32 %v3541, %v3507
      %v3543 = vadd.f32 %v3542, %v3508
      %v3544 = vadd.f32 %v3543, %v3509
      %v3545 = vadd.f32 %v3544, %v3510
      %v3546 = vadd.f32 %v3545, %v3511
      %v3547 = vadd.f32 %v3546, %v3512
      %v3548 = vadd.f32 %v3547, %v3513
      %v3549 = vadd.f32 %v3548, %v3514
      %v3550 = vadd.f32 %v3549, %v3515
      %v3551 = vadd.f32 %v3550, %v3516
      %v3552 = vadd.f32 %v3551, %v3517
      %v3553 = vadd.f32 %v3552, %v3518
      %v3554 = vadd.f32 %v3553, %v3519
      %v3555 = vadd.f32 %v3554, %v3520
      %v3556 = vadd.f32 %v3555, %v3521
      %v3557 = vadd.f32 %v3556, %v3522
      %v3558 = vadd.f32 %v3557, %v3523
      %v3559 = vadd.f32 %v3558, %v3524
      %v3560 = vadd.f32 %v3559, %v3525
      %v3561 = vadd.f32 %v3560, %v3526
      %v3562 = vadd.f32 %v3561, %v3527
      %v3563 = vadd.f32 %v3562, %v3528
      %v3564 = vadd.f32 %v3563, %v3529
      %v3565 = vadd.f32 %v3564, %v3530
      %v3566 = vrot.slane %v3565, 4
      %v3567 = vadd.f32 %v3565, %v3566
      %v3568 = vrot.slane %v3567, 2
      %v3569 = vadd.f32 %v3567, %v3568
      %v3570 = vrot.slane %v3569, 1
      %v3571 = vadd.f32 %v3569, %v3570
      %3572 = vst [vmem:[%s241] sm:$0xff] %v3571
      %v3573 = vmul.f32 %v3495, %v3495
      %v3574 = vmul.f32 %v3496, %v3496
      %v3575 = vmul.f32 %v3497, %v3497
      %v3576 = vmul.f32 %v3498, %v3498
      %v3577 = vmul.f32 %v3499, %v3499
      %v3578 = vmul.f32 %v3500, %v3500
      %v3579 = vmul.f32 %v3501, %v3501
      %v3580 = vmul.f32 %v3502, %v3502
      %v3581 = vmul.f32 %v3503, %v3503
      %v3582 = vmul.f32 %v3504, %v3504
      %v3583 = vmul.f32 %v3505, %v3505
      %v3584 = vmul.f32 %v3506, %v3506
      %v3585 = vmul.f32 %v3507, %v3507
      %v3586 = vmul.f32 %v3508, %v3508
      %v3587 = vmul.f32 %v3509, %v3509
      %v3588 = vmul.f32 %v3510, %v3510
      %v3589 = vmul.f32 %v3511, %v3511
      %v3590 = vmul.f32 %v3512, %v3512
      %v3591 = vmul.f32 %v3513, %v3513
      %v3592 = vmul.f32 %v3514, %v3514
      %v3593 = vmul.f32 %v3515, %v3515
      %v3594 = vmul.f32 %v3516, %v3516
      %v3595 = vmul.f32 %v3517, %v3517
      %v3596 = vmul.f32 %v3518, %v3518
      %v3597 = vmul.f32 %v3519, %v3519
      %v3598 = vmul.f32 %v3520, %v3520
      %v3599 = vmul.f32 %v3521, %v3521
      %v3600 = vmul.f32 %v3522, %v3522
      %v3601 = vmul.f32 %v3523, %v3523
      %v3602 = vmul.f32 %v3524, %v3524
      %v3603 = vmul.f32 %v3525, %v3525
      %v3604 = vmul.f32 %v3526, %v3526
      %v3605 = vmul.f32 %v3527, %v3527
      %v3606 = vmul.f32 %v3528, %v3528
      %v3607 = vmul.f32 %v3529, %v3529
      %v3608 = vmul.f32 %v3530, %v3530
      %v3609 = vadd.f32 %v3573, %v3574
      %v3610 = vadd.f32 %v3609, %v3575
      %v3611 = vadd.f32 %v3610, %v3576
      %v3612 = vadd.f32 %v3611, %v3577
      %v3613 = vadd.f32 %v3612, %v3578
      %v3614 = vadd.f32 %v3613, %v3579
      %v3615 = vadd.f32 %v3614, %v3580
      %v3616 = vadd.f32 %v3615, %v3581
      %v3617 = vadd.f32 %v3616, %v3582
      %v3618 = vadd.f32 %v3617, %v3583
      %v3619 = vadd.f32 %v3618, %v3584
      %v3620 = vadd.f32 %v3619, %v3585
      %v3621 = vadd.f32 %v3620, %v3586
      %v3622 = vadd.f32 %v3621, %v3587
      %v3623 = vadd.f32 %v3622, %v3588
      %v3624 = vadd.f32 %v3623, %v3589
      %v3625 = vadd.f32 %v3624, %v3590
      %v3626 = vadd.f32 %v3625, %v3591
      %v3627 = vadd.f32 %v3626, %v3592
      %v3628 = vadd.f32 %v3627, %v3593
      %v3629 = vadd.f32 %v3628, %v3594
      %v3630 = vadd.f32 %v3629, %v3595
      %v3631 = vadd.f32 %v3630, %v3596
      %v3632 = vadd.f32 %v3631, %v3597
      %v3633 = vadd.f32 %v3632, %v3598
      %v3634 = vadd.f32 %v3633, %v3599
      %v3635 = vadd.f32 %v3634, %v3600
      %v3636 = vadd.f32 %v3635, %v3601
      %v3637 = vadd.f32 %v3636, %v3602
      %v3638 = vadd.f32 %v3637, %v3603
      %v3639 = vadd.f32 %v3638, %v3604
      %v3640 = vadd.f32 %v3639, %v3605
      %v3641 = vadd.f32 %v3640, %v3606
      %v3642 = vadd.f32 %v3641, %v3607
      %v3643 = vadd.f32 %v3642, %v3608
      %v3644 = vrot.slane %v3643, 4
      %v3645 = vadd.f32 %v3643, %v3644
      %v3646 = vrot.slane %v3645, 2
      %v3647 = vadd.f32 %v3645, %v3646
      %v3648 = vrot.slane %v3647, 1
      %v3649 = vadd.f32 %v3647, %v3648
      %3650 = vst [vmem:[%s245] sm:$0xff] %v3649
      %p3651 = scmp.lt.s32.totalorder %s17, 1
      %s3652 = scalar_select %p3651, %s17, 1
      %s3653 = smul.addr %s3652, 36
      %s3654 = smul.addr %s3653, 4
      %s3655 = scalar_lea.vmem %s3, %s3654
      %p3656 = scmp.lt.s32.totalorder %s17, 1
      %s3657 = scalar_select %p3656, %s17, 1
      %s3658 = smul.addr %s3657, 8
      %s3659 = scalar_lea.vmem %s4, %s3658
      %p3660 = scmp.lt.s32.totalorder %s17, 1
      %s3661 = scalar_select %p3660, %s17, 1
      %s3662 = smul.addr %s3661, 8
      %s3663 = scalar_lea.vmem %s5, %s3662
      // Predicated region
      $region33: #{basic_block_forward.2} parent=31 // pred_check
        %p3664 = pneg %p103
      $region34: #{basic_block_forward.2} parent=31 // pred_check_branch
        %3666 = sbr.rel (%p3664) target = $region36
      $region35: #{basic_block_forward.2} parent=31 // pred_region
        _
      $region36: #{basic_block_forward.2} parent=31 // pred_fallthru
        _
      // Predicated region
      $region37: #{basic_block_forward.2} parent=31 // pred_check
        %p3667 = pneg %p129
      $region38: #{basic_block_forward.2} parent=31 // pred_check_branch
        %3669 = sbr.rel (%p3667) target = $region40
      $region39: #{basic_block_forward.2} parent=31 // pred_region
        _
      $region40: #{basic_block_forward.2} parent=31 // pred_fallthru
        _
      // Predicated region
      $region41: #{basic_block_forward.2} parent=31 // pred_check
        %p3670 = pneg %p155
      $region42: #{basic_block_forward.2} parent=31 // pred_check_branch
        %3672 = sbr.rel (%p3670) target = $region44
      $region43: #{basic_block_forward.2} parent=31 // pred_region
        _
      $region44: #{basic_block_forward.2} parent=31 // pred_fallthru
        _
    $region32: #{basic_block_forward.2} parent=5 // pred_fallthru
      _
    %p3673 = scmp.le.s32.totalorder 2, %s12
    // Predicated region
    $region45: #{basic_block_forward.2} parent=5 // pred_check
      %p3674 = pneg %p3673
    $region46: #{basic_block_forward.2} parent=5 // pred_check_branch
      %3676 = sbr.rel (%p3674) target = $region48
    $region47: #{basic_block_forward.2} parent=5 // pred_region
      %s3677 = ssub.s32 %s12, 2
      // Predicated region
      $region49: #{basic_block_forward.2} parent=47 // pred_check
        %p3678 = pneg %p109
      $region50: #{basic_block_forward.2} parent=47 // pred_check_branch
        %3680 = sbr.rel (%p3678) target = $region52
      $region51: #{basic_block_forward.2} parent=47 // pred_region
        %p3681 = scmp.lt.s32.totalorder %s18, 1
        %s3682 = scalar_select %p3681, %s18, 1
        %s3683 = smul.addr %s3682, 36
        %s3684 = smul.addr %s3683, 4
        %s3685 = scalar_lea.vmem %s3, %s3684
      $region52: #{basic_block_forward.2} parent=47 // pred_fallthru
        _
      // Predicated region
      $region53: #{basic_block_forward.2} parent=47 // pred_check
        %p3686 = pneg %p135
      $region54: #{basic_block_forward.2} parent=47 // pred_check_branch
        %3688 = sbr.rel (%p3686) target = $region56
      $region55: #{basic_block_forward.2} parent=47 // pred_region
        %p3689 = scmp.lt.s32.totalorder %s18, 1
        %s3690 = scalar_select %p3689, %s18, 1
        %s3691 = smul.addr %s3690, 8
        %s3692 = scalar_lea.vmem %s4, %s3691
      $region56: #{basic_block_forward.2} parent=47 // pred_fallthru
        _
      // Predicated region
      $region57: #{basic_block_forward.2} parent=47 // pred_check
        %p3693 = pneg %p161
      $region58: #{basic_block_forward.2} parent=47 // pred_check_branch
        %3695 = sbr.rel (%p3693) target = $region60
      $region59: #{basic_block_forward.2} parent=47 // pred_region
        %p3696 = scmp.lt.s32.totalorder %s18, 1
        %s3697 = scalar_select %p3696, %s18, 1
        %s3698 = smul.addr %s3697, 8
        %s3699 = scalar_lea.vmem %s5, %s3698
      $region60: #{basic_block_forward.2} parent=47 // pred_fallthru
        _
    $region48: #{basic_block_forward.2} parent=5 // pred_fallthru
      _
  $region6: #{basic_block_forward.2} parent=0 // loop_footer
    %s16 = sadd.s32 1, %s12
  $region7: #{basic_block_forward.2} parent=0 // loop_footer_branch
    %11 = sbr.rel target = $region3
  $region8: #{basic_block_forward.2} parent=0 // loop_exit
    _

</llo_original>
